<compile_context>
chip_gen: v6e
topology: v6e:2x2x1
jax: 0.10.0
libtpu: 0.0.40
codegen_flags: <defaults>
</compile_context>

<pallas_src>
import numpy as np
import jax
import jax.numpy as jnp
from jax import lax
from jax.experimental import pallas as pl
from jax.experimental.pallas import tpu as pltpu

# ------------------------- problem sizes (small, consistent with the module) -------------------------
H = 32              # hidden_channels
N_ST = 16           # startup nodes
N_VC = 8            # investor nodes
NT = N_ST + N_VC    # combined node count (startups 0..15, investors 16..23)
F_ST = 2613         # startup raw feature dim (hardcoded in the module)
F_VC = 4517         # investor raw feature dim (hardcoded in the module)
F_ST_PAD = 2688     # next multiple of 128
F_VC_PAD = 4608     # next multiple of 128
E = 24              # message-passing edges (startup -> investor)
E_LABEL = 8         # supervision edges for the classifier
BN_EPS = 1e-5

VMEM = pl.BlockSpec(memory_space=pltpu.MemorySpace.VMEM)
TRANS_B = (((1,), (1,)), ((), ()))   # contract dim 1 with dim 1 (A @ B.T) -> native MXU transposed-RHS


# ------------------------------------- fused Pallas kernel -------------------------------------
def _fused_forward_kernel(x_st_ref, x_vc_ref, w_st_ref, w_vc_ref, whh_ref, aux_ref, idx_ref,
                          h_st_out, h_vc_out, pred_out):
    f32, bf16 = jnp.float32, jnp.bfloat16

    # ---- packed index views (single int32 input; rows 0/1 hold edge endpoints, cols 24..26 hold
    #      per-node / per-label-edge ids in COMBINED numbering: startups 0..15, investors 16..23)
    src_row = idx_ref[0:1, 0:E]               # (1, E)      edge source (startup) combined id
    dst_row = idx_ref[1:2, 0:E]               # (1, E)      edge dest   (investor) combined id
    ids_col = idx_ref[0:NT, 24:25]            # (NT, 1)     embedding-table row per node
    lab_st_col = idx_ref[0:E_LABEL, 25:26]    # (E_LABEL,1) label-edge startup endpoint
    lab_vc_col = idx_ref[0:E_LABEL, 26:27]    # (E_LABEL,1) label-edge investor endpoint

    def one_hot_rows(idx2d, n_rows, n_cols, dtype):   # out[n, e] = (idx2d[0, e] == n)
        return jnp.where(lax.broadcasted_iota(jnp.int32, (n_rows, n_cols), 0) == idx2d,
                         1.0, 0.0).astype(dtype)

    def one_hot_cols(idx2d, n_rows, n_cols, dtype):   # out[r, n] = (idx2d[r, 0] == n)
        return jnp.where(lax.broadcasted_iota(jnp.int32, (n_rows, n_cols), 1) == idx2d,
                         1.0, 0.0).astype(dtype)

    # ---- input encoders: bf16 x @ bf16 W^T on the MXU (f32 accumulate); cast done in-kernel.
    #      Encoder weights are stored transposed (H, K) lane-dense -> transposed-RHS matmul.
    enc_st = lax.dot_general(x_st_ref[...].astype(bf16), w_st_ref[...], TRANS_B,
                             preferred_element_type=f32)                       # (N_ST, H)
    enc_vc = lax.dot_general(x_vc_ref[...].astype(bf16), w_vc_ref[...], TRANS_B,
                             preferred_element_type=f32)                       # (N_VC, H)
    # Embedding rows (+ linear bias, pre-folded into the table) gathered via an exact one-hot matmul.
    emb_tbl = aux_ref[0:NT, :]                                                 # (NT, H) f32
    add = jnp.dot(one_hot_cols(ids_col, NT, NT, f32), emb_tbl,
                  preferred_element_type=f32)                                  # (NT, H)
    h = jnp.concatenate([enc_st, enc_vc], axis=0) + add                        # (NT, H) combined state

    # ---- combined normalized mean-aggregation adjacency, built in-kernel from the edge list.
    one_src = one_hot_rows(src_row, NT, E, bf16)                               # (NT, E)
    one_dst = one_hot_rows(dst_row, NT, E, bf16)                               # (NT, E)
    cnt = (lax.dot_general(one_dst, one_src, TRANS_B, preferred_element_type=f32)
           + lax.dot_general(one_src, one_dst, TRANS_B, preferred_element_type=f32))  # (NT, NT)
    deg = jnp.sum(cnt, axis=1, keepdims=True)
    adj = (cnt / jnp.maximum(deg, 1.0)).astype(bf16)                           # row-normalized (mean aggr)

    # ---- 3 hetero-SAGE layers.  Per layer: 1 aggregation matmul + 2 "wide" weight matmuls whose two
    #      lane-halves hold the per-destination-type convs; a per-row mask picks the right half.
    #      Eval-mode BatchNorm is folded into the (bf16) weights and the f32 shift rows.
    row_is_st = lax.broadcasted_iota(jnp.int32, (NT, H), 0) < N_ST             # (NT, H) dest-type mask
    for l in range(3):
        wl = whh_ref[:, l * 4 * H:l * 4 * H + 2 * H]                           # (H, 2H) [wl_vc2st | wl_st2vc]
        wr = whh_ref[:, l * 4 * H + 2 * H:(l + 1) * 4 * H]                     # (H, 2H) [wr_vc2st | wr_st2vc]
        h_bf = h.astype(bf16)
        agg = jnp.dot(adj, h_bf, preferred_element_type=f32)                   # (NT, H) mean of neighbors
        t = (jnp.dot(agg.astype(bf16), wl, preferred_element_type=f32)
             + jnp.dot(h_bf, wr, preferred_element_type=f32))                  # (NT, 2H)
        shift = jnp.where(row_is_st, aux_ref[24 + l:25 + l, :], aux_ref[27 + l:28 + l, :])
        h = jnp.where(row_is_st, t[:, 0:H], t[:, H:2 * H]) + shift
        if l < 2:                               # conv1/conv2: BN(folded)+ReLU; conv3: neither
            h = jnp.maximum(h, 0.0)

    # ---- classifier: exact one-hot gather of the label-edge endpoints + dot product.
    e_st = jnp.dot(one_hot_cols(lab_st_col, E_LABEL, NT, f32), h, preferred_element_type=f32)
    e_vc = jnp.dot(one_hot_cols(lab_vc_col, E_LABEL, NT, f32), h, preferred_element_type=f32)
    pred_out[...] = jnp.sum(e_st * e_vc, axis=-1, keepdims=True)               # (E_LABEL, 1)

    h_st_out[...] = h[0:N_ST, :]
    h_vc_out[...] = h[N_ST:NT, :]


# ------------------------------------- parameter init -------------------------------------
def init_params(key):
    ks = iter(jax.random.split(key, 64))

    def nrm(shape, scale):
        return (scale * jax.random.normal(next(ks), shape)).astype(jnp.float32)

    p = {}
    p["st_lin_w"] = nrm((F_ST, H), 1.0 / np.sqrt(F_ST))
    p["st_lin_b"] = nrm((1, H), 0.01)
    p["vc_lin_w"] = nrm((F_VC, H), 1.0 / np.sqrt(F_VC))
    p["vc_lin_b"] = nrm((1, H), 0.01)
    p["st_emb"] = nrm((N_ST, H), 0.1)
    p["vc_emb"] = nrm((N_VC, H), 0.1)
    # to_hetero duplicates each SAGEConv per edge type:
    #   st2vc : ('startup','invested_by','investor')     -> updates investor nodes
    #   vc2st : ('investor','rev_invested_by','startup') -> updates startup nodes
    for layer in (1, 2, 3):
        for et in ("st2vc", "vc2st"):
            p[f"conv{layer}_{et}_wl"] = nrm((H, H), 1.0 / np.sqrt(H))
            p[f"conv{layer}_{et}_bl"] = nrm((1, H), 0.01)
            p[f"conv{layer}_{et}_wr"] = nrm((H, H), 1.0 / np.sqrt(H))
    # to_hetero duplicates BatchNorm1d per node type (eval-mode running stats, randomized here).
    for layer in (1, 2):
        for nt in ("st", "vc"):
            p[f"bn{layer}_{nt}_gamma"] = 1.0 + nrm((1, H), 0.1)
            p[f"bn{layer}_{nt}_beta"] = nrm((1, H), 0.1)
            p[f"bn{layer}_{nt}_mean"] = nrm((1, H), 0.1)
            p[f"bn{layer}_{nt}_var"] = 0.5 + jax.random.uniform(next(ks), (1, H), jnp.float32)
    return p


# --------------------- one-time packing (outside the hot path) ---------------------
def pack_params(p):
    """Pad + transpose + bf16-cast encoder weights (lane-dense), fold eval BN into SAGE weights,
    and pack embeddings/biases/shift rows into one small f32 'aux' array."""
    bf16, f32 = jnp.bfloat16, jnp.float32
    w_st_t = jnp.pad(p["st_lin_w"], ((0, F_ST_PAD - F_ST), (0, 0))).T.astype(bf16)   # (H, F_ST_PAD)
    w_vc_t = jnp.pad(p["vc_lin_w"], ((0, F_VC_PAD - F_VC), (0, 0))).T.astype(bf16)   # (H, F_VC_PAD)

    blocks, shifts_st, shifts_vc = [], [], []
    for l in (1, 2, 3):
        wl_st, bl_st, wr_st = p[f"conv{l}_vc2st_wl"], p[f"conv{l}_vc2st_bl"], p[f"conv{l}_vc2st_wr"]
        wl_vc, bl_vc, wr_vc = p[f"conv{l}_st2vc_wl"], p[f"conv{l}_st2vc_bl"], p[f"conv{l}_st2vc_wr"]
        if l < 3:  # BN is per destination node type; eval-mode fold is exact in f32.
            s_st = p[f"bn{l}_st_gamma"] * lax.rsqrt(p[f"bn{l}_st_var"] + BN_EPS)
            s_vc = p[f"bn{l}_vc_gamma"] * lax.rsqrt(p[f"bn{l}_vc_var"] + BN_EPS)
            sh_st = p[f"bn{l}_st_beta"] + (bl_st - p[f"bn{l}_st_mean"]) * s_st
            sh_vc = p[f"bn{l}_vc_beta"] + (bl_vc - p[f"bn{l}_vc_mean"]) * s_vc
            wl_st, wr_st = wl_st * s_st, wr_st * s_st
            wl_vc, wr_vc = wl_vc * s_vc, wr_vc * s_vc
        else:
            sh_st, sh_vc = bl_st, bl_vc
        blocks.append(jnp.concatenate([wl_st, wl_vc, wr_st, wr_vc], axis=1))   # (H, 4H)
        shifts_st.append(sh_st)
        shifts_vc.append(sh_vc)
    whh = jnp.concatenate(blocks, axis=1).astype(bf16)                          # (H, 12H) lane-dense bf16

    aux = jnp.zeros((32, H), f32)
    aux = aux.at[0:N_ST, :].set(p["st_emb"] + p["st_lin_b"])                    # combined emb(+bias) table
    aux = aux.at[N_ST:NT, :].set(p["vc_emb"] + p["vc_lin_b"])
    for i in range(3):
        aux = aux.at[24 + i, :].set(shifts_st[i][0])                            # startup-dest shift, layer i
        aux = aux.at[27 + i, :].set(shifts_vc[i][0])                            # investor-dest shift, layer i
    return {"w_st_t": w_st_t, "w_vc_t": w_vc_t, "whh": whh, "aux": aux}


def pad_features(x_st, x_vc):
    """One-time zero-padding of the raw features to lane multiples (keep them persistently padded)."""
    return (jnp.pad(x_st, ((0, 0), (0, F_ST_PAD - F_ST))),
            jnp.pad(x_vc, ((0, 0), (0, F_VC_PAD - F_VC))))


def pack_indices(node_ids_st, node_ids_vc, edge_index, edge_label_index):
    """One-time host-side packing of all index data into a single (32,32) int32 array."""
    idx = np.zeros((32, 32), np.int32)
    idx[0, :E] = np.asarray(edge_index[0])                  # edge sources (startup combined ids 0..15)
    idx[1, :E] = np.asarray(edge_index[1]) + N_ST           # edge dests   (investor combined ids 16..23)
    idx[0:N_ST, 24] = np.asarray(node_ids_st)               # emb-table rows (startup part of table)
    idx[N_ST:NT, 24] = np.asarray(node_ids_vc) + N_ST       # emb-table rows (investor part of table)
    idx[0:E_LABEL, 25] = np.asarray(edge_label_index[0])    # label-edge startup endpoint
    idx[0:E_LABEL, 26] = np.asarray(edge_label_index[1]) + N_ST
    return jnp.asarray(idx)


# ------------------------------- model forward (single pallas_call, no wrapper ops) -------------------------------
def model_forward(packed, x_st_pad, x_vc_pad, idx):
    h_st, h_vc, pred = pl.pallas_call(
        _fused_forward_kernel,
        in_specs=[VMEM] * 7,
        out_specs=(VMEM, VMEM, VMEM),
        out_shape=(jax.ShapeDtypeStruct((N_ST, H), jnp.float32),
                   jax.ShapeDtypeStruct((N_VC, H), jnp.float32),
                   jax.ShapeDtypeStruct((E_LABEL, 1), jnp.float32)),
    )(x_st_pad, x_vc_pad, packed["w_st_t"], packed["w_vc_t"],
      packed["whh"], packed["aux"], idx)
    return pred.reshape(E_LABEL), {"startup": h_st, "investor": h_vc}
    # TODO(synk): for serving, batch several graphs per call / keep weights VMEM-resident across calls.


# ------------------------------- pure-JAX reference (independent plumbing, mirrored bf16 rounding) -------------------------------
def mean_adjacency(src, dst, n_dst, n_src):
    A = jnp.zeros((n_dst, n_src), jnp.float32).at[dst, src].add(1.0)
    return A / jnp.maximum(A.sum(axis=1, keepdims=True), 1.0)


def reference_forward(p, x_st, x_vc, ids_st, ids_vc, edge_index, edge_label_index):
    bf = lambda a: a.astype(jnp.bfloat16).astype(jnp.float32)   # mirror the kernel's bf16 MXU operands
    h_st = bf(x_st) @ bf(p["st_lin_w"]) + p["st_lin_b"] + p["st_emb"][ids_st]
    h_vc = bf(x_vc) @ bf(p["vc_lin_w"]) + p["vc_lin_b"] + p["vc_emb"][ids_vc]
    A_vc = mean_adjacency(edge_index[0], edge_index[1], N_VC, N_ST)   # investor <- mean over startups
    A_st = mean_adjacency(edge_index[1], edge_index[0], N_ST, N_VC)   # startup  <- mean over investors

    def conv(A, x_src, x_dst, wl, wr, shift):
        agg = bf(A) @ bf(x_src)
        return bf(agg) @ bf(wl) + bf(x_dst) @ bf(wr) + shift

    for l in (1, 2, 3):
        fold = {}
        for et, nt in (("st2vc", "vc"), ("vc2st", "st")):
            wl, bl, wr = p[f"conv{l}_{et}_wl"], p[f"conv{l}_{et}_bl"], p[f"conv{l}_{et}_wr"]
            if l < 3:   # eval-mode BatchNorm is an exact affine transform -> fold it (f32)
                s = p[f"bn{l}_{nt}_gamma"] * lax.rsqrt(p[f"bn{l}_{nt}_var"] + BN_EPS)
                fold[nt] = (wl * s, wr * s, p[f"bn{l}_{nt}_beta"] + (bl - p[f"bn{l}_{nt}_mean"]) * s)
            else:
                fold[nt] = (wl, wr, bl)
        n_vc = conv(A_vc, h_st, h_vc, *fold["vc"])
        n_st = conv(A_st, h_vc, h_st, *fold["st"])
        if l < 3:
            n_vc, n_st = jnp.maximum(n_vc, 0.0), jnp.maximum(n_st, 0.0)
        h_vc, h_st = n_vc, n_st
    pred = jnp.sum(h_st[edge_label_index[0]] * h_vc[edge_label_index[1]], axis=-1)
    return pred, {"startup": h_st, "investor": h_vc}


# ------------------------------------- main -------------------------------------
if __name__ == "__main__":
    key = jax.random.PRNGKey(0)
    kp, kx1, kx2, ke1, ke2, ke3, ke4 = jax.random.split(key, 7)
    params = init_params(kp)
    packed = pack_params(params)   # one-time: pad/transpose/bf16 weights, BN fold, aux packing

    x_st = jax.random.normal(kx1, (N_ST, F_ST), jnp.float32)
    x_vc = jax.random.normal(kx2, (N_VC, F_VC), jnp.float32)
    node_ids_st = jnp.arange(N_ST, dtype=jnp.int32)
    node_ids_vc = jnp.arange(N_VC, dtype=jnp.int32)
    edge_index = jnp.stack([
        jax.random.randint(ke1, (E,), 0, N_ST),
        jax.random.randint(ke2, (E,), 0, N_VC),
    ]).astype(jnp.int32)
    edge_label_index = jnp.stack([
        jax.random.randint(ke3, (E_LABEL,), 0, N_ST),
        jax.random.randint(ke4, (E_LABEL,), 0, N_VC),
    ]).astype(jnp.int32)

    # One-time, outside the hot path: pad features to lane multiples and pack indices.
    x_st_pad, x_vc_pad = pad_features(x_st, x_vc)
    idx = pack_indices(node_ids_st, node_ids_vc, edge_index, edge_label_index)

    fwd = jax.jit(model_forward)
    pred, x_dict = fwd(packed, x_st_pad, x_vc_pad, idx)
    jax.block_until_ready((pred, x_dict))

    # Correctness check against an independent pure-JAX implementation of the same math
    # (mirrors the kernel's bf16 matmul-operand rounding; BN fold is exact in eval mode).
    pred_ref, x_dict_ref = reference_forward(
        params, x_st, x_vc, node_ids_st, node_ids_vc, edge_index, edge_label_index)
    assert np.allclose(np.asarray(pred), np.asarray(pred_ref), rtol=1e-2, atol=1e-2)
    assert np.allclose(np.asarray(x_dict["startup"]), np.asarray(x_dict_ref["startup"]),
                       rtol=1e-2, atol=1e-2)
    assert np.allclose(np.asarray(x_dict["investor"]), np.asarray(x_dict_ref["investor"]),
                       rtol=1e-2, atol=1e-2)

    print("KERNEL_OK")
</pallas_src>

<mosaic_0001>
module attributes {stable_mosaic.version = 11 : i64} {
  func.func @_fused_forward_kernel(%arg0: memref<16x2688xf32, #tpu.memory_space<vmem>>, %arg1: memref<8x4608xf32, #tpu.memory_space<vmem>>, %arg2: memref<32x2688xbf16, #tpu.memory_space<vmem>>, %arg3: memref<32x4608xbf16, #tpu.memory_space<vmem>>, %arg4: memref<32x384xbf16, #tpu.memory_space<vmem>>, %arg5: memref<32x32xf32, #tpu.memory_space<vmem>>, %arg6: memref<32x32xi32, #tpu.memory_space<vmem>>, %arg7: memref<16x32xf32, #tpu.memory_space<vmem>>, %arg8: memref<8x32xf32, #tpu.memory_space<vmem>>, %arg9: memref<8x1xf32, #tpu.memory_space<vmem>>) attributes {dimension_semantics = [], scalar_prefetch = 0 : i64, scratch_operands = 0 : i64, tpu.core_type = #tpu.core_type<tc>} {
    %c0 = arith.constant 0 : index
    %c0_0 = arith.constant 0 : index
    %0 = vector.load %arg6[%c0, %c0_0] : memref<32x32xi32, #tpu.memory_space<vmem>>, vector<1x24xi32>
    %c1 = arith.constant 1 : index
    %c0_1 = arith.constant 0 : index
    %1 = vector.load %arg6[%c1, %c0_1] : memref<32x32xi32, #tpu.memory_space<vmem>>, vector<1x24xi32>
    %c0_2 = arith.constant 0 : index
    %c24 = arith.constant 24 : index
    %2 = vector.load %arg6[%c0_2, %c24] : memref<32x32xi32, #tpu.memory_space<vmem>>, vector<24x1xi32>
    %c0_3 = arith.constant 0 : index
    %c25 = arith.constant 25 : index
    %3 = vector.load %arg6[%c0_3, %c25] : memref<32x32xi32, #tpu.memory_space<vmem>>, vector<8x1xi32>
    %c0_4 = arith.constant 0 : index
    %c26 = arith.constant 26 : index
    %4 = vector.load %arg6[%c0_4, %c26] : memref<32x32xi32, #tpu.memory_space<vmem>>, vector<8x1xi32>
    %c0_5 = arith.constant 0 : index
    %c0_6 = arith.constant 0 : index
    %5 = vector.load %arg0[%c0_5, %c0_6] : memref<16x2688xf32, #tpu.memory_space<vmem>>, vector<16x2688xf32>
    %6 = arith.truncf %5 : vector<16x2688xf32> to vector<16x2688xbf16>
    %c0_7 = arith.constant 0 : index
    %c0_8 = arith.constant 0 : index
    %7 = vector.load %arg2[%c0_7, %c0_8] : memref<32x2688xbf16, #tpu.memory_space<vmem>>, vector<32x2688xbf16>
    %cst = arith.constant dense<0.000000e+00> : vector<16x32xf32>
    %8 = tpu.matmul %6, %7, %cst {dimension_numbers = #tpu.dot_dimension_numbers<[1], [1], [0], [0], [0, 0, 1, 0], [], []>} : vector<16x2688xbf16>, vector<32x2688xbf16>, vector<16x32xf32> -> vector<16x32xf32>
    %c0_9 = arith.constant 0 : index
    %c0_10 = arith.constant 0 : index
    %9 = vector.load %arg1[%c0_9, %c0_10] : memref<8x4608xf32, #tpu.memory_space<vmem>>, vector<8x4608xf32>
    %10 = arith.truncf %9 : vector<8x4608xf32> to vector<8x4608xbf16>
    %c0_11 = arith.constant 0 : index
    %c0_12 = arith.constant 0 : index
    %11 = vector.load %arg3[%c0_11, %c0_12] : memref<32x4608xbf16, #tpu.memory_space<vmem>>, vector<32x4608xbf16>
    %cst_13 = arith.constant dense<0.000000e+00> : vector<8x32xf32>
    %12 = tpu.matmul %10, %11, %cst_13 {dimension_numbers = #tpu.dot_dimension_numbers<[1], [1], [0], [0], [0, 0, 1, 0], [], []>} : vector<8x4608xbf16>, vector<32x4608xbf16>, vector<8x32xf32> -> vector<8x32xf32>
    %c0_14 = arith.constant 0 : index
    %c0_15 = arith.constant 0 : index
    %13 = vector.load %arg5[%c0_14, %c0_15] : memref<32x32xf32, #tpu.memory_space<vmem>>, vector<24x32xf32>
    %14 = tpu.iota {dimensions = array<i32: 1>} : vector<24x24xi32>
    %15 = vector.broadcast %2 : vector<24x1xi32> to vector<24x24xi32>
    %16 = arith.cmpi eq, %14, %15 : vector<24x24xi32>
    %cst_16 = arith.constant 1.000000e+00 : f32
    %cst_17 = arith.constant 0.000000e+00 : f32
    %17 = vector.broadcast %cst_16 : f32 to vector<24x24xf32>
    %18 = vector.broadcast %cst_17 : f32 to vector<24x24xf32>
    %19 = arith.select %16, %17, %18 : vector<24x24xi1>, vector<24x24xf32>
    %cst_18 = arith.constant dense<0.000000e+00> : vector<24x32xf32>
    %20 = tpu.matmul %19, %13, %cst_18 {dimension_numbers = #tpu.dot_dimension_numbers<[1], [0], [0], [1], [0, 0, 1, 1], [], []>} : vector<24x24xf32>, vector<24x32xf32>, vector<24x32xf32> -> vector<24x32xf32>
    %21 = tpu.concatenate %8, %12 in 0 : vector<16x32xf32>, vector<8x32xf32> -> vector<24x32xf32>
    %22 = arith.addf %21, %20 : vector<24x32xf32>
    %23 = tpu.iota {dimensions = array<i32: 0>} : vector<24x24xi32>
    %24 = vector.broadcast %0 : vector<1x24xi32> to vector<24x24xi32>
    %25 = arith.cmpi eq, %23, %24 : vector<24x24xi32>
    %cst_19 = arith.constant 1.000000e+00 : f32
    %cst_20 = arith.constant 0.000000e+00 : f32
    %26 = vector.broadcast %cst_19 : f32 to vector<24x24xf32>
    %27 = vector.broadcast %cst_20 : f32 to vector<24x24xf32>
    %28 = arith.select %25, %26, %27 : vector<24x24xi1>, vector<24x24xf32>
    %29 = arith.truncf %28 : vector<24x24xf32> to vector<24x24xbf16>
    %30 = tpu.iota {dimensions = array<i32: 0>} : vector<24x24xi32>
    %31 = vector.broadcast %1 : vector<1x24xi32> to vector<24x24xi32>
    %32 = arith.cmpi eq, %30, %31 : vector<24x24xi32>
    %cst_21 = arith.constant 1.000000e+00 : f32
    %cst_22 = arith.constant 0.000000e+00 : f32
    %33 = vector.broadcast %cst_21 : f32 to vector<24x24xf32>
    %34 = vector.broadcast %cst_22 : f32 to vector<24x24xf32>
    %35 = arith.select %32, %33, %34 : vector<24x24xi1>, vector<24x24xf32>
    %36 = arith.truncf %35 : vector<24x24xf32> to vector<24x24xbf16>
    %cst_23 = arith.constant dense<0.000000e+00> : vector<24x24xf32>
    %37 = tpu.matmul %36, %29, %cst_23 {dimension_numbers = #tpu.dot_dimension_numbers<[1], [1], [0], [0], [0, 0, 1, 0], [], []>} : vector<24x24xbf16>, vector<24x24xbf16>, vector<24x24xf32> -> vector<24x24xf32>
    %cst_24 = arith.constant dense<0.000000e+00> : vector<24x24xf32>
    %38 = tpu.matmul %29, %36, %cst_24 {dimension_numbers = #tpu.dot_dimension_numbers<[1], [1], [0], [0], [0, 0, 1, 0], [], []>} : vector<24x24xbf16>, vector<24x24xbf16>, vector<24x24xf32> -> vector<24x24xf32>
    %39 = arith.addf %37, %38 : vector<24x24xf32>
    %cst_25 = arith.constant dense<0.000000e+00> : vector<24xf32>
    %40 = vector.multi_reduction <add>, %39, %cst_25 [1] : vector<24x24xf32> to vector<24xf32>
    %41 = vector.shape_cast %40 : vector<24xf32> to vector<24x1xf32>
    %cst_26 = arith.constant 1.000000e+00 : f32
    %42 = vector.broadcast %cst_26 : f32 to vector<24x1xf32>
    %43 = arith.maximumf %41, %42 : vector<24x1xf32>
    %44 = vector.broadcast %43 : vector<24x1xf32> to vector<24x24xf32>
    %45 = arith.divf %39, %44 : vector<24x24xf32>
    %46 = arith.truncf %45 : vector<24x24xf32> to vector<24x24xbf16>
    %47 = tpu.iota {dimensions = array<i32: 0>} : vector<24x32xi32>
    %c16_i32 = arith.constant 16 : i32
    %48 = vector.broadcast %c16_i32 : i32 to vector<24x32xi32>
    %49 = arith.cmpi slt, %47, %48 : vector<24x32xi32>
    %c0_27 = arith.constant 0 : index
    %c0_28 = arith.constant 0 : index
    %50 = vector.load %arg4[%c0_27, %c0_28] : memref<32x384xbf16, #tpu.memory_space<vmem>>, vector<32x64xbf16>
    %c0_29 = arith.constant 0 : index
    %c64 = arith.constant 64 : index
    %51 = vector.load %arg4[%c0_29, %c64] : memref<32x384xbf16, #tpu.memory_space<vmem>>, vector<32x64xbf16>
    %52 = arith.truncf %22 : vector<24x32xf32> to vector<24x32xbf16>
    %cst_30 = arith.constant dense<0.000000e+00> : vector<24x32xf32>
    %53 = tpu.matmul %46, %52, %cst_30 {dimension_numbers = #tpu.dot_dimension_numbers<[1], [0], [0], [1], [0, 0, 1, 1], [], []>} : vector<24x24xbf16>, vector<24x32xbf16>, vector<24x32xf32> -> vector<24x32xf32>
    %54 = arith.truncf %53 : vector<24x32xf32> to vector<24x32xbf16>
    %cst_31 = arith.constant dense<0.000000e+00> : vector<24x64xf32>
    %55 = tpu.matmul %54, %50, %cst_31 {dimension_numbers = #tpu.dot_dimension_numbers<[1], [0], [0], [1], [0, 0, 1, 1], [], []>} : vector<24x32xbf16>, vector<32x64xbf16>, vector<24x64xf32> -> vector<24x64xf32>
    %cst_32 = arith.constant dense<0.000000e+00> : vector<24x64xf32>
    %56 = tpu.matmul %52, %51, %cst_32 {dimension_numbers = #tpu.dot_dimension_numbers<[1], [0], [0], [1], [0, 0, 1, 1], [], []>} : vector<24x32xbf16>, vector<32x64xbf16>, vector<24x64xf32> -> vector<24x64xf32>
    %57 = arith.addf %55, %56 : vector<24x64xf32>
    %c24_33 = arith.constant 24 : index
    %c0_34 = arith.constant 0 : index
    %58 = vector.load %arg5[%c24_33, %c0_34] : memref<32x32xf32, #tpu.memory_space<vmem>>, vector<1x32xf32>
    %c27 = arith.constant 27 : index
    %c0_35 = arith.constant 0 : index
    %59 = vector.load %arg5[%c27, %c0_35] : memref<32x32xf32, #tpu.memory_space<vmem>>, vector<1x32xf32>
    %60 = vector.shape_cast %58 : vector<1x32xf32> to vector<1x32xf32>
    %61 = vector.broadcast %60 : vector<1x32xf32> to vector<24x32xf32>
    %62 = vector.shape_cast %59 : vector<1x32xf32> to vector<1x32xf32>
    %63 = vector.broadcast %62 : vector<1x32xf32> to vector<24x32xf32>
    %64 = arith.select %49, %61, %63 : vector<24x32xi1>, vector<24x32xf32>
    %65 = vector.extract_strided_slice %57 {offsets = [0, 0], sizes = [24, 32], strides = [1, 1]} : vector<24x64xf32> to vector<24x32xf32>
    %66 = vector.extract_strided_slice %57 {offsets = [0, 32], sizes = [24, 32], strides = [1, 1]} : vector<24x64xf32> to vector<24x32xf32>
    %67 = arith.select %49, %65, %66 : vector<24x32xi1>, vector<24x32xf32>
    %68 = arith.addf %67, %64 : vector<24x32xf32>
    %cst_36 = arith.constant 0.000000e+00 : f32
    %69 = vector.broadcast %cst_36 : f32 to vector<24x32xf32>
    %70 = arith.maximumf %68, %69 : vector<24x32xf32>
    %c0_37 = arith.constant 0 : index
    %c128 = arith.constant 128 : index
    %71 = vector.load %arg4[%c0_37, %c128] : memref<32x384xbf16, #tpu.memory_space<vmem>>, vector<32x64xbf16>
    %c0_38 = arith.constant 0 : index
    %c192 = arith.constant 192 : index
    %72 = vector.load %arg4[%c0_38, %c192] : memref<32x384xbf16, #tpu.memory_space<vmem>>, vector<32x64xbf16>
    %73 = arith.truncf %70 : vector<24x32xf32> to vector<24x32xbf16>
    %cst_39 = arith.constant dense<0.000000e+00> : vector<24x32xf32>
    %74 = tpu.matmul %46, %73, %cst_39 {dimension_numbers = #tpu.dot_dimension_numbers<[1], [0], [0], [1], [0, 0, 1, 1], [], []>} : vector<24x24xbf16>, vector<24x32xbf16>, vector<24x32xf32> -> vector<24x32xf32>
    %75 = arith.truncf %74 : vector<24x32xf32> to vector<24x32xbf16>
    %cst_40 = arith.constant dense<0.000000e+00> : vector<24x64xf32>
    %76 = tpu.matmul %75, %71, %cst_40 {dimension_numbers = #tpu.dot_dimension_numbers<[1], [0], [0], [1], [0, 0, 1, 1], [], []>} : vector<24x32xbf16>, vector<32x64xbf16>, vector<24x64xf32> -> vector<24x64xf32>
    %cst_41 = arith.constant dense<0.000000e+00> : vector<24x64xf32>
    %77 = tpu.matmul %73, %72, %cst_41 {dimension_numbers = #tpu.dot_dimension_numbers<[1], [0], [0], [1], [0, 0, 1, 1], [], []>} : vector<24x32xbf16>, vector<32x64xbf16>, vector<24x64xf32> -> vector<24x64xf32>
    %78 = arith.addf %76, %77 : vector<24x64xf32>
    %c25_42 = arith.constant 25 : index
    %c0_43 = arith.constant 0 : index
    %79 = vector.load %arg5[%c25_42, %c0_43] : memref<32x32xf32, #tpu.memory_space<vmem>>, vector<1x32xf32>
    %c28 = arith.constant 28 : index
    %c0_44 = arith.constant 0 : index
    %80 = vector.load %arg5[%c28, %c0_44] : memref<32x32xf32, #tpu.memory_space<vmem>>, vector<1x32xf32>
    %81 = vector.shape_cast %79 : vector<1x32xf32> to vector<1x32xf32>
    %82 = vector.broadcast %81 : vector<1x32xf32> to vector<24x32xf32>
    %83 = vector.shape_cast %80 : vector<1x32xf32> to vector<1x32xf32>
    %84 = vector.broadcast %83 : vector<1x32xf32> to vector<24x32xf32>
    %85 = arith.select %49, %82, %84 : vector<24x32xi1>, vector<24x32xf32>
    %86 = vector.extract_strided_slice %78 {offsets = [0, 0], sizes = [24, 32], strides = [1, 1]} : vector<24x64xf32> to vector<24x32xf32>
    %87 = vector.extract_strided_slice %78 {offsets = [0, 32], sizes = [24, 32], strides = [1, 1]} : vector<24x64xf32> to vector<24x32xf32>
    %88 = arith.select %49, %86, %87 : vector<24x32xi1>, vector<24x32xf32>
    %89 = arith.addf %88, %85 : vector<24x32xf32>
    %cst_45 = arith.constant 0.000000e+00 : f32
    %90 = vector.broadcast %cst_45 : f32 to vector<24x32xf32>
    %91 = arith.maximumf %89, %90 : vector<24x32xf32>
    %c0_46 = arith.constant 0 : index
    %c256 = arith.constant 256 : index
    %92 = vector.load %arg4[%c0_46, %c256] : memref<32x384xbf16, #tpu.memory_space<vmem>>, vector<32x64xbf16>
    %c0_47 = arith.constant 0 : index
    %c320 = arith.constant 320 : index
    %93 = vector.load %arg4[%c0_47, %c320] : memref<32x384xbf16, #tpu.memory_space<vmem>>, vector<32x64xbf16>
    %94 = arith.truncf %91 : vector<24x32xf32> to vector<24x32xbf16>
    %cst_48 = arith.constant dense<0.000000e+00> : vector<24x32xf32>
    %95 = tpu.matmul %46, %94, %cst_48 {dimension_numbers = #tpu.dot_dimension_numbers<[1], [0], [0], [1], [0, 0, 1, 1], [], []>} : vector<24x24xbf16>, vector<24x32xbf16>, vector<24x32xf32> -> vector<24x32xf32>
    %96 = arith.truncf %95 : vector<24x32xf32> to vector<24x32xbf16>
    %cst_49 = arith.constant dense<0.000000e+00> : vector<24x64xf32>
    %97 = tpu.matmul %96, %92, %cst_49 {dimension_numbers = #tpu.dot_dimension_numbers<[1], [0], [0], [1], [0, 0, 1, 1], [], []>} : vector<24x32xbf16>, vector<32x64xbf16>, vector<24x64xf32> -> vector<24x64xf32>
    %cst_50 = arith.constant dense<0.000000e+00> : vector<24x64xf32>
    %98 = tpu.matmul %94, %93, %cst_50 {dimension_numbers = #tpu.dot_dimension_numbers<[1], [0], [0], [1], [0, 0, 1, 1], [], []>} : vector<24x32xbf16>, vector<32x64xbf16>, vector<24x64xf32> -> vector<24x64xf32>
    %99 = arith.addf %97, %98 : vector<24x64xf32>
    %c26_51 = arith.constant 26 : index
    %c0_52 = arith.constant 0 : index
    %100 = vector.load %arg5[%c26_51, %c0_52] : memref<32x32xf32, #tpu.memory_space<vmem>>, vector<1x32xf32>
    %c29 = arith.constant 29 : index
    %c0_53 = arith.constant 0 : index
    %101 = vector.load %arg5[%c29, %c0_53] : memref<32x32xf32, #tpu.memory_space<vmem>>, vector<1x32xf32>
    %102 = vector.shape_cast %100 : vector<1x32xf32> to vector<1x32xf32>
    %103 = vector.broadcast %102 : vector<1x32xf32> to vector<24x32xf32>
    %104 = vector.shape_cast %101 : vector<1x32xf32> to vector<1x32xf32>
    %105 = vector.broadcast %104 : vector<1x32xf32> to vector<24x32xf32>
    %106 = arith.select %49, %103, %105 : vector<24x32xi1>, vector<24x32xf32>
    %107 = vector.extract_strided_slice %99 {offsets = [0, 0], sizes = [24, 32], strides = [1, 1]} : vector<24x64xf32> to vector<24x32xf32>
    %108 = vector.extract_strided_slice %99 {offsets = [0, 32], sizes = [24, 32], strides = [1, 1]} : vector<24x64xf32> to vector<24x32xf32>
    %109 = arith.select %49, %107, %108 : vector<24x32xi1>, vector<24x32xf32>
    %110 = arith.addf %109, %106 : vector<24x32xf32>
    %111 = tpu.iota {dimensions = array<i32: 1>} : vector<8x24xi32>
    %112 = vector.broadcast %3 : vector<8x1xi32> to vector<8x24xi32>
    %113 = arith.cmpi eq, %111, %112 : vector<8x24xi32>
    %cst_54 = arith.constant 1.000000e+00 : f32
    %cst_55 = arith.constant 0.000000e+00 : f32
    %114 = vector.broadcast %cst_54 : f32 to vector<8x24xf32>
    %115 = vector.broadcast %cst_55 : f32 to vector<8x24xf32>
    %116 = arith.select %113, %114, %115 : vector<8x24xi1>, vector<8x24xf32>
    %cst_56 = arith.constant dense<0.000000e+00> : vector<8x32xf32>
    %117 = tpu.matmul %116, %110, %cst_56 {dimension_numbers = #tpu.dot_dimension_numbers<[1], [0], [0], [1], [0, 0, 1, 1], [], []>} : vector<8x24xf32>, vector<24x32xf32>, vector<8x32xf32> -> vector<8x32xf32>
    %118 = tpu.iota {dimensions = array<i32: 1>} : vector<8x24xi32>
    %119 = vector.broadcast %4 : vector<8x1xi32> to vector<8x24xi32>
    %120 = arith.cmpi eq, %118, %119 : vector<8x24xi32>
    %cst_57 = arith.constant 1.000000e+00 : f32
    %cst_58 = arith.constant 0.000000e+00 : f32
    %121 = vector.broadcast %cst_57 : f32 to vector<8x24xf32>
    %122 = vector.broadcast %cst_58 : f32 to vector<8x24xf32>
    %123 = arith.select %120, %121, %122 : vector<8x24xi1>, vector<8x24xf32>
    %cst_59 = arith.constant dense<0.000000e+00> : vector<8x32xf32>
    %124 = tpu.matmul %123, %110, %cst_59 {dimension_numbers = #tpu.dot_dimension_numbers<[1], [0], [0], [1], [0, 0, 1, 1], [], []>} : vector<8x24xf32>, vector<24x32xf32>, vector<8x32xf32> -> vector<8x32xf32>
    %125 = arith.mulf %117, %124 : vector<8x32xf32>
    %cst_60 = arith.constant dense<0.000000e+00> : vector<8xf32>
    %126 = vector.multi_reduction <add>, %125, %cst_60 [1] : vector<8x32xf32> to vector<8xf32>
    %127 = vector.shape_cast %126 : vector<8xf32> to vector<8x1xf32>
    %c0_61 = arith.constant 0 : index
    %c0_62 = arith.constant 0 : index
    %128 = vector.load %arg9[%c0_61, %c0_62] : memref<8x1xf32, #tpu.memory_space<vmem>>, vector<8x1xf32>
    tpu.vector_store %arg9[%c0_61, %c0_62], %127 {strides = array<i32>} : memref<8x1xf32, #tpu.memory_space<vmem>>, vector<8x1xf32>,
    %129 = vector.extract_strided_slice %110 {offsets = [0, 0], sizes = [16, 32], strides = [1, 1]} : vector<24x32xf32> to vector<16x32xf32>
    %c0_63 = arith.constant 0 : index
    %c0_64 = arith.constant 0 : index
    %130 = vector.load %arg7[%c0_63, %c0_64] : memref<16x32xf32, #tpu.memory_space<vmem>>, vector<16x32xf32>
    tpu.vector_store %arg7[%c0_63, %c0_64], %129 {strides = array<i32>} : memref<16x32xf32, #tpu.memory_space<vmem>>, vector<16x32xf32>,
    %131 = vector.extract_strided_slice %110 {offsets = [16, 0], sizes = [8, 32], strides = [1, 1]} : vector<24x32xf32> to vector<8x32xf32>
    %c0_65 = arith.constant 0 : index
    %c0_66 = arith.constant 0 : index
    %132 = vector.load %arg8[%c0_65, %c0_66] : memref<8x32xf32, #tpu.memory_space<vmem>>, vector<8x32xf32>
    tpu.vector_store %arg8[%c0_65, %c0_66], %131 {strides = array<i32>} : memref<8x32xf32, #tpu.memory_space<vmem>>, vector<8x32xf32>,
    return
  }
}

</mosaic_0001>

<llo_original>
// kernel: model_forward.1
$region0: #{model_forward.1}
  #allocation0 [shape = 'u32[]', space=smem, size = 0x4, offset = 0x4, fixed_abs, tag = 'smem constant byte address 0x4 - core index']
  #allocation1 [shape = 'u32[144,128]{1,0:T(1,128)}', space=vmem, size = 0x12000, scoped, tag = 'internal scratch']
  %s0 = inlined_call_operand.hbm [shape: f32[16,2688], index: 0, kind: input, shape index: {}]
  %s1 = inlined_call_operand.hbm [shape: f32[8,4608], index: 1, kind: input, shape index: {}]
  %s2 = inlined_call_operand.hbm [shape: bf16[32,2688], index: 2, kind: input, shape index: {}]
  %s3 = inlined_call_operand.hbm [shape: bf16[32,4608], index: 3, kind: input, shape index: {}]
  %s4 = inlined_call_operand.hbm [shape: bf16[32,384], index: 4, kind: input, shape index: {}]
  %s5 = inlined_call_operand.hbm [shape: f32[32,32], index: 5, kind: input, shape index: {}]
  %s6 = inlined_call_operand.hbm [shape: s32[32,32], index: 6, kind: input, shape index: {}]
  %s7 = inlined_call_operand.hbm [shape: f32[16,32], index: 7, kind: output, shape index: {0}]
  %s8 = inlined_call_operand.hbm [shape: f32[8,32], index: 8, kind: output, shape index: {1}]
  %s9 = inlined_call_operand.vmem [shape: f32[8,1], index: 9, kind: output, shape index: {2}]
  %10 = xla_tuple %s7, %s8, %s9
  %s11 = sld [smem:[#allocation0]]
  $region82: #{model_forward.1} parent=0
    _
  %s13 = ssub.s32 1, %s11
  %s14 = scalar_select 0, %s13, %s11
  $region1: #{model_forward.1} parent=0
    #allocation2 [shape = 'u8[172032]{0}', space=vmem, size = 0x2a000, scoped, tag = 'input window, operand 0, single buffered']
    #allocation3 [shape = 's32[1]{0}', space=sflag, size = 0x4, scoped, tag = 'scoped memory for model_forward.1']
    #allocation4 [shape = 's32[1]{0}', space=sflag, size = 0x4, scoped, tag = 'scoped memory for model_forward.1']
    #allocation5 [shape = 'u8[147456]{0}', space=vmem, size = 0x24000, scoped, tag = 'input window, operand 1, single buffered']
    #allocation6 [shape = 's32[1]{0}', space=sflag, size = 0x4, scoped, tag = 'scoped memory for model_forward.1']
    #allocation7 [shape = 'u8[172032]{0}', space=vmem, size = 0x2a000, scoped, tag = 'input window, operand 2, single buffered']
    #allocation8 [shape = 'u8[294912]{0}', space=vmem, size = 0x48000, scoped, tag = 'input window, operand 3, single buffered']
    #allocation9 [shape = 's32[1]{0}', space=sflag, size = 0x4, scoped, tag = 'scoped memory for model_forward.1']
    #allocation10 [shape = 'u8[24576]{0}', space=vmem, size = 0x6000, scoped, tag = 'input window, operand 4, single buffered']
    #allocation11 [shape = 'u8[16384]{0}', space=vmem, size = 0x4000, scoped, tag = 'input window, operand 5, single buffered']
    #allocation12 [shape = 's32[1]{0}', space=sflag, size = 0x4, scoped, tag = 'scoped memory for model_forward.1']
    #allocation13 [shape = 'u8[16384]{0}', space=vmem, size = 0x4000, scoped, tag = 'input window, operand 6, single buffered']
    #allocation14 [shape = 'u8[8192]{0}', space=vmem, size = 0x2000, scoped, tag = 'output window, operand 0, single buffered']
    #allocation15 [shape = 'u8[4096]{0}', space=vmem, size = 0x1000, scoped, tag = 'output window, operand 1, single buffered']
    #allocation16 [shape = 's32[1]{0}', space=sflag, size = 0x4, scoped, tag = 'scoped memory for model_forward.1']
    %15 = vsyncpa [#allocation3], 0
    %16 = vsyncpa [#allocation6], 0
    %17 = vsyncpa [#allocation9], 0
    %18 = vsyncpa [#allocation12], 0
    %19 = vsyncpa [#allocation4], 0
    %20 = vsyncpa [#allocation16], 0
    // Predicated region
    $region2: #{model_forward.1} parent=1 // pred_check
      _
    $region3: #{model_forward.1} parent=1 // pred_check_branch
      %22 = sbr.rel (0) target = $region5
    $region4: #{model_forward.1} parent=1 // pred_region
      %s24 = ssub.s32 5376, 5376
      %25 = vsyncadd [#allocation3], %s24
      %s26 = sshll.u32 [#allocation2], 4
      %s27 = int_to_ptr.vmem [resolvable:$true] %s26
      %32 = dma.hbm_to_vmem [thread:$0]  %s0, 5376, %s27, [#allocation3], 2688, 2688, 168
    $region5: #{model_forward.1} parent=1 // pred_fallthru
      _
    // Predicated region
    $region6: #{model_forward.1} parent=1 // pred_check
      _
    $region7: #{model_forward.1} parent=1 // pred_check_branch
      %34 = sbr.rel (0) target = $region9
    $region8: #{model_forward.1} parent=1 // pred_region
      %s36 = ssub.s32 4608, 4608
      %37 = vsyncadd [#allocation6], %s36
      %s39 = sshll.u32 [#allocation5], 4
      %s40 = int_to_ptr.vmem [resolvable:$true] %s39
      %42 = dma.hbm_to_vmem [thread:$0]  %s1, 4608, %s40, [#allocation6]
    $region9: #{model_forward.1} parent=1 // pred_fallthru
      _
    // Predicated region
    $region10: #{model_forward.1} parent=1 // pred_check
      _
    $region11: #{model_forward.1} parent=1 // pred_check_branch
      %44 = sbr.rel (0) target = $region13
    $region12: #{model_forward.1} parent=1 // pred_region
      %s46 = ssub.s32 5376, 5376
      %47 = vsyncadd [#allocation6], %s46
      %s48 = sshll.u32 [#allocation7], 4
      %s49 = int_to_ptr.vmem [resolvable:$true] %s48
      %54 = dma.hbm_to_vmem [thread:$0]  %s2, 5376, %s49, [#allocation6], 1344, 1344, 84
    $region13: #{model_forward.1} parent=1 // pred_fallthru
      _
    // Predicated region
    $region14: #{model_forward.1} parent=1 // pred_check
      _
    $region15: #{model_forward.1} parent=1 // pred_check_branch
      %56 = sbr.rel (0) target = $region17
    $region16: #{model_forward.1} parent=1 // pred_region
      %s58 = ssub.s32 9216, 9216
      %59 = vsyncadd [#allocation9], %s58
      %s60 = sshll.u32 [#allocation8], 4
      %s61 = int_to_ptr.vmem [resolvable:$true] %s60
      %66 = dma.hbm_to_vmem [thread:$0]  %s3, 9216, %s61, [#allocation9], 2304, 2304, 144
    $region17: #{model_forward.1} parent=1 // pred_fallthru
      _
    // Predicated region
    $region18: #{model_forward.1} parent=1 // pred_check
      _
    $region19: #{model_forward.1} parent=1 // pred_check_branch
      %68 = sbr.rel (0) target = $region21
    $region20: #{model_forward.1} parent=1 // pred_region
      %s70 = ssub.s32 768, 768
      %71 = vsyncadd [#allocation9], %s70
      %s72 = sshll.u32 [#allocation10], 4
      %s73 = int_to_ptr.vmem [resolvable:$true] %s72
      %78 = dma.hbm_to_vmem [thread:$0]  %s4, 768, %s73, [#allocation9], 192, 192, 12
    $region21: #{model_forward.1} parent=1 // pred_fallthru
      _
    // Predicated region
    $region22: #{model_forward.1} parent=1 // pred_check
      _
    $region23: #{model_forward.1} parent=1 // pred_check_branch
      %80 = sbr.rel (0) target = $region25
    $region24: #{model_forward.1} parent=1 // pred_region
      %s82 = ssub.s32 512, 512
      %83 = vsyncadd [#allocation12], %s82
      %s84 = sshll.u32 [#allocation11], 4
      %s85 = int_to_ptr.vmem [resolvable:$true] %s84
      %90 = dma.hbm_to_vmem [thread:$0]  %s5, 512, %s85, [#allocation12], 128, 128, 8
    $region25: #{model_forward.1} parent=1 // pred_fallthru
      _
    // Predicated region
    $region26: #{model_forward.1} parent=1 // pred_check
      _
    $region27: #{model_forward.1} parent=1 // pred_check_branch
      %92 = sbr.rel (0) target = $region29
    $region28: #{model_forward.1} parent=1 // pred_region
      %s94 = ssub.s32 512, 512
      %95 = vsyncadd [#allocation12], %s94
      %s96 = sshll.u32 [#allocation13], 4
      %s97 = int_to_ptr.vmem [resolvable:$true] %s96
      %102 = dma.hbm_to_vmem [thread:$0]  %s6, 512, %s97, [#allocation12], 128, 128, 8
    $region29: #{model_forward.1} parent=1 // pred_fallthru
      _
    // Predicated region
    $region30: #{model_forward.1} parent=1 // pred_check
      _
    $region31: #{model_forward.1} parent=1 // pred_check_branch
      %104 = sbr.rel (0) target = $region33
    $region32: #{model_forward.1} parent=1 // pred_region
      %105 = dma.done [#allocation3], 5376
    $region33: #{model_forward.1} parent=1 // pred_fallthru
      _
    // Predicated region
    $region34: #{model_forward.1} parent=1 // pred_check
      _
    $region35: #{model_forward.1} parent=1 // pred_check_branch
      %107 = sbr.rel (0) target = $region37
    $region36: #{model_forward.1} parent=1 // pred_region
      %108 = dma.done [#allocation6], 4608
    $region37: #{model_forward.1} parent=1 // pred_fallthru
      _
    // Predicated region
    $region38: #{model_forward.1} parent=1 // pred_check
      _
    $region39: #{model_forward.1} parent=1 // pred_check_branch
      %110 = sbr.rel (0) target = $region41
    $region40: #{model_forward.1} parent=1 // pred_region
      %111 = dma.done [#allocation6], 5376
    $region41: #{model_forward.1} parent=1 // pred_fallthru
      _
    // Predicated region
    $region42: #{model_forward.1} parent=1 // pred_check
      _
    $region43: #{model_forward.1} parent=1 // pred_check_branch
      %113 = sbr.rel (0) target = $region45
    $region44: #{model_forward.1} parent=1 // pred_region
      %114 = dma.done [#allocation9], 9216
    $region45: #{model_forward.1} parent=1 // pred_fallthru
      _
    // Predicated region
    $region46: #{model_forward.1} parent=1 // pred_check
      _
    $region47: #{model_forward.1} parent=1 // pred_check_branch
      %116 = sbr.rel (0) target = $region49
    $region48: #{model_forward.1} parent=1 // pred_region
      %117 = dma.done [#allocation9], 768
    $region49: #{model_forward.1} parent=1 // pred_fallthru
      _
    // Predicated region
    $region50: #{model_forward.1} parent=1 // pred_check
      _
    $region51: #{model_forward.1} parent=1 // pred_check_branch
      %119 = sbr.rel (0) target = $region53
    $region52: #{model_forward.1} parent=1 // pred_region
      %120 = dma.done [#allocation12], 512
    $region53: #{model_forward.1} parent=1 // pred_fallthru
      _
    // Predicated region
    $region54: #{model_forward.1} parent=1 // pred_check
      _
    $region55: #{model_forward.1} parent=1 // pred_check_branch
      %122 = sbr.rel (0) target = $region57
    $region56: #{model_forward.1} parent=1 // pred_region
      %123 = dma.done [#allocation12], 512
    $region57: #{model_forward.1} parent=1 // pred_fallthru
      _
    %v125 = vld [vmem:[#allocation13] sm:$0x1]
    %v126 = vld [vmem:[#allocation13 + $0x1] sm:$0x1]
    %v127 = vld [vmem:[#allocation13] sm:$0xff]
    %v128 = vld [vmem:[#allocation13 + $0x8] sm:$0xff]
    %v129 = vld [vmem:[#allocation13 + $0x10] sm:$0xff]
    %v130 = vld [vmem:[#allocation2] sm:$0xff]
    %v131 = vld [vmem:[#allocation2 + $0x8] sm:$0xff]
    %v132 = vld [vmem:[#allocation2 + $0x10] sm:$0xff]
    %v133 = vld [vmem:[#allocation2 + $0x18] sm:$0xff]
    %v134 = vld [vmem:[#allocation2 + $0x20] sm:$0xff]
    %v135 = vld [vmem:[#allocation2 + $0x28] sm:$0xff]
    %v136 = vld [vmem:[#allocation2 + $0x30] sm:$0xff]
    %v137 = vld [vmem:[#allocation2 + $0x38] sm:$0xff]
    %v138 = vld [vmem:[#allocation2 + $0x40] sm:$0xff]
    %v139 = vld [vmem:[#allocation2 + $0x48] sm:$0xff]
    %v140 = vld [vmem:[#allocation2 + $0x50] sm:$0xff]
    %v141 = vld [vmem:[#allocation2 + $0x58] sm:$0xff]
    %v142 = vld [vmem:[#allocation2 + $0x60] sm:$0xff]
    %v143 = vld [vmem:[#allocation2 + $0x68] sm:$0xff]
    %v144 = vld [vmem:[#allocation2 + $0x70] sm:$0xff]
    %v145 = vld [vmem:[#allocation2 + $0x78] sm:$0xff]
    %v146 = vld [vmem:[#allocation2 + $0x80] sm:$0xff]
    %v147 = vld [vmem:[#allocation2 + $0x88] sm:$0xff]
    %v148 = vld [vmem:[#allocation2 + $0x90] sm:$0xff]
    %v149 = vld [vmem:[#allocation2 + $0x98] sm:$0xff]
    %v150 = vld [vmem:[#allocation2 + $0xa0] sm:$0xff]
    %v151 = vld [vmem:[#allocation2 + $0xa8] sm:$0xff]
    %v152 = vld [vmem:[#allocation2 + $0xb0] sm:$0xff]
    %v153 = vld [vmem:[#allocation2 + $0xb8] sm:$0xff]
    %v154 = vld [vmem:[#allocation2 + $0xc0] sm:$0xff]
    %v155 = vld [vmem:[#allocation2 + $0xc8] sm:$0xff]
    %v156 = vld [vmem:[#allocation2 + $0xd0] sm:$0xff]
    %v157 = vld [vmem:[#allocation2 + $0xd8] sm:$0xff]
    %v158 = vld [vmem:[#allocation2 + $0xe0] sm:$0xff]
    %v159 = vld [vmem:[#allocation2 + $0xe8] sm:$0xff]
    %v160 = vld [vmem:[#allocation2 + $0xf0] sm:$0xff]
    %v161 = vld [vmem:[#allocation2 + $0xf8] sm:$0xff]
    %v162 = vld [vmem:[#allocation2 + $0x100] sm:$0xff]
    %v163 = vld [vmem:[#allocation2 + $0x108] sm:$0xff]
    %v164 = vld [vmem:[#allocation2 + $0x110] sm:$0xff]
    %v165 = vld [vmem:[#allocation2 + $0x118] sm:$0xff]
    %v166 = vld [vmem:[#allocation2 + $0x120] sm:$0xff]
    %v167 = vld [vmem:[#allocation2 + $0x128] sm:$0xff]
    %v168 = vld [vmem:[#allocation2 + $0x130] sm:$0xff]
    %v169 = vld [vmem:[#allocation2 + $0x138] sm:$0xff]
    %v170 = vld [vmem:[#allocation2 + $0x140] sm:$0xff]
    %v171 = vld [vmem:[#allocation2 + $0x148] sm:$0xff]
    %v172 = vpack.c.bf16 %v151, %v130
    %v173 = vpack.c.bf16 %v152, %v131
    %v174 = vpack.c.bf16 %v153, %v132
    %v175 = vpack.c.bf16 %v154, %v133
    %v176 = vpack.c.bf16 %v155, %v134
    %v177 = vpack.c.bf16 %v156, %v135
    %v178 = vpack.c.bf16 %v157, %v136
    %v179 = vpack.c.bf16 %v158, %v137
    %v180 = vpack.c.bf16 %v159, %v138
    %v181 = vpack.c.bf16 %v160, %v139
    %v182 = vpack.c.bf16 %v161, %v140
    %v183 = vpack.c.bf16 %v162, %v141
    %v184 = vpack.c.bf16 %v163, %v142
    %v185 = vpack.c.bf16 %v164, %v143
    %v186 = vpack.c.bf16 %v165, %v144
    %v187 = vpack.c.bf16 %v166, %v145
    %v188 = vpack.c.bf16 %v167, %v146
    %v189 = vpack.c.bf16 %v168, %v147
    %v190 = vpack.c.bf16 %v169, %v148
    %v191 = vpack.c.bf16 %v170, %v149
    %v192 = vpack.c.bf16 %v171, %v150
    %v193 = vld [vmem:[#allocation7] sm:$0xff]
    %v194 = vld [vmem:[#allocation7 + $0x8] sm:$0xff]
    %v195 = vld [vmem:[#allocation7 + $0x10] sm:$0xff]
    %v196 = vld [vmem:[#allocation7 + $0x18] sm:$0xff]
    %v197 = vld [vmem:[#allocation7 + $0x20] sm:$0xff]
    %v198 = vld [vmem:[#allocation7 + $0x28] sm:$0xff]
    %v199 = vld [vmem:[#allocation7 + $0x30] sm:$0xff]
    %v200 = vld [vmem:[#allocation7 + $0x38] sm:$0xff]
    %v201 = vld [vmem:[#allocation7 + $0x40] sm:$0xff]
    %v202 = vld [vmem:[#allocation7 + $0x48] sm:$0xff]
    %v203 = vld [vmem:[#allocation7 + $0x50] sm:$0xf]
    %v204 = vld [vmem:[#allocation7 + $0x54] sm:$0xff]
    %v205 = vld [vmem:[#allocation7 + $0x5c] sm:$0xff]
    %v206 = vld [vmem:[#allocation7 + $0x64] sm:$0xff]
    %v207 = vld [vmem:[#allocation7 + $0x6c] sm:$0xff]
    %v208 = vld [vmem:[#allocation7 + $0x74] sm:$0xff]
    %v209 = vld [vmem:[#allocation7 + $0x7c] sm:$0xff]
    %v210 = vld [vmem:[#allocation7 + $0x84] sm:$0xff]
    %v211 = vld [vmem:[#allocation7 + $0x8c] sm:$0xff]
    %v212 = vld [vmem:[#allocation7 + $0x94] sm:$0xff]
    %v213 = vld [vmem:[#allocation7 + $0x9c] sm:$0xff]
    %v214 = vld [vmem:[#allocation7 + $0xa4] sm:$0xf]
    %v215 = vld [vmem:[#allocation7 + $0xa8] sm:$0xff]
    %v216 = vld [vmem:[#allocation7 + $0xb0] sm:$0xff]
    %v217 = vld [vmem:[#allocation7 + $0xb8] sm:$0xff]
    %v218 = vld [vmem:[#allocation7 + $0xc0] sm:$0xff]
    %v219 = vld [vmem:[#allocation7 + $0xc8] sm:$0xff]
    %v220 = vld [vmem:[#allocation7 + $0xd0] sm:$0xff]
    %v221 = vld [vmem:[#allocation7 + $0xd8] sm:$0xff]
    %v222 = vld [vmem:[#allocation7 + $0xe0] sm:$0xff]
    %v223 = vld [vmem:[#allocation7 + $0xe8] sm:$0xff]
    %v224 = vld [vmem:[#allocation7 + $0xf0] sm:$0xff]
    %v225 = vld [vmem:[#allocation7 + $0xf8] sm:$0xf]
    %v226 = vld [vmem:[#allocation7 + $0xfc] sm:$0xff]
    %v227 = vld [vmem:[#allocation7 + $0x104] sm:$0xff]
    %v228 = vld [vmem:[#allocation7 + $0x10c] sm:$0xff]
    %v229 = vld [vmem:[#allocation7 + $0x114] sm:$0xff]
    %v230 = vld [vmem:[#allocation7 + $0x11c] sm:$0xff]
    %v231 = vld [vmem:[#allocation7 + $0x124] sm:$0xff]
    %v232 = vld [vmem:[#allocation7 + $0x12c] sm:$0xff]
    %v233 = vld [vmem:[#allocation7 + $0x134] sm:$0xff]
    %v234 = vld [vmem:[#allocation7 + $0x13c] sm:$0xff]
    %v235 = vld [vmem:[#allocation7 + $0x144] sm:$0xff]
    %v236 = vld [vmem:[#allocation7 + $0x14c] sm:$0xf]
    %v281 = vunpack.c.l.b16 %v193
    %v282 = vunpack.c.h.b16 %v193
    %v283 = vunpack.c.l.b16 %v194
    %v284 = vunpack.c.h.b16 %v194
    %v285 = vunpack.c.l.b16 %v195
    %v286 = vunpack.c.h.b16 %v195
    %v287 = vunpack.c.l.b16 %v196
    %v288 = vunpack.c.h.b16 %v196
    %v289 = vunpack.c.l.b16 %v197
    %v290 = vunpack.c.h.b16 %v197
    %v291 = vunpack.c.l.b16 %v198
    %v292 = vunpack.c.h.b16 %v198
    %v293 = vunpack.c.l.b16 %v199
    %v294 = vunpack.c.h.b16 %v199
    %v295 = vunpack.c.l.b16 %v200
    %v296 = vunpack.c.h.b16 %v200
    %v297 = vunpack.c.l.b16 %v201
    %v298 = vunpack.c.h.b16 %v201
    %v299 = vunpack.c.l.b16 %v202
    %v300 = vunpack.c.h.b16 %v202
    %v301 = vunpack.c.l.b16 %v203
    %v302 = vunpack.c.l.b16 %v204
    %v303 = vunpack.c.h.b16 %v204
    %v304 = vunpack.c.l.b16 %v205
    %v305 = vunpack.c.h.b16 %v205
    %v306 = vunpack.c.l.b16 %v206
    %v307 = vunpack.c.h.b16 %v206
    %v308 = vunpack.c.l.b16 %v207
    %v309 = vunpack.c.h.b16 %v207
    %v310 = vunpack.c.l.b16 %v208
    %v311 = vunpack.c.h.b16 %v208
    %v312 = vunpack.c.l.b16 %v209
    %v313 = vunpack.c.h.b16 %v209
    %v314 = vunpack.c.l.b16 %v210
    %v315 = vunpack.c.h.b16 %v210
    %v316 = vunpack.c.l.b16 %v211
    %v317 = vunpack.c.h.b16 %v211
    %v318 = vunpack.c.l.b16 %v212
    %v319 = vunpack.c.h.b16 %v212
    %v320 = vunpack.c.l.b16 %v213
    %v321 = vunpack.c.h.b16 %v213
    %v322 = vunpack.c.l.b16 %v214
    %v323 = vunpack.c.l.b16 %v215
    %v324 = vunpack.c.h.b16 %v215
    %v325 = vunpack.c.l.b16 %v216
    %v326 = vunpack.c.h.b16 %v216
    %v327 = vunpack.c.l.b16 %v217
    %v328 = vunpack.c.h.b16 %v217
    %v329 = vunpack.c.l.b16 %v218
    %v330 = vunpack.c.h.b16 %v218
    %v331 = vunpack.c.l.b16 %v219
    %v332 = vunpack.c.h.b16 %v219
    %v333 = vunpack.c.l.b16 %v220
    %v334 = vunpack.c.h.b16 %v220
    %v335 = vunpack.c.l.b16 %v221
    %v336 = vunpack.c.h.b16 %v221
    %v337 = vunpack.c.l.b16 %v222
    %v338 = vunpack.c.h.b16 %v222
    %v339 = vunpack.c.l.b16 %v223
    %v340 = vunpack.c.h.b16 %v223
    %v341 = vunpack.c.l.b16 %v224
    %v342 = vunpack.c.h.b16 %v224
    %v343 = vunpack.c.l.b16 %v225
    %v344 = vunpack.c.l.b16 %v226
    %v345 = vunpack.c.h.b16 %v226
    %v346 = vunpack.c.l.b16 %v227
    %v347 = vunpack.c.h.b16 %v227
    %v348 = vunpack.c.l.b16 %v228
    %v349 = vunpack.c.h.b16 %v228
    %v350 = vunpack.c.l.b16 %v229
    %v351 = vunpack.c.h.b16 %v229
    %v352 = vunpack.c.l.b16 %v230
    %v353 = vunpack.c.h.b16 %v230
    %v354 = vunpack.c.l.b16 %v231
    %v355 = vunpack.c.h.b16 %v231
    %v356 = vunpack.c.l.b16 %v232
    %v357 = vunpack.c.h.b16 %v232
    %v358 = vunpack.c.l.b16 %v233
    %v359 = vunpack.c.h.b16 %v233
    %v360 = vunpack.c.l.b16 %v234
    %v361 = vunpack.c.h.b16 %v234
    %v362 = vunpack.c.l.b16 %v235
    %v363 = vunpack.c.h.b16 %v235
    %v364 = vunpack.c.l.b16 %v236
    %v365 = vpack.c.b16 %v302, %v281
    %v366 = vpack.c.b16 %v303, %v282
    %v367 = vpack.c.b16 %v304, %v283
    %v368 = vpack.c.b16 %v305, %v284
    %v369 = vpack.c.b16 %v306, %v285
    %v370 = vpack.c.b16 %v307, %v286
    %v371 = vpack.c.b16 %v308, %v287
    %v372 = vpack.c.b16 %v309, %v288
    %v373 = vpack.c.b16 %v310, %v289
    %v374 = vpack.c.b16 %v311, %v290
    %v375 = vpack.c.b16 %v312, %v291
    %v376 = vpack.c.b16 %v313, %v292
    %v377 = vpack.c.b16 %v314, %v293
    %v378 = vpack.c.b16 %v315, %v294
    %v379 = vpack.c.b16 %v316, %v295
    %v380 = vpack.c.b16 %v317, %v296
    %v381 = vpack.c.b16 %v318, %v297
    %v382 = vpack.c.b16 %v319, %v298
    %v383 = vpack.c.b16 %v320, %v299
    %v384 = vpack.c.b16 %v321, %v300
    %v385 = vpack.c.b16 %v322, %v301
    %v386 = vpack.c.b16 %v344, %v323
    %v387 = vpack.c.b16 %v345, %v324
    %v388 = vpack.c.b16 %v346, %v325
    %v389 = vpack.c.b16 %v347, %v326
    %v390 = vpack.c.b16 %v348, %v327
    %v391 = vpack.c.b16 %v349, %v328
    %v392 = vpack.c.b16 %v350, %v329
    %v393 = vpack.c.b16 %v351, %v330
    %v394 = vpack.c.b16 %v352, %v331
    %v395 = vpack.c.b16 %v353, %v332
    %v396 = vpack.c.b16 %v354, %v333
    %v397 = vpack.c.b16 %v355, %v334
    %v398 = vpack.c.b16 %v356, %v335
    %v399 = vpack.c.b16 %v357, %v336
    %v400 = vpack.c.b16 %v358, %v337
    %v401 = vpack.c.b16 %v359, %v338
    %v402 = vpack.c.b16 %v360, %v339
    %v403 = vpack.c.b16 %v361, %v340
    %v404 = vpack.c.b16 %v362, %v341
    %v405 = vpack.c.b16 %v363, %v342
    %v406 = vpack.c.b16 %v364, %v343
    %449 = vmatprep.subr.bf16.mxu0 0
    %450 = vmatpush1.bf16.xpose.msra.mxu0 0
    %451 = vmatprep.subr.bf16.mxu0 0
    %452 = vmatpush1.bf16.xpose.msra.mxu0 0
    %453 = vmatprep.subr.bf16.mxu0 0
    %454 = vmatpush1.bf16.xpose.msra.mxu0 0
    %455 = vmatprep.subr.bf16.mxu0 0
    %456 = vmatpush1.bf16.xpose.msra.mxu0 0
    %457 = vmatprep.subr.bf16.mxu0 0
    %458 = vmatpush1.bf16.xpose.msra.mxu0 0
    %459 = vmatprep.subr.bf16.mxu0 0
    %460 = vmatpush1.bf16.xpose.msra.mxu0 0
    %461 = vmatprep.subr.bf16.mxu0 %v387
    %462 = vmatpush1.bf16.xpose.msra.mxu0 %v386
    %463 = vmatprep.subr.bf16.mxu0 %v366
    %464 = vmatpush1.bf16.xpose.msra.mxu0 %v365
    %465 = vmatprep.subr.bf16.mxu0 0
    %466 = vmatpush2.bf16.xpose.msra.mxu0 0
    %467 = vmatprep.subr.bf16.mxu0 0
    %468 = vmatpush2.bf16.xpose.msra.mxu0 0
    %469 = vmatprep.subr.bf16.mxu0 0
    %470 = vmatpush2.bf16.xpose.msra.mxu0 0
    %471 = vmatprep.subr.bf16.mxu0 0
    %472 = vmatpush2.bf16.xpose.msra.mxu0 0
    %473 = vmatprep.subr.bf16.mxu0 0
    %474 = vmatpush2.bf16.xpose.msra.mxu0 0
    %475 = vmatprep.subr.bf16.mxu0 0
    %476 = vmatpush2.bf16.xpose.msra.mxu0 0
    %477 = vmatprep.subr.bf16.mxu0 0
    %478 = vmatpush2.bf16.xpose.msra.mxu0 0
    %479 = vmatprep.subr.bf16.mxu0 0
    %480 = vmatpush2.bf16.xpose.msra.mxu0 0
    %481 = vmatprep.mubr.bf16.mxu0 %v173
    %482 = vmatmul.mubr.bf16.gmra.mxu0 %v172
    %v483 = vpop.f32.mrf.mxu0
    %v484 = vadd.f32 0.0, %v483
    %v485 = vpop.f32.mrf.mxu0
    %v486 = vpop.f32.mrf.mxu0
    %v487 = vadd.f32 0.0, %v486
    %v488 = vpop.f32.mrf.mxu0
    %489 = vdwg.mxu0
    %490 = vmatprep.subr.bf16.mxu0 0
    %491 = vmatpush1.bf16.xpose.msra.mxu0 0
    %492 = vmatprep.subr.bf16.mxu0 0
    %493 = vmatpush1.bf16.xpose.msra.mxu0 0
    %494 = vmatprep.subr.bf16.mxu0 0
    %495 = vmatpush1.bf16.xpose.msra.mxu0 0
    %496 = vmatprep.subr.bf16.mxu0 0
    %497 = vmatpush1.bf16.xpose.msra.mxu0 0
    %498 = vmatprep.subr.bf16.mxu0 0
    %499 = vmatpush1.bf16.xpose.msra.mxu0 0
    %500 = vmatprep.subr.bf16.mxu0 0
    %501 = vmatpush1.bf16.xpose.msra.mxu0 0
    %502 = vmatprep.subr.bf16.mxu0 %v389
    %503 = vmatpush1.bf16.xpose.msra.mxu0 %v388
    %504 = vmatprep.subr.bf16.mxu0 %v368
    %505 = vmatpush1.bf16.xpose.msra.mxu0 %v367
    %506 = vmatprep.subr.bf16.mxu0 0
    %507 = vmatpush2.bf16.xpose.msra.mxu0 0
    %508 = vmatprep.subr.bf16.mxu0 0
    %509 = vmatpush2.bf16.xpose.msra.mxu0 0
    %510 = vmatprep.subr.bf16.mxu0 0
    %511 = vmatpush2.bf16.xpose.msra.mxu0 0
    %512 = vmatprep.subr.bf16.mxu0 0
    %513 = vmatpush2.bf16.xpose.msra.mxu0 0
    %514 = vmatprep.subr.bf16.mxu0 0
    %515 = vmatpush2.bf16.xpose.msra.mxu0 0
    %516 = vmatprep.subr.bf16.mxu0 0
    %517 = vmatpush2.bf16.xpose.msra.mxu0 0
    %518 = vmatprep.subr.bf16.mxu0 0
    %519 = vmatpush2.bf16.xpose.msra.mxu0 0
    %520 = vmatprep.subr.bf16.mxu0 0
    %521 = vmatpush2.bf16.xpose.msra.mxu0 0
    %522 = vmatprep.mubr.bf16.mxu0 %v175
    %523 = vmatmul.mubr.bf16.gmra.mxu0 %v174
    %v524 = vpop.f32.mrf.mxu0
    %v525 = vadd.f32 %v484, %v524
    %v526 = vpop.f32.mrf.mxu0
    %v527 = vpop.f32.mrf.mxu0
    %v528 = vadd.f32 %v487, %v527
    %v529 = vpop.f32.mrf.mxu0
    %530 = vdwg.mxu0
    %531 = vmatprep.subr.bf16.mxu0 0
    %532 = vmatpush1.bf16.xpose.msra.mxu0 0
    %533 = vmatprep.subr.bf16.mxu0 0
    %534 = vmatpush1.bf16.xpose.msra.mxu0 0
    %535 = vmatprep.subr.bf16.mxu0 0
    %536 = vmatpush1.bf16.xpose.msra.mxu0 0
    %537 = vmatprep.subr.bf16.mxu0 0
    %538 = vmatpush1.bf16.xpose.msra.mxu0 0
    %539 = vmatprep.subr.bf16.mxu0 0
    %540 = vmatpush1.bf16.xpose.msra.mxu0 0
    %541 = vmatprep.subr.bf16.mxu0 0
    %542 = vmatpush1.bf16.xpose.msra.mxu0 0
    %543 = vmatprep.subr.bf16.mxu0 %v391
    %544 = vmatpush1.bf16.xpose.msra.mxu0 %v390
    %545 = vmatprep.subr.bf16.mxu0 %v370
    %546 = vmatpush1.bf16.xpose.msra.mxu0 %v369
    %547 = vmatprep.subr.bf16.mxu0 0
    %548 = vmatpush2.bf16.xpose.msra.mxu0 0
    %549 = vmatprep.subr.bf16.mxu0 0
    %550 = vmatpush2.bf16.xpose.msra.mxu0 0
    %551 = vmatprep.subr.bf16.mxu0 0
    %552 = vmatpush2.bf16.xpose.msra.mxu0 0
    %553 = vmatprep.subr.bf16.mxu0 0
    %554 = vmatpush2.bf16.xpose.msra.mxu0 0
    %555 = vmatprep.subr.bf16.mxu0 0
    %556 = vmatpush2.bf16.xpose.msra.mxu0 0
    %557 = vmatprep.subr.bf16.mxu0 0
    %558 = vmatpush2.bf16.xpose.msra.mxu0 0
    %559 = vmatprep.subr.bf16.mxu0 0
    %560 = vmatpush2.bf16.xpose.msra.mxu0 0
    %561 = vmatprep.subr.bf16.mxu0 0
    %562 = vmatpush2.bf16.xpose.msra.mxu0 0
    %563 = vmatprep.mubr.bf16.mxu0 %v177
    %564 = vmatmul.mubr.bf16.gmra.mxu0 %v176
    %v565 = vpop.f32.mrf.mxu0
    %v566 = vadd.f32 %v525, %v565
    %v567 = vpop.f32.mrf.mxu0
    %v568 = vpop.f32.mrf.mxu0
    %v569 = vadd.f32 %v528, %v568
    %v570 = vpop.f32.mrf.mxu0
    %571 = vdwg.mxu0
    %572 = vmatprep.subr.bf16.mxu0 0
    %573 = vmatpush1.bf16.xpose.msra.mxu0 0
    %574 = vmatprep.subr.bf16.mxu0 0
    %575 = vmatpush1.bf16.xpose.msra.mxu0 0
    %576 = vmatprep.subr.bf16.mxu0 0
    %577 = vmatpush1.bf16.xpose.msra.mxu0 0
    %578 = vmatprep.subr.bf16.mxu0 0
    %579 = vmatpush1.bf16.xpose.msra.mxu0 0
    %580 = vmatprep.subr.bf16.mxu0 0
    %581 = vmatpush1.bf16.xpose.msra.mxu0 0
    %582 = vmatprep.subr.bf16.mxu0 0
    %583 = vmatpush1.bf16.xpose.msra.mxu0 0
    %584 = vmatprep.subr.bf16.mxu0 %v393
    %585 = vmatpush1.bf16.xpose.msra.mxu0 %v392
    %586 = vmatprep.subr.bf16.mxu0 %v372
    %587 = vmatpush1.bf16.xpose.msra.mxu0 %v371
    %588 = vmatprep.subr.bf16.mxu0 0
    %589 = vmatpush2.bf16.xpose.msra.mxu0 0
    %590 = vmatprep.subr.bf16.mxu0 0
    %591 = vmatpush2.bf16.xpose.msra.mxu0 0
    %592 = vmatprep.subr.bf16.mxu0 0
    %593 = vmatpush2.bf16.xpose.msra.mxu0 0
    %594 = vmatprep.subr.bf16.mxu0 0
    %595 = vmatpush2.bf16.xpose.msra.mxu0 0
    %596 = vmatprep.subr.bf16.mxu0 0
    %597 = vmatpush2.bf16.xpose.msra.mxu0 0
    %598 = vmatprep.subr.bf16.mxu0 0
    %599 = vmatpush2.bf16.xpose.msra.mxu0 0
    %600 = vmatprep.subr.bf16.mxu0 0
    %601 = vmatpush2.bf16.xpose.msra.mxu0 0
    %602 = vmatprep.subr.bf16.mxu0 0
    %603 = vmatpush2.bf16.xpose.msra.mxu0 0
    %604 = vmatprep.mubr.bf16.mxu0 %v179
    %605 = vmatmul.mubr.bf16.gmra.mxu0 %v178
    %v606 = vpop.f32.mrf.mxu0
    %v607 = vadd.f32 %v566, %v606
    %v608 = vpop.f32.mrf.mxu0
    %v609 = vpop.f32.mrf.mxu0
    %v610 = vadd.f32 %v569, %v609
    %v611 = vpop.f32.mrf.mxu0
    %612 = vdwg.mxu0
    %613 = vmatprep.subr.bf16.mxu0 0
    %614 = vmatpush1.bf16.xpose.msra.mxu0 0
    %615 = vmatprep.subr.bf16.mxu0 0
    %616 = vmatpush1.bf16.xpose.msra.mxu0 0
    %617 = vmatprep.subr.bf16.mxu0 0
    %618 = vmatpush1.bf16.xpose.msra.mxu0 0
    %619 = vmatprep.subr.bf16.mxu0 0
    %620 = vmatpush1.bf16.xpose.msra.mxu0 0
    %621 = vmatprep.subr.bf16.mxu0 0
    %622 = vmatpush1.bf16.xpose.msra.mxu0 0
    %623 = vmatprep.subr.bf16.mxu0 0
    %624 = vmatpush1.bf16.xpose.msra.mxu0 0
    %625 = vmatprep.subr.bf16.mxu0 %v395
    %626 = vmatpush1.bf16.xpose.msra.mxu0 %v394
    %627 = vmatprep.subr.bf16.mxu0 %v374
    %628 = vmatpush1.bf16.xpose.msra.mxu0 %v373
    %629 = vmatprep.subr.bf16.mxu0 0
    %630 = vmatpush2.bf16.xpose.msra.mxu0 0
    %631 = vmatprep.subr.bf16.mxu0 0
    %632 = vmatpush2.bf16.xpose.msra.mxu0 0
    %633 = vmatprep.subr.bf16.mxu0 0
    %634 = vmatpush2.bf16.xpose.msra.mxu0 0
    %635 = vmatprep.subr.bf16.mxu0 0
    %636 = vmatpush2.bf16.xpose.msra.mxu0 0
    %637 = vmatprep.subr.bf16.mxu0 0
    %638 = vmatpush2.bf16.xpose.msra.mxu0 0
    %639 = vmatprep.subr.bf16.mxu0 0
    %640 = vmatpush2.bf16.xpose.msra.mxu0 0
    %641 = vmatprep.subr.bf16.mxu0 0
    %642 = vmatpush2.bf16.xpose.msra.mxu0 0
    %643 = vmatprep.subr.bf16.mxu0 0
    %644 = vmatpush2.bf16.xpose.msra.mxu0 0
    %645 = vmatprep.mubr.bf16.mxu0 %v181
    %646 = vmatmul.mubr.bf16.gmra.mxu0 %v180
    %v647 = vpop.f32.mrf.mxu0
    %v648 = vadd.f32 %v607, %v647
    %v649 = vpop.f32.mrf.mxu0
    %v650 = vpop.f32.mrf.mxu0
    %v651 = vadd.f32 %v610, %v650
    %v652 = vpop.f32.mrf.mxu0
    %653 = vdwg.mxu0
    %654 = vmatprep.subr.bf16.mxu0 0
    %655 = vmatpush1.bf16.xpose.msra.mxu0 0
    %656 = vmatprep.subr.bf16.mxu0 0
    %657 = vmatpush1.bf16.xpose.msra.mxu0 0
    %658 = vmatprep.subr.bf16.mxu0 0
    %659 = vmatpush1.bf16.xpose.msra.mxu0 0
    %660 = vmatprep.subr.bf16.mxu0 0
    %661 = vmatpush1.bf16.xpose.msra.mxu0 0
    %662 = vmatprep.subr.bf16.mxu0 0
    %663 = vmatpush1.bf16.xpose.msra.mxu0 0
    %664 = vmatprep.subr.bf16.mxu0 0
    %665 = vmatpush1.bf16.xpose.msra.mxu0 0
    %666 = vmatprep.subr.bf16.mxu0 %v397
    %667 = vmatpush1.bf16.xpose.msra.mxu0 %v396
    %668 = vmatprep.subr.bf16.mxu0 %v376
    %669 = vmatpush1.bf16.xpose.msra.mxu0 %v375
    %670 = vmatprep.subr.bf16.mxu0 0
    %671 = vmatpush2.bf16.xpose.msra.mxu0 0
    %672 = vmatprep.subr.bf16.mxu0 0
    %673 = vmatpush2.bf16.xpose.msra.mxu0 0
    %674 = vmatprep.subr.bf16.mxu0 0
    %675 = vmatpush2.bf16.xpose.msra.mxu0 0
    %676 = vmatprep.subr.bf16.mxu0 0
    %677 = vmatpush2.bf16.xpose.msra.mxu0 0
    %678 = vmatprep.subr.bf16.mxu0 0
    %679 = vmatpush2.bf16.xpose.msra.mxu0 0
    %680 = vmatprep.subr.bf16.mxu0 0
    %681 = vmatpush2.bf16.xpose.msra.mxu0 0
    %682 = vmatprep.subr.bf16.mxu0 0
    %683 = vmatpush2.bf16.xpose.msra.mxu0 0
    %684 = vmatprep.subr.bf16.mxu0 0
    %685 = vmatpush2.bf16.xpose.msra.mxu0 0
    %686 = vmatprep.mubr.bf16.mxu0 %v183
    %687 = vmatmul.mubr.bf16.gmra.mxu0 %v182
    %v688 = vpop.f32.mrf.mxu0
    %v689 = vadd.f32 %v648, %v688
    %v690 = vpop.f32.mrf.mxu0
    %v691 = vpop.f32.mrf.mxu0
    %v692 = vadd.f32 %v651, %v691
    %v693 = vpop.f32.mrf.mxu0
    %694 = vdwg.mxu0
    %695 = vmatprep.subr.bf16.mxu0 0
    %696 = vmatpush1.bf16.xpose.msra.mxu0 0
    %697 = vmatprep.subr.bf16.mxu0 0
    %698 = vmatpush1.bf16.xpose.msra.mxu0 0
    %699 = vmatprep.subr.bf16.mxu0 0
    %700 = vmatpush1.bf16.xpose.msra.mxu0 0
    %701 = vmatprep.subr.bf16.mxu0 0
    %702 = vmatpush1.bf16.xpose.msra.mxu0 0
    %703 = vmatprep.subr.bf16.mxu0 0
    %704 = vmatpush1.bf16.xpose.msra.mxu0 0
    %705 = vmatprep.subr.bf16.mxu0 0
    %706 = vmatpush1.bf16.xpose.msra.mxu0 0
    %707 = vmatprep.subr.bf16.mxu0 %v399
    %708 = vmatpush1.bf16.xpose.msra.mxu0 %v398
    %709 = vmatprep.subr.bf16.mxu0 %v378
    %710 = vmatpush1.bf16.xpose.msra.mxu0 %v377
    %711 = vmatprep.subr.bf16.mxu0 0
    %712 = vmatpush2.bf16.xpose.msra.mxu0 0
    %713 = vmatprep.subr.bf16.mxu0 0
    %714 = vmatpush2.bf16.xpose.msra.mxu0 0
    %715 = vmatprep.subr.bf16.mxu0 0
    %716 = vmatpush2.bf16.xpose.msra.mxu0 0
    %717 = vmatprep.subr.bf16.mxu0 0
    %718 = vmatpush2.bf16.xpose.msra.mxu0 0
    %719 = vmatprep.subr.bf16.mxu0 0
    %720 = vmatpush2.bf16.xpose.msra.mxu0 0
    %721 = vmatprep.subr.bf16.mxu0 0
    %722 = vmatpush2.bf16.xpose.msra.mxu0 0
    %723 = vmatprep.subr.bf16.mxu0 0
    %724 = vmatpush2.bf16.xpose.msra.mxu0 0
    %725 = vmatprep.subr.bf16.mxu0 0
    %726 = vmatpush2.bf16.xpose.msra.mxu0 0
    %727 = vmatprep.mubr.bf16.mxu0 %v185
    %728 = vmatmul.mubr.bf16.gmra.mxu0 %v184
    %v729 = vpop.f32.mrf.mxu0
    %v730 = vadd.f32 %v689, %v729
    %v731 = vpop.f32.mrf.mxu0
    %v732 = vpop.f32.mrf.mxu0
    %v733 = vadd.f32 %v692, %v732
    %v734 = vpop.f32.mrf.mxu0
    %735 = vdwg.mxu0
    %736 = vmatprep.subr.bf16.mxu0 0
    %737 = vmatpush1.bf16.xpose.msra.mxu0 0
    %738 = vmatprep.subr.bf16.mxu0 0
    %739 = vmatpush1.bf16.xpose.msra.mxu0 0
    %740 = vmatprep.subr.bf16.mxu0 0
    %741 = vmatpush1.bf16.xpose.msra.mxu0 0
    %742 = vmatprep.subr.bf16.mxu0 0
    %743 = vmatpush1.bf16.xpose.msra.mxu0 0
    %744 = vmatprep.subr.bf16.mxu0 0
    %745 = vmatpush1.bf16.xpose.msra.mxu0 0
    %746 = vmatprep.subr.bf16.mxu0 0
    %747 = vmatpush1.bf16.xpose.msra.mxu0 0
    %748 = vmatprep.subr.bf16.mxu0 %v401
    %749 = vmatpush1.bf16.xpose.msra.mxu0 %v400
    %750 = vmatprep.subr.bf16.mxu0 %v380
    %751 = vmatpush1.bf16.xpose.msra.mxu0 %v379
    %752 = vmatprep.subr.bf16.mxu0 0
    %753 = vmatpush2.bf16.xpose.msra.mxu0 0
    %754 = vmatprep.subr.bf16.mxu0 0
    %755 = vmatpush2.bf16.xpose.msra.mxu0 0
    %756 = vmatprep.subr.bf16.mxu0 0
    %757 = vmatpush2.bf16.xpose.msra.mxu0 0
    %758 = vmatprep.subr.bf16.mxu0 0
    %759 = vmatpush2.bf16.xpose.msra.mxu0 0
    %760 = vmatprep.subr.bf16.mxu0 0
    %761 = vmatpush2.bf16.xpose.msra.mxu0 0
    %762 = vmatprep.subr.bf16.mxu0 0
    %763 = vmatpush2.bf16.xpose.msra.mxu0 0
    %764 = vmatprep.subr.bf16.mxu0 0
    %765 = vmatpush2.bf16.xpose.msra.mxu0 0
    %766 = vmatprep.subr.bf16.mxu0 0
    %767 = vmatpush2.bf16.xpose.msra.mxu0 0
    %768 = vmatprep.mubr.bf16.mxu0 %v187
    %769 = vmatmul.mubr.bf16.gmra.mxu0 %v186
    %v770 = vpop.f32.mrf.mxu0
    %v771 = vadd.f32 %v730, %v770
    %v772 = vpop.f32.mrf.mxu0
    %v773 = vpop.f32.mrf.mxu0
    %v774 = vadd.f32 %v733, %v773
    %v775 = vpop.f32.mrf.mxu0
    %776 = vdwg.mxu0
    %777 = vmatprep.subr.bf16.mxu0 0
    %778 = vmatpush1.bf16.xpose.msra.mxu0 0
    %779 = vmatprep.subr.bf16.mxu0 0
    %780 = vmatpush1.bf16.xpose.msra.mxu0 0
    %781 = vmatprep.subr.bf16.mxu0 0
    %782 = vmatpush1.bf16.xpose.msra.mxu0 0
    %783 = vmatprep.subr.bf16.mxu0 0
    %784 = vmatpush1.bf16.xpose.msra.mxu0 0
    %785 = vmatprep.subr.bf16.mxu0 0
    %786 = vmatpush1.bf16.xpose.msra.mxu0 0
    %787 = vmatprep.subr.bf16.mxu0 0
    %788 = vmatpush1.bf16.xpose.msra.mxu0 0
    %789 = vmatprep.subr.bf16.mxu0 %v403
    %790 = vmatpush1.bf16.xpose.msra.mxu0 %v402
    %791 = vmatprep.subr.bf16.mxu0 %v382
    %792 = vmatpush1.bf16.xpose.msra.mxu0 %v381
    %793 = vmatprep.subr.bf16.mxu0 0
    %794 = vmatpush2.bf16.xpose.msra.mxu0 0
    %795 = vmatprep.subr.bf16.mxu0 0
    %796 = vmatpush2.bf16.xpose.msra.mxu0 0
    %797 = vmatprep.subr.bf16.mxu0 0
    %798 = vmatpush2.bf16.xpose.msra.mxu0 0
    %799 = vmatprep.subr.bf16.mxu0 0
    %800 = vmatpush2.bf16.xpose.msra.mxu0 0
    %801 = vmatprep.subr.bf16.mxu0 0
    %802 = vmatpush2.bf16.xpose.msra.mxu0 0
    %803 = vmatprep.subr.bf16.mxu0 0
    %804 = vmatpush2.bf16.xpose.msra.mxu0 0
    %805 = vmatprep.subr.bf16.mxu0 0
    %806 = vmatpush2.bf16.xpose.msra.mxu0 0
    %807 = vmatprep.subr.bf16.mxu0 0
    %808 = vmatpush2.bf16.xpose.msra.mxu0 0
    %809 = vmatprep.mubr.bf16.mxu0 %v189
    %810 = vmatmul.mubr.bf16.gmra.mxu0 %v188
    %v811 = vpop.f32.mrf.mxu0
    %v812 = vadd.f32 %v771, %v811
    %v813 = vpop.f32.mrf.mxu0
    %v814 = vpop.f32.mrf.mxu0
    %v815 = vadd.f32 %v774, %v814
    %v816 = vpop.f32.mrf.mxu0
    %817 = vdwg.mxu0
    %818 = vmatprep.subr.bf16.mxu0 0
    %819 = vmatpush1.bf16.xpose.msra.mxu0 0
    %820 = vmatprep.subr.bf16.mxu0 0
    %821 = vmatpush1.bf16.xpose.msra.mxu0 0
    %822 = vmatprep.subr.bf16.mxu0 0
    %823 = vmatpush1.bf16.xpose.msra.mxu0 0
    %824 = vmatprep.subr.bf16.mxu0 0
    %825 = vmatpush1.bf16.xpose.msra.mxu0 0
    %826 = vmatprep.subr.bf16.mxu0 0
    %827 = vmatpush1.bf16.xpose.msra.mxu0 0
    %828 = vmatprep.subr.bf16.mxu0 0
    %829 = vmatpush1.bf16.xpose.msra.mxu0 0
    %830 = vmatprep.subr.bf16.mxu0 %v405
    %831 = vmatpush1.bf16.xpose.msra.mxu0 %v404
    %832 = vmatprep.subr.bf16.mxu0 %v384
    %833 = vmatpush1.bf16.xpose.msra.mxu0 %v383
    %834 = vmatprep.subr.bf16.mxu0 0
    %835 = vmatpush2.bf16.xpose.msra.mxu0 0
    %836 = vmatprep.subr.bf16.mxu0 0
    %837 = vmatpush2.bf16.xpose.msra.mxu0 0
    %838 = vmatprep.subr.bf16.mxu0 0
    %839 = vmatpush2.bf16.xpose.msra.mxu0 0
    %840 = vmatprep.subr.bf16.mxu0 0
    %841 = vmatpush2.bf16.xpose.msra.mxu0 0
    %842 = vmatprep.subr.bf16.mxu0 0
    %843 = vmatpush2.bf16.xpose.msra.mxu0 0
    %844 = vmatprep.subr.bf16.mxu0 0
    %845 = vmatpush2.bf16.xpose.msra.mxu0 0
    %846 = vmatprep.subr.bf16.mxu0 0
    %847 = vmatpush2.bf16.xpose.msra.mxu0 0
    %848 = vmatprep.subr.bf16.mxu0 0
    %849 = vmatpush2.bf16.xpose.msra.mxu0 0
    %850 = vmatprep.mubr.bf16.mxu0 %v191
    %851 = vmatmul.mubr.bf16.gmra.mxu0 %v190
    %v852 = vpop.f32.mrf.mxu0
    %v853 = vadd.f32 %v812, %v852
    %v854 = vpop.f32.mrf.mxu0
    %v855 = vpop.f32.mrf.mxu0
    %v856 = vadd.f32 %v815, %v855
    %v857 = vpop.f32.mrf.mxu0
    %858 = vdwg.mxu0
    %859 = vmatprep.subr.bf16.mxu0 0
    %860 = vmatpush1.bf16.xpose.msra.mxu0 0
    %861 = vmatprep.subr.bf16.mxu0 0
    %862 = vmatpush1.bf16.xpose.msra.mxu0 0
    %863 = vmatprep.subr.bf16.mxu0 0
    %864 = vmatpush1.bf16.xpose.msra.mxu0 0
    %865 = vmatprep.subr.bf16.mxu0 0
    %866 = vmatpush1.bf16.xpose.msra.mxu0 0
    %867 = vmatprep.subr.bf16.mxu0 0
    %868 = vmatpush1.bf16.xpose.msra.mxu0 0
    %869 = vmatprep.subr.bf16.mxu0 0
    %870 = vmatpush1.bf16.xpose.msra.mxu0 0
    %871 = vmatprep.subr.bf16.mxu0 0
    %872 = vmatpush1.bf16.xpose.msra.mxu0 %v406
    %873 = vmatprep.subr.bf16.mxu0 0
    %874 = vmatpush1.bf16.xpose.msra.mxu0 %v385
    %875 = vmatprep.subr.bf16.mxu0 0
    %876 = vmatpush2.bf16.xpose.msra.mxu0 0
    %877 = vmatprep.subr.bf16.mxu0 0
    %878 = vmatpush2.bf16.xpose.msra.mxu0 0
    %879 = vmatprep.subr.bf16.mxu0 0
    %880 = vmatpush2.bf16.xpose.msra.mxu0 0
    %881 = vmatprep.subr.bf16.mxu0 0
    %882 = vmatpush2.bf16.xpose.msra.mxu0 0
    %883 = vmatprep.subr.bf16.mxu0 0
    %884 = vmatpush2.bf16.xpose.msra.mxu0 0
    %885 = vmatprep.subr.bf16.mxu0 0
    %886 = vmatpush2.bf16.xpose.msra.mxu0 0
    %887 = vmatprep.subr.bf16.mxu0 0
    %888 = vmatpush2.bf16.xpose.msra.mxu0 0
    %889 = vmatprep.subr.bf16.mxu0 0
    %890 = vmatpush2.bf16.xpose.msra.mxu0 0
    %891 = vmatprep.mubr.bf16.mxu0 0
    %892 = vmatmul.mubr.bf16.gmra.mxu0 %v192
    %v893 = vpop.f32.mrf.mxu0
    %v894 = vadd.f32 %v853, %v893
    %v895 = vpop.f32.mrf.mxu0
    %v896 = vpop.f32.mrf.mxu0
    %v897 = vadd.f32 %v856, %v896
    %v898 = vpop.f32.mrf.mxu0
    %899 = vdwg.mxu0
    %v900 = vld [vmem:[#allocation5] sm:$0xff]
    %v901 = vld [vmem:[#allocation5 + $0x8] sm:$0xff]
    %v902 = vld [vmem:[#allocation5 + $0x10] sm:$0xff]
    %v903 = vld [vmem:[#allocation5 + $0x18] sm:$0xff]
    %v904 = vld [vmem:[#allocation5 + $0x20] sm:$0xff]
    %v905 = vld [vmem:[#allocation5 + $0x28] sm:$0xff]
    %v906 = vld [vmem:[#allocation5 + $0x30] sm:$0xff]
    %v907 = vld [vmem:[#allocation5 + $0x38] sm:$0xff]
    %v908 = vld [vmem:[#allocation5 + $0x40] sm:$0xff]
    %v909 = vld [vmem:[#allocation5 + $0x48] sm:$0xff]
    %v910 = vld [vmem:[#allocation5 + $0x50] sm:$0xff]
    %v911 = vld [vmem:[#allocation5 + $0x58] sm:$0xff]
    %v912 = vld [vmem:[#allocation5 + $0x60] sm:$0xff]
    %v913 = vld [vmem:[#allocation5 + $0x68] sm:$0xff]
    %v914 = vld [vmem:[#allocation5 + $0x70] sm:$0xff]
    %v915 = vld [vmem:[#allocation5 + $0x78] sm:$0xff]
    %v916 = vld [vmem:[#allocation5 + $0x80] sm:$0xff]
    %v917 = vld [vmem:[#allocation5 + $0x88] sm:$0xff]
    %v918 = vld [vmem:[#allocation5 + $0x90] sm:$0xff]
    %v919 = vld [vmem:[#allocation5 + $0x98] sm:$0xff]
    %v920 = vld [vmem:[#allocation5 + $0xa0] sm:$0xff]
    %v921 = vld [vmem:[#allocation5 + $0xa8] sm:$0xff]
    %v922 = vld [vmem:[#allocation5 + $0xb0] sm:$0xff]
    %v923 = vld [vmem:[#allocation5 + $0xb8] sm:$0xff]
    %v924 = vld [vmem:[#allocation5 + $0xc0] sm:$0xff]
    %v925 = vld [vmem:[#allocation5 + $0xc8] sm:$0xff]
    %v926 = vld [vmem:[#allocation5 + $0xd0] sm:$0xff]
    %v927 = vld [vmem:[#allocation5 + $0xd8] sm:$0xff]
    %v928 = vld [vmem:[#allocation5 + $0xe0] sm:$0xff]
    %v929 = vld [vmem:[#allocation5 + $0xe8] sm:$0xff]
    %v930 = vld [vmem:[#allocation5 + $0xf0] sm:$0xff]
    %v931 = vld [vmem:[#allocation5 + $0xf8] sm:$0xff]
    %v932 = vld [vmem:[#allocation5 + $0x100] sm:$0xff]
    %v933 = vld [vmem:[#allocation5 + $0x108] sm:$0xff]
    %v934 = vld [vmem:[#allocation5 + $0x110] sm:$0xff]
    %v935 = vld [vmem:[#allocation5 + $0x118] sm:$0xff]
    %v936 = vpack.c.bf16 %v900, %v900
    %v937 = vpack.c.bf16 %v901, %v901
    %v938 = vpack.c.bf16 %v902, %v902
    %v939 = vpack.c.bf16 %v903, %v903
    %v940 = vpack.c.bf16 %v904, %v904
    %v941 = vpack.c.bf16 %v905, %v905
    %v942 = vpack.c.bf16 %v906, %v906
    %v943 = vpack.c.bf16 %v907, %v907
    %v944 = vpack.c.bf16 %v908, %v908
    %v945 = vpack.c.bf16 %v909, %v909
    %v946 = vpack.c.bf16 %v910, %v910
    %v947 = vpack.c.bf16 %v911, %v911
    %v948 = vpack.c.bf16 %v912, %v912
    %v949 = vpack.c.bf16 %v913, %v913
    %v950 = vpack.c.bf16 %v914, %v914
    %v951 = vpack.c.bf16 %v915, %v915
    %v952 = vpack.c.bf16 %v916, %v916
    %v953 = vpack.c.bf16 %v917, %v917
    %v954 = vpack.c.bf16 %v918, %v918
    %v955 = vpack.c.bf16 %v919, %v919
    %v956 = vpack.c.bf16 %v920, %v920
    %v957 = vpack.c.bf16 %v921, %v921
    %v958 = vpack.c.bf16 %v922, %v922
    %v959 = vpack.c.bf16 %v923, %v923
    %v960 = vpack.c.bf16 %v924, %v924
    %v961 = vpack.c.bf16 %v925, %v925
    %v962 = vpack.c.bf16 %v926, %v926
    %v963 = vpack.c.bf16 %v927, %v927
    %v964 = vpack.c.bf16 %v928, %v928
    %v965 = vpack.c.bf16 %v929, %v929
    %v966 = vpack.c.bf16 %v930, %v930
    %v967 = vpack.c.bf16 %v931, %v931
    %v968 = vpack.c.bf16 %v932, %v932
    %v969 = vpack.c.bf16 %v933, %v933
    %v970 = vpack.c.bf16 %v934, %v934
    %v971 = vpack.c.bf16 %v935, %v935
    %v972 = vld [vmem:[#allocation8] sm:$0xff]
    %v973 = vld [vmem:[#allocation8 + $0x8] sm:$0xff]
    %v974 = vld [vmem:[#allocation8 + $0x10] sm:$0xff]
    %v975 = vld [vmem:[#allocation8 + $0x18] sm:$0xff]
    %v976 = vld [vmem:[#allocation8 + $0x20] sm:$0xff]
    %v977 = vld [vmem:[#allocation8 + $0x28] sm:$0xff]
    %v978 = vld [vmem:[#allocation8 + $0x30] sm:$0xff]
    %v979 = vld [vmem:[#allocation8 + $0x38] sm:$0xff]
    %v980 = vld [vmem:[#allocation8 + $0x40] sm:$0xff]
    %v981 = vld [vmem:[#allocation8 + $0x48] sm:$0xff]
    %v982 = vld [vmem:[#allocation8 + $0x50] sm:$0xff]
    %v983 = vld [vmem:[#allocation8 + $0x58] sm:$0xff]
    %v984 = vld [vmem:[#allocation8 + $0x60] sm:$0xff]
    %v985 = vld [vmem:[#allocation8 + $0x68] sm:$0xff]
    %v986 = vld [vmem:[#allocation8 + $0x70] sm:$0xff]
    %v987 = vld [vmem:[#allocation8 + $0x78] sm:$0xff]
    %v988 = vld [vmem:[#allocation8 + $0x80] sm:$0xff]
    %v989 = vld [vmem:[#allocation8 + $0x88] sm:$0xff]
    %v990 = vld [vmem:[#allocation8 + $0x90] sm:$0xff]
    %v991 = vld [vmem:[#allocation8 + $0x98] sm:$0xff]
    %v992 = vld [vmem:[#allocation8 + $0xa0] sm:$0xff]
    %v993 = vld [vmem:[#allocation8 + $0xa8] sm:$0xff]
    %v994 = vld [vmem:[#allocation8 + $0xb0] sm:$0xff]
    %v995 = vld [vmem:[#allocation8 + $0xb8] sm:$0xff]
    %v996 = vld [vmem:[#allocation8 + $0xc0] sm:$0xff]
    %v997 = vld [vmem:[#allocation8 + $0xc8] sm:$0xff]
    %v998 = vld [vmem:[#allocation8 + $0xd0] sm:$0xff]
    %v999 = vld [vmem:[#allocation8 + $0xd8] sm:$0xff]
    %v1000 = vld [vmem:[#allocation8 + $0xe0] sm:$0xff]
    %v1001 = vld [vmem:[#allocation8 + $0xe8] sm:$0xff]
    %v1002 = vld [vmem:[#allocation8 + $0xf0] sm:$0xff]
    %v1003 = vld [vmem:[#allocation8 + $0xf8] sm:$0xff]
    %v1004 = vld [vmem:[#allocation8 + $0x100] sm:$0xff]
    %v1005 = vld [vmem:[#allocation8 + $0x108] sm:$0xff]
    %v1006 = vld [vmem:[#allocation8 + $0x110] sm:$0xff]
    %v1007 = vld [vmem:[#allocation8 + $0x118] sm:$0xff]
    %v1008 = vld [vmem:[#allocation8 + $0x120] sm:$0xff]
    %v1009 = vld [vmem:[#allocation8 + $0x128] sm:$0xff]
    %v1010 = vld [vmem:[#allocation8 + $0x130] sm:$0xff]
    %v1011 = vld [vmem:[#allocation8 + $0x138] sm:$0xff]
    %v1012 = vld [vmem:[#allocation8 + $0x140] sm:$0xff]
    %v1013 = vld [vmem:[#allocation8 + $0x148] sm:$0xff]
    %v1014 = vld [vmem:[#allocation8 + $0x150] sm:$0xff]
    %v1015 = vld [vmem:[#allocation8 + $0x158] sm:$0xff]
    %v1016 = vld [vmem:[#allocation8 + $0x160] sm:$0xff]
    %v1017 = vld [vmem:[#allocation8 + $0x168] sm:$0xff]
    %v1018 = vld [vmem:[#allocation8 + $0x170] sm:$0xff]
    %v1019 = vld [vmem:[#allocation8 + $0x178] sm:$0xff]
    %v1020 = vld [vmem:[#allocation8 + $0x180] sm:$0xff]
    %v1021 = vld [vmem:[#allocation8 + $0x188] sm:$0xff]
    %v1022 = vld [vmem:[#allocation8 + $0x190] sm:$0xff]
    %v1023 = vld [vmem:[#allocation8 + $0x198] sm:$0xff]
    %v1024 = vld [vmem:[#allocation8 + $0x1a0] sm:$0xff]
    %v1025 = vld [vmem:[#allocation8 + $0x1a8] sm:$0xff]
    %v1026 = vld [vmem:[#allocation8 + $0x1b0] sm:$0xff]
    %v1027 = vld [vmem:[#allocation8 + $0x1b8] sm:$0xff]
    %v1028 = vld [vmem:[#allocation8 + $0x1c0] sm:$0xff]
    %v1029 = vld [vmem:[#allocation8 + $0x1c8] sm:$0xff]
    %v1030 = vld [vmem:[#allocation8 + $0x1d0] sm:$0xff]
    %v1031 = vld [vmem:[#allocation8 + $0x1d8] sm:$0xff]
    %v1032 = vld [vmem:[#allocation8 + $0x1e0] sm:$0xff]
    %v1033 = vld [vmem:[#allocation8 + $0x1e8] sm:$0xff]
    %v1034 = vld [vmem:[#allocation8 + $0x1f0] sm:$0xff]
    %v1035 = vld [vmem:[#allocation8 + $0x1f8] sm:$0xff]
    %v1036 = vld [vmem:[#allocation8 + $0x200] sm:$0xff]
    %v1037 = vld [vmem:[#allocation8 + $0x208] sm:$0xff]
    %v1038 = vld [vmem:[#allocation8 + $0x210] sm:$0xff]
    %v1039 = vld [vmem:[#allocation8 + $0x218] sm:$0xff]
    %v1040 = vld [vmem:[#allocation8 + $0x220] sm:$0xff]
    %v1041 = vld [vmem:[#allocation8 + $0x228] sm:$0xff]
    %v1042 = vld [vmem:[#allocation8 + $0x230] sm:$0xff]
    %v1043 = vld [vmem:[#allocation8 + $0x238] sm:$0xff]
    %v1116 = vunpack.c.l.b16 %v972
    %v1117 = vunpack.c.h.b16 %v972
    %v1118 = vunpack.c.l.b16 %v973
    %v1119 = vunpack.c.h.b16 %v973
    %v1120 = vunpack.c.l.b16 %v974
    %v1121 = vunpack.c.h.b16 %v974
    %v1122 = vunpack.c.l.b16 %v975
    %v1123 = vunpack.c.h.b16 %v975
    %v1124 = vunpack.c.l.b16 %v976
    %v1125 = vunpack.c.h.b16 %v976
    %v1126 = vunpack.c.l.b16 %v977
    %v1127 = vunpack.c.h.b16 %v977
    %v1128 = vunpack.c.l.b16 %v978
    %v1129 = vunpack.c.h.b16 %v978
    %v1130 = vunpack.c.l.b16 %v979
    %v1131 = vunpack.c.h.b16 %v979
    %v1132 = vunpack.c.l.b16 %v980
    %v1133 = vunpack.c.h.b16 %v980
    %v1134 = vunpack.c.l.b16 %v981
    %v1135 = vunpack.c.h.b16 %v981
    %v1136 = vunpack.c.l.b16 %v982
    %v1137 = vunpack.c.h.b16 %v982
    %v1138 = vunpack.c.l.b16 %v983
    %v1139 = vunpack.c.h.b16 %v983
    %v1140 = vunpack.c.l.b16 %v984
    %v1141 = vunpack.c.h.b16 %v984
    %v1142 = vunpack.c.l.b16 %v985
    %v1143 = vunpack.c.h.b16 %v985
    %v1144 = vunpack.c.l.b16 %v986
    %v1145 = vunpack.c.h.b16 %v986
    %v1146 = vunpack.c.l.b16 %v987
    %v1147 = vunpack.c.h.b16 %v987
    %v1148 = vunpack.c.l.b16 %v988
    %v1149 = vunpack.c.h.b16 %v988
    %v1150 = vunpack.c.l.b16 %v989
    %v1151 = vunpack.c.h.b16 %v989
    %v1152 = vunpack.c.l.b16 %v990
    %v1153 = vunpack.c.h.b16 %v990
    %v1154 = vunpack.c.l.b16 %v991
    %v1155 = vunpack.c.h.b16 %v991
    %v1156 = vunpack.c.l.b16 %v992
    %v1157 = vunpack.c.h.b16 %v992
    %v1158 = vunpack.c.l.b16 %v993
    %v1159 = vunpack.c.h.b16 %v993
    %v1160 = vunpack.c.l.b16 %v994
    %v1161 = vunpack.c.h.b16 %v994
    %v1162 = vunpack.c.l.b16 %v995
    %v1163 = vunpack.c.h.b16 %v995
    %v1164 = vunpack.c.l.b16 %v996
    %v1165 = vunpack.c.h.b16 %v996
    %v1166 = vunpack.c.l.b16 %v997
    %v1167 = vunpack.c.h.b16 %v997
    %v1168 = vunpack.c.l.b16 %v998
    %v1169 = vunpack.c.h.b16 %v998
    %v1170 = vunpack.c.l.b16 %v999
    %v1171 = vunpack.c.h.b16 %v999
    %v1172 = vunpack.c.l.b16 %v1000
    %v1173 = vunpack.c.h.b16 %v1000
    %v1174 = vunpack.c.l.b16 %v1001
    %v1175 = vunpack.c.h.b16 %v1001
    %v1176 = vunpack.c.l.b16 %v1002
    %v1177 = vunpack.c.h.b16 %v1002
    %v1178 = vunpack.c.l.b16 %v1003
    %v1179 = vunpack.c.h.b16 %v1003
    %v1180 = vunpack.c.l.b16 %v1004
    %v1181 = vunpack.c.h.b16 %v1004
    %v1182 = vunpack.c.l.b16 %v1005
    %v1183 = vunpack.c.h.b16 %v1005
    %v1184 = vunpack.c.l.b16 %v1006
    %v1185 = vunpack.c.h.b16 %v1006
    %v1186 = vunpack.c.l.b16 %v1007
    %v1187 = vunpack.c.h.b16 %v1007
    %v1188 = vunpack.c.l.b16 %v1008
    %v1189 = vunpack.c.h.b16 %v1008
    %v1190 = vunpack.c.l.b16 %v1009
    %v1191 = vunpack.c.h.b16 %v1009
    %v1192 = vunpack.c.l.b16 %v1010
    %v1193 = vunpack.c.h.b16 %v1010
    %v1194 = vunpack.c.l.b16 %v1011
    %v1195 = vunpack.c.h.b16 %v1011
    %v1196 = vunpack.c.l.b16 %v1012
    %v1197 = vunpack.c.h.b16 %v1012
    %v1198 = vunpack.c.l.b16 %v1013
    %v1199 = vunpack.c.h.b16 %v1013
    %v1200 = vunpack.c.l.b16 %v1014
    %v1201 = vunpack.c.h.b16 %v1014
    %v1202 = vunpack.c.l.b16 %v1015
    %v1203 = vunpack.c.h.b16 %v1015
    %v1204 = vunpack.c.l.b16 %v1016
    %v1205 = vunpack.c.h.b16 %v1016
    %v1206 = vunpack.c.l.b16 %v1017
    %v1207 = vunpack.c.h.b16 %v1017
    %v1208 = vunpack.c.l.b16 %v1018
    %v1209 = vunpack.c.h.b16 %v1018
    %v1210 = vunpack.c.l.b16 %v1019
    %v1211 = vunpack.c.h.b16 %v1019
    %v1212 = vunpack.c.l.b16 %v1020
    %v1213 = vunpack.c.h.b16 %v1020
    %v1214 = vunpack.c.l.b16 %v1021
    %v1215 = vunpack.c.h.b16 %v1021
    %v1216 = vunpack.c.l.b16 %v1022
    %v1217 = vunpack.c.h.b16 %v1022
    %v1218 = vunpack.c.l.b16 %v1023
    %v1219 = vunpack.c.h.b16 %v1023
    %v1220 = vunpack.c.l.b16 %v1024
    %v1221 = vunpack.c.h.b16 %v1024
    %v1222 = vunpack.c.l.b16 %v1025
    %v1223 = vunpack.c.h.b16 %v1025
    %v1224 = vunpack.c.l.b16 %v1026
    %v1225 = vunpack.c.h.b16 %v1026
    %v1226 = vunpack.c.l.b16 %v1027
    %v1227 = vunpack.c.h.b16 %v1027
    %v1228 = vunpack.c.l.b16 %v1028
    %v1229 = vunpack.c.h.b16 %v1028
    %v1230 = vunpack.c.l.b16 %v1029
    %v1231 = vunpack.c.h.b16 %v1029
    %v1232 = vunpack.c.l.b16 %v1030
    %v1233 = vunpack.c.h.b16 %v1030
    %v1234 = vunpack.c.l.b16 %v1031
    %v1235 = vunpack.c.h.b16 %v1031
    %v1236 = vunpack.c.l.b16 %v1032
    %v1237 = vunpack.c.h.b16 %v1032
    %v1238 = vunpack.c.l.b16 %v1033
    %v1239 = vunpack.c.h.b16 %v1033
    %v1240 = vunpack.c.l.b16 %v1034
    %v1241 = vunpack.c.h.b16 %v1034
    %v1242 = vunpack.c.l.b16 %v1035
    %v1243 = vunpack.c.h.b16 %v1035
    %v1244 = vunpack.c.l.b16 %v1036
    %v1245 = vunpack.c.h.b16 %v1036
    %v1246 = vunpack.c.l.b16 %v1037
    %v1247 = vunpack.c.h.b16 %v1037
    %v1248 = vunpack.c.l.b16 %v1038
    %v1249 = vunpack.c.h.b16 %v1038
    %v1250 = vunpack.c.l.b16 %v1039
    %v1251 = vunpack.c.h.b16 %v1039
    %v1252 = vunpack.c.l.b16 %v1040
    %v1253 = vunpack.c.h.b16 %v1040
    %v1254 = vunpack.c.l.b16 %v1041
    %v1255 = vunpack.c.h.b16 %v1041
    %v1256 = vunpack.c.l.b16 %v1042
    %v1257 = vunpack.c.h.b16 %v1042
    %v1258 = vunpack.c.l.b16 %v1043
    %v1259 = vunpack.c.h.b16 %v1043
    %v1260 = vpack.c.b16 %v1152, %v1116
    %v1261 = vpack.c.b16 %v1153, %v1117
    %v1262 = vpack.c.b16 %v1154, %v1118
    %v1263 = vpack.c.b16 %v1155, %v1119
    %v1264 = vpack.c.b16 %v1156, %v1120
    %v1265 = vpack.c.b16 %v1157, %v1121
    %v1266 = vpack.c.b16 %v1158, %v1122
    %v1267 = vpack.c.b16 %v1159, %v1123
    %v1268 = vpack.c.b16 %v1160, %v1124
    %v1269 = vpack.c.b16 %v1161, %v1125
    %v1270 = vpack.c.b16 %v1162, %v1126
    %v1271 = vpack.c.b16 %v1163, %v1127
    %v1272 = vpack.c.b16 %v1164, %v1128
    %v1273 = vpack.c.b16 %v1165, %v1129
    %v1274 = vpack.c.b16 %v1166, %v1130
    %v1275 = vpack.c.b16 %v1167, %v1131
    %v1276 = vpack.c.b16 %v1168, %v1132
    %v1277 = vpack.c.b16 %v1169, %v1133
    %v1278 = vpack.c.b16 %v1170, %v1134
    %v1279 = vpack.c.b16 %v1171, %v1135
    %v1280 = vpack.c.b16 %v1172, %v1136
    %v1281 = vpack.c.b16 %v1173, %v1137
    %v1282 = vpack.c.b16 %v1174, %v1138
    %v1283 = vpack.c.b16 %v1175, %v1139
    %v1284 = vpack.c.b16 %v1176, %v1140
    %v1285 = vpack.c.b16 %v1177, %v1141
    %v1286 = vpack.c.b16 %v1178, %v1142
    %v1287 = vpack.c.b16 %v1179, %v1143
    %v1288 = vpack.c.b16 %v1180, %v1144
    %v1289 = vpack.c.b16 %v1181, %v1145
    %v1290 = vpack.c.b16 %v1182, %v1146
    %v1291 = vpack.c.b16 %v1183, %v1147
    %v1292 = vpack.c.b16 %v1184, %v1148
    %v1293 = vpack.c.b16 %v1185, %v1149
    %v1294 = vpack.c.b16 %v1186, %v1150
    %v1295 = vpack.c.b16 %v1187, %v1151
    %v1296 = vpack.c.b16 %v1224, %v1188
    %v1297 = vpack.c.b16 %v1225, %v1189
    %v1298 = vpack.c.b16 %v1226, %v1190
    %v1299 = vpack.c.b16 %v1227, %v1191
    %v1300 = vpack.c.b16 %v1228, %v1192
    %v1301 = vpack.c.b16 %v1229, %v1193
    %v1302 = vpack.c.b16 %v1230, %v1194
    %v1303 = vpack.c.b16 %v1231, %v1195
    %v1304 = vpack.c.b16 %v1232, %v1196
    %v1305 = vpack.c.b16 %v1233, %v1197
    %v1306 = vpack.c.b16 %v1234, %v1198
    %v1307 = vpack.c.b16 %v1235, %v1199
    %v1308 = vpack.c.b16 %v1236, %v1200
    %v1309 = vpack.c.b16 %v1237, %v1201
    %v1310 = vpack.c.b16 %v1238, %v1202
    %v1311 = vpack.c.b16 %v1239, %v1203
    %v1312 = vpack.c.b16 %v1240, %v1204
    %v1313 = vpack.c.b16 %v1241, %v1205
    %v1314 = vpack.c.b16 %v1242, %v1206
    %v1315 = vpack.c.b16 %v1243, %v1207
    %v1316 = vpack.c.b16 %v1244, %v1208
    %v1317 = vpack.c.b16 %v1245, %v1209
    %v1318 = vpack.c.b16 %v1246, %v1210
    %v1319 = vpack.c.b16 %v1247, %v1211
    %v1320 = vpack.c.b16 %v1248, %v1212
    %v1321 = vpack.c.b16 %v1249, %v1213
    %v1322 = vpack.c.b16 %v1250, %v1214
    %v1323 = vpack.c.b16 %v1251, %v1215
    %v1324 = vpack.c.b16 %v1252, %v1216
    %v1325 = vpack.c.b16 %v1253, %v1217
    %v1326 = vpack.c.b16 %v1254, %v1218
    %v1327 = vpack.c.b16 %v1255, %v1219
    %v1328 = vpack.c.b16 %v1256, %v1220
    %v1329 = vpack.c.b16 %v1257, %v1221
    %v1330 = vpack.c.b16 %v1258, %v1222
    %v1331 = vpack.c.b16 %v1259, %v1223
    %1404 = vmatprep.subr.bf16.mxu0 0
    %1405 = vmatpush1.bf16.xpose.msra.mxu0 0
    %1406 = vmatprep.subr.bf16.mxu0 0
    %1407 = vmatpush1.bf16.xpose.msra.mxu0 0
    %1408 = vmatprep.subr.bf16.mxu0 0
    %1409 = vmatpush1.bf16.xpose.msra.mxu0 0
    %1410 = vmatprep.subr.bf16.mxu0 0
    %1411 = vmatpush1.bf16.xpose.msra.mxu0 0
    %1412 = vmatprep.subr.bf16.mxu0 0
    %1413 = vmatpush1.bf16.xpose.msra.mxu0 0
    %1414 = vmatprep.subr.bf16.mxu0 0
    %1415 = vmatpush1.bf16.xpose.msra.mxu0 0
    %1416 = vmatprep.subr.bf16.mxu0 %v1297
    %1417 = vmatpush1.bf16.xpose.msra.mxu0 %v1296
    %1418 = vmatprep.subr.bf16.mxu0 %v1261
    %1419 = vmatpush1.bf16.xpose.msra.mxu0 %v1260
    %1420 = vmatprep.subr.bf16.mxu0 0
    %1421 = vmatpush2.bf16.xpose.msra.mxu0 0
    %1422 = vmatprep.subr.bf16.mxu0 0
    %1423 = vmatpush2.bf16.xpose.msra.mxu0 0
    %1424 = vmatprep.subr.bf16.mxu0 0
    %1425 = vmatpush2.bf16.xpose.msra.mxu0 0
    %1426 = vmatprep.subr.bf16.mxu0 0
    %1427 = vmatpush2.bf16.xpose.msra.mxu0 0
    %1428 = vmatprep.subr.bf16.mxu0 0
    %1429 = vmatpush2.bf16.xpose.msra.mxu0 0
    %1430 = vmatprep.subr.bf16.mxu0 0
    %1431 = vmatpush2.bf16.xpose.msra.mxu0 0
    %1432 = vmatprep.subr.bf16.mxu0 0
    %1433 = vmatpush2.bf16.xpose.msra.mxu0 0
    %1434 = vmatprep.subr.bf16.mxu0 0
    %1435 = vmatpush2.bf16.xpose.msra.mxu0 0
    %1436 = vmatprep.mubr.bf16.mxu0 %v937
    %1437 = vmatmul.mubr.bf16.gmra.mxu0 %v936
    %v1438 = vpop.f32.mrf.mxu0
    %v1439 = vadd.f32 0.0, %v1438
    %v1440 = vpop.f32.mrf.mxu0
    %v1441 = vpop.f32.mrf.mxu0
    %v1442 = vpop.f32.mrf.mxu0
    %1443 = vdwg.mxu0
    %1444 = vmatprep.subr.bf16.mxu0 0
    %1445 = vmatpush1.bf16.xpose.msra.mxu0 0
    %1446 = vmatprep.subr.bf16.mxu0 0
    %1447 = vmatpush1.bf16.xpose.msra.mxu0 0
    %1448 = vmatprep.subr.bf16.mxu0 0
    %1449 = vmatpush1.bf16.xpose.msra.mxu0 0
    %1450 = vmatprep.subr.bf16.mxu0 0
    %1451 = vmatpush1.bf16.xpose.msra.mxu0 0
    %1452 = vmatprep.subr.bf16.mxu0 0
    %1453 = vmatpush1.bf16.xpose.msra.mxu0 0
    %1454 = vmatprep.subr.bf16.mxu0 0
    %1455 = vmatpush1.bf16.xpose.msra.mxu0 0
    %1456 = vmatprep.subr.bf16.mxu0 %v1299
    %1457 = vmatpush1.bf16.xpose.msra.mxu0 %v1298
    %1458 = vmatprep.subr.bf16.mxu0 %v1263
    %1459 = vmatpush1.bf16.xpose.msra.mxu0 %v1262
    %1460 = vmatprep.subr.bf16.mxu0 0
    %1461 = vmatpush2.bf16.xpose.msra.mxu0 0
    %1462 = vmatprep.subr.bf16.mxu0 0
    %1463 = vmatpush2.bf16.xpose.msra.mxu0 0
    %1464 = vmatprep.subr.bf16.mxu0 0
    %1465 = vmatpush2.bf16.xpose.msra.mxu0 0
    %1466 = vmatprep.subr.bf16.mxu0 0
    %1467 = vmatpush2.bf16.xpose.msra.mxu0 0
    %1468 = vmatprep.subr.bf16.mxu0 0
    %1469 = vmatpush2.bf16.xpose.msra.mxu0 0
    %1470 = vmatprep.subr.bf16.mxu0 0
    %1471 = vmatpush2.bf16.xpose.msra.mxu0 0
    %1472 = vmatprep.subr.bf16.mxu0 0
    %1473 = vmatpush2.bf16.xpose.msra.mxu0 0
    %1474 = vmatprep.subr.bf16.mxu0 0
    %1475 = vmatpush2.bf16.xpose.msra.mxu0 0
    %1476 = vmatprep.mubr.bf16.mxu0 %v939
    %1477 = vmatmul.mubr.bf16.gmra.mxu0 %v938
    %v1478 = vpop.f32.mrf.mxu0
    %v1479 = vadd.f32 %v1439, %v1478
    %v1480 = vpop.f32.mrf.mxu0
    %v1481 = vpop.f32.mrf.mxu0
    %v1482 = vpop.f32.mrf.mxu0
    %1483 = vdwg.mxu0
    %1484 = vmatprep.subr.bf16.mxu0 0
    %1485 = vmatpush1.bf16.xpose.msra.mxu0 0
    %1486 = vmatprep.subr.bf16.mxu0 0
    %1487 = vmatpush1.bf16.xpose.msra.mxu0 0
    %1488 = vmatprep.subr.bf16.mxu0 0
    %1489 = vmatpush1.bf16.xpose.msra.mxu0 0
    %1490 = vmatprep.subr.bf16.mxu0 0
    %1491 = vmatpush1.bf16.xpose.msra.mxu0 0
    %1492 = vmatprep.subr.bf16.mxu0 0
    %1493 = vmatpush1.bf16.xpose.msra.mxu0 0
    %1494 = vmatprep.subr.bf16.mxu0 0
    %1495 = vmatpush1.bf16.xpose.msra.mxu0 0
    %1496 = vmatprep.subr.bf16.mxu0 %v1301
    %1497 = vmatpush1.bf16.xpose.msra.mxu0 %v1300
    %1498 = vmatprep.subr.bf16.mxu0 %v1265
    %1499 = vmatpush1.bf16.xpose.msra.mxu0 %v1264
    %1500 = vmatprep.subr.bf16.mxu0 0
    %1501 = vmatpush2.bf16.xpose.msra.mxu0 0
    %1502 = vmatprep.subr.bf16.mxu0 0
    %1503 = vmatpush2.bf16.xpose.msra.mxu0 0
    %1504 = vmatprep.subr.bf16.mxu0 0
    %1505 = vmatpush2.bf16.xpose.msra.mxu0 0
    %1506 = vmatprep.subr.bf16.mxu0 0
    %1507 = vmatpush2.bf16.xpose.msra.mxu0 0
    %1508 = vmatprep.subr.bf16.mxu0 0
    %1509 = vmatpush2.bf16.xpose.msra.mxu0 0
    %1510 = vmatprep.subr.bf16.mxu0 0
    %1511 = vmatpush2.bf16.xpose.msra.mxu0 0
    %1512 = vmatprep.subr.bf16.mxu0 0
    %1513 = vmatpush2.bf16.xpose.msra.mxu0 0
    %1514 = vmatprep.subr.bf16.mxu0 0
    %1515 = vmatpush2.bf16.xpose.msra.mxu0 0
    %1516 = vmatprep.mubr.bf16.mxu0 %v941
    %1517 = vmatmul.mubr.bf16.gmra.mxu0 %v940
    %v1518 = vpop.f32.mrf.mxu0
    %v1519 = vadd.f32 %v1479, %v1518
    %v1520 = vpop.f32.mrf.mxu0
    %v1521 = vpop.f32.mrf.mxu0
    %v1522 = vpop.f32.mrf.mxu0
    %1523 = vdwg.mxu0
    %1524 = vmatprep.subr.bf16.mxu0 0
    %1525 = vmatpush1.bf16.xpose.msra.mxu0 0
    %1526 = vmatprep.subr.bf16.mxu0 0
    %1527 = vmatpush1.bf16.xpose.msra.mxu0 0
    %1528 = vmatprep.subr.bf16.mxu0 0
    %1529 = vmatpush1.bf16.xpose.msra.mxu0 0
    %1530 = vmatprep.subr.bf16.mxu0 0
    %1531 = vmatpush1.bf16.xpose.msra.mxu0 0
    %1532 = vmatprep.subr.bf16.mxu0 0
    %1533 = vmatpush1.bf16.xpose.msra.mxu0 0
    %1534 = vmatprep.subr.bf16.mxu0 0
    %1535 = vmatpush1.bf16.xpose.msra.mxu0 0
    %1536 = vmatprep.subr.bf16.mxu0 %v1303
    %1537 = vmatpush1.bf16.xpose.msra.mxu0 %v1302
    %1538 = vmatprep.subr.bf16.mxu0 %v1267
    %1539 = vmatpush1.bf16.xpose.msra.mxu0 %v1266
    %1540 = vmatprep.subr.bf16.mxu0 0
    %1541 = vmatpush2.bf16.xpose.msra.mxu0 0
    %1542 = vmatprep.subr.bf16.mxu0 0
    %1543 = vmatpush2.bf16.xpose.msra.mxu0 0
    %1544 = vmatprep.subr.bf16.mxu0 0
    %1545 = vmatpush2.bf16.xpose.msra.mxu0 0
    %1546 = vmatprep.subr.bf16.mxu0 0
    %1547 = vmatpush2.bf16.xpose.msra.mxu0 0
    %1548 = vmatprep.subr.bf16.mxu0 0
    %1549 = vmatpush2.bf16.xpose.msra.mxu0 0
    %1550 = vmatprep.subr.bf16.mxu0 0
    %1551 = vmatpush2.bf16.xpose.msra.mxu0 0
    %1552 = vmatprep.subr.bf16.mxu0 0
    %1553 = vmatpush2.bf16.xpose.msra.mxu0 0
    %1554 = vmatprep.subr.bf16.mxu0 0
    %1555 = vmatpush2.bf16.xpose.msra.mxu0 0
    %1556 = vmatprep.mubr.bf16.mxu0 %v943
    %1557 = vmatmul.mubr.bf16.gmra.mxu0 %v942
    %v1558 = vpop.f32.mrf.mxu0
    %v1559 = vadd.f32 %v1519, %v1558
    %v1560 = vpop.f32.mrf.mxu0
    %v1561 = vpop.f32.mrf.mxu0
    %v1562 = vpop.f32.mrf.mxu0
    %1563 = vdwg.mxu0
    %1564 = vmatprep.subr.bf16.mxu0 0
    %1565 = vmatpush1.bf16.xpose.msra.mxu0 0
    %1566 = vmatprep.subr.bf16.mxu0 0
    %1567 = vmatpush1.bf16.xpose.msra.mxu0 0
    %1568 = vmatprep.subr.bf16.mxu0 0
    %1569 = vmatpush1.bf16.xpose.msra.mxu0 0
    %1570 = vmatprep.subr.bf16.mxu0 0
    %1571 = vmatpush1.bf16.xpose.msra.mxu0 0
    %1572 = vmatprep.subr.bf16.mxu0 0
    %1573 = vmatpush1.bf16.xpose.msra.mxu0 0
    %1574 = vmatprep.subr.bf16.mxu0 0
    %1575 = vmatpush1.bf16.xpose.msra.mxu0 0
    %1576 = vmatprep.subr.bf16.mxu0 %v1305
    %1577 = vmatpush1.bf16.xpose.msra.mxu0 %v1304
    %1578 = vmatprep.subr.bf16.mxu0 %v1269
    %1579 = vmatpush1.bf16.xpose.msra.mxu0 %v1268
    %1580 = vmatprep.subr.bf16.mxu0 0
    %1581 = vmatpush2.bf16.xpose.msra.mxu0 0
    %1582 = vmatprep.subr.bf16.mxu0 0
    %1583 = vmatpush2.bf16.xpose.msra.mxu0 0
    %1584 = vmatprep.subr.bf16.mxu0 0
    %1585 = vmatpush2.bf16.xpose.msra.mxu0 0
    %1586 = vmatprep.subr.bf16.mxu0 0
    %1587 = vmatpush2.bf16.xpose.msra.mxu0 0
    %1588 = vmatprep.subr.bf16.mxu0 0
    %1589 = vmatpush2.bf16.xpose.msra.mxu0 0
    %1590 = vmatprep.subr.bf16.mxu0 0
    %1591 = vmatpush2.bf16.xpose.msra.mxu0 0
    %1592 = vmatprep.subr.bf16.mxu0 0
    %1593 = vmatpush2.bf16.xpose.msra.mxu0 0
    %1594 = vmatprep.subr.bf16.mxu0 0
    %1595 = vmatpush2.bf16.xpose.msra.mxu0 0
    %1596 = vmatprep.mubr.bf16.mxu0 %v945
    %1597 = vmatmul.mubr.bf16.gmra.mxu0 %v944
    %v1598 = vpop.f32.mrf.mxu0
    %v1599 = vadd.f32 %v1559, %v1598
    %v1600 = vpop.f32.mrf.mxu0
    %v1601 = vpop.f32.mrf.mxu0
    %v1602 = vpop.f32.mrf.mxu0
    %1603 = vdwg.mxu0
    %1604 = vmatprep.subr.bf16.mxu0 0
    %1605 = vmatpush1.bf16.xpose.msra.mxu0 0
    %1606 = vmatprep.subr.bf16.mxu0 0
    %1607 = vmatpush1.bf16.xpose.msra.mxu0 0
    %1608 = vmatprep.subr.bf16.mxu0 0
    %1609 = vmatpush1.bf16.xpose.msra.mxu0 0
    %1610 = vmatprep.subr.bf16.mxu0 0
    %1611 = vmatpush1.bf16.xpose.msra.mxu0 0
    %1612 = vmatprep.subr.bf16.mxu0 0
    %1613 = vmatpush1.bf16.xpose.msra.mxu0 0
    %1614 = vmatprep.subr.bf16.mxu0 0
    %1615 = vmatpush1.bf16.xpose.msra.mxu0 0
    %1616 = vmatprep.subr.bf16.mxu0 %v1307
    %1617 = vmatpush1.bf16.xpose.msra.mxu0 %v1306
    %1618 = vmatprep.subr.bf16.mxu0 %v1271
    %1619 = vmatpush1.bf16.xpose.msra.mxu0 %v1270
    %1620 = vmatprep.subr.bf16.mxu0 0
    %1621 = vmatpush2.bf16.xpose.msra.mxu0 0
    %1622 = vmatprep.subr.bf16.mxu0 0
    %1623 = vmatpush2.bf16.xpose.msra.mxu0 0
    %1624 = vmatprep.subr.bf16.mxu0 0
    %1625 = vmatpush2.bf16.xpose.msra.mxu0 0
    %1626 = vmatprep.subr.bf16.mxu0 0
    %1627 = vmatpush2.bf16.xpose.msra.mxu0 0
    %1628 = vmatprep.subr.bf16.mxu0 0
    %1629 = vmatpush2.bf16.xpose.msra.mxu0 0
    %1630 = vmatprep.subr.bf16.mxu0 0
    %1631 = vmatpush2.bf16.xpose.msra.mxu0 0
    %1632 = vmatprep.subr.bf16.mxu0 0
    %1633 = vmatpush2.bf16.xpose.msra.mxu0 0
    %1634 = vmatprep.subr.bf16.mxu0 0
    %1635 = vmatpush2.bf16.xpose.msra.mxu0 0
    %1636 = vmatprep.mubr.bf16.mxu0 %v947
    %1637 = vmatmul.mubr.bf16.gmra.mxu0 %v946
    %v1638 = vpop.f32.mrf.mxu0
    %v1639 = vadd.f32 %v1599, %v1638
    %v1640 = vpop.f32.mrf.mxu0
    %v1641 = vpop.f32.mrf.mxu0
    %v1642 = vpop.f32.mrf.mxu0
    %1643 = vdwg.mxu0
    %1644 = vmatprep.subr.bf16.mxu0 0
    %1645 = vmatpush1.bf16.xpose.msra.mxu0 0
    %1646 = vmatprep.subr.bf16.mxu0 0
    %1647 = vmatpush1.bf16.xpose.msra.mxu0 0
    %1648 = vmatprep.subr.bf16.mxu0 0
    %1649 = vmatpush1.bf16.xpose.msra.mxu0 0
    %1650 = vmatprep.subr.bf16.mxu0 0
    %1651 = vmatpush1.bf16.xpose.msra.mxu0 0
    %1652 = vmatprep.subr.bf16.mxu0 0
    %1653 = vmatpush1.bf16.xpose.msra.mxu0 0
    %1654 = vmatprep.subr.bf16.mxu0 0
    %1655 = vmatpush1.bf16.xpose.msra.mxu0 0
    %1656 = vmatprep.subr.bf16.mxu0 %v1309
    %1657 = vmatpush1.bf16.xpose.msra.mxu0 %v1308
    %1658 = vmatprep.subr.bf16.mxu0 %v1273
    %1659 = vmatpush1.bf16.xpose.msra.mxu0 %v1272
    %1660 = vmatprep.subr.bf16.mxu0 0
    %1661 = vmatpush2.bf16.xpose.msra.mxu0 0
    %1662 = vmatprep.subr.bf16.mxu0 0
    %1663 = vmatpush2.bf16.xpose.msra.mxu0 0
    %1664 = vmatprep.subr.bf16.mxu0 0
    %1665 = vmatpush2.bf16.xpose.msra.mxu0 0
    %1666 = vmatprep.subr.bf16.mxu0 0
    %1667 = vmatpush2.bf16.xpose.msra.mxu0 0
    %1668 = vmatprep.subr.bf16.mxu0 0
    %1669 = vmatpush2.bf16.xpose.msra.mxu0 0
    %1670 = vmatprep.subr.bf16.mxu0 0
    %1671 = vmatpush2.bf16.xpose.msra.mxu0 0
    %1672 = vmatprep.subr.bf16.mxu0 0
    %1673 = vmatpush2.bf16.xpose.msra.mxu0 0
    %1674 = vmatprep.subr.bf16.mxu0 0
    %1675 = vmatpush2.bf16.xpose.msra.mxu0 0
    %1676 = vmatprep.mubr.bf16.mxu0 %v949
    %1677 = vmatmul.mubr.bf16.gmra.mxu0 %v948
    %v1678 = vpop.f32.mrf.mxu0
    %v1679 = vadd.f32 %v1639, %v1678
    %v1680 = vpop.f32.mrf.mxu0
    %v1681 = vpop.f32.mrf.mxu0
    %v1682 = vpop.f32.mrf.mxu0
    %1683 = vdwg.mxu0
    %1684 = vmatprep.subr.bf16.mxu0 0
    %1685 = vmatpush1.bf16.xpose.msra.mxu0 0
    %1686 = vmatprep.subr.bf16.mxu0 0
    %1687 = vmatpush1.bf16.xpose.msra.mxu0 0
    %1688 = vmatprep.subr.bf16.mxu0 0
    %1689 = vmatpush1.bf16.xpose.msra.mxu0 0
    %1690 = vmatprep.subr.bf16.mxu0 0
    %1691 = vmatpush1.bf16.xpose.msra.mxu0 0
    %1692 = vmatprep.subr.bf16.mxu0 0
    %1693 = vmatpush1.bf16.xpose.msra.mxu0 0
    %1694 = vmatprep.subr.bf16.mxu0 0
    %1695 = vmatpush1.bf16.xpose.msra.mxu0 0
    %1696 = vmatprep.subr.bf16.mxu0 %v1311
    %1697 = vmatpush1.bf16.xpose.msra.mxu0 %v1310
    %1698 = vmatprep.subr.bf16.mxu0 %v1275
    %1699 = vmatpush1.bf16.xpose.msra.mxu0 %v1274
    %1700 = vmatprep.subr.bf16.mxu0 0
    %1701 = vmatpush2.bf16.xpose.msra.mxu0 0
    %1702 = vmatprep.subr.bf16.mxu0 0
    %1703 = vmatpush2.bf16.xpose.msra.mxu0 0
    %1704 = vmatprep.subr.bf16.mxu0 0
    %1705 = vmatpush2.bf16.xpose.msra.mxu0 0
    %1706 = vmatprep.subr.bf16.mxu0 0
    %1707 = vmatpush2.bf16.xpose.msra.mxu0 0
    %1708 = vmatprep.subr.bf16.mxu0 0
    %1709 = vmatpush2.bf16.xpose.msra.mxu0 0
    %1710 = vmatprep.subr.bf16.mxu0 0
    %1711 = vmatpush2.bf16.xpose.msra.mxu0 0
    %1712 = vmatprep.subr.bf16.mxu0 0
    %1713 = vmatpush2.bf16.xpose.msra.mxu0 0
    %1714 = vmatprep.subr.bf16.mxu0 0
    %1715 = vmatpush2.bf16.xpose.msra.mxu0 0
    %1716 = vmatprep.mubr.bf16.mxu0 %v951
    %1717 = vmatmul.mubr.bf16.gmra.mxu0 %v950
    %v1718 = vpop.f32.mrf.mxu0
    %v1719 = vadd.f32 %v1679, %v1718
    %v1720 = vpop.f32.mrf.mxu0
    %v1721 = vpop.f32.mrf.mxu0
    %v1722 = vpop.f32.mrf.mxu0
    %1723 = vdwg.mxu0
    %1724 = vmatprep.subr.bf16.mxu0 0
    %1725 = vmatpush1.bf16.xpose.msra.mxu0 0
    %1726 = vmatprep.subr.bf16.mxu0 0
    %1727 = vmatpush1.bf16.xpose.msra.mxu0 0
    %1728 = vmatprep.subr.bf16.mxu0 0
    %1729 = vmatpush1.bf16.xpose.msra.mxu0 0
    %1730 = vmatprep.subr.bf16.mxu0 0
    %1731 = vmatpush1.bf16.xpose.msra.mxu0 0
    %1732 = vmatprep.subr.bf16.mxu0 0
    %1733 = vmatpush1.bf16.xpose.msra.mxu0 0
    %1734 = vmatprep.subr.bf16.mxu0 0
    %1735 = vmatpush1.bf16.xpose.msra.mxu0 0
    %1736 = vmatprep.subr.bf16.mxu0 %v1313
    %1737 = vmatpush1.bf16.xpose.msra.mxu0 %v1312
    %1738 = vmatprep.subr.bf16.mxu0 %v1277
    %1739 = vmatpush1.bf16.xpose.msra.mxu0 %v1276
    %1740 = vmatprep.subr.bf16.mxu0 0
    %1741 = vmatpush2.bf16.xpose.msra.mxu0 0
    %1742 = vmatprep.subr.bf16.mxu0 0
    %1743 = vmatpush2.bf16.xpose.msra.mxu0 0
    %1744 = vmatprep.subr.bf16.mxu0 0
    %1745 = vmatpush2.bf16.xpose.msra.mxu0 0
    %1746 = vmatprep.subr.bf16.mxu0 0
    %1747 = vmatpush2.bf16.xpose.msra.mxu0 0
    %1748 = vmatprep.subr.bf16.mxu0 0
    %1749 = vmatpush2.bf16.xpose.msra.mxu0 0
    %1750 = vmatprep.subr.bf16.mxu0 0
    %1751 = vmatpush2.bf16.xpose.msra.mxu0 0
    %1752 = vmatprep.subr.bf16.mxu0 0
    %1753 = vmatpush2.bf16.xpose.msra.mxu0 0
    %1754 = vmatprep.subr.bf16.mxu0 0
    %1755 = vmatpush2.bf16.xpose.msra.mxu0 0
    %1756 = vmatprep.mubr.bf16.mxu0 %v953
    %1757 = vmatmul.mubr.bf16.gmra.mxu0 %v952
    %v1758 = vpop.f32.mrf.mxu0
    %v1759 = vadd.f32 %v1719, %v1758
    %v1760 = vpop.f32.mrf.mxu0
    %v1761 = vpop.f32.mrf.mxu0
    %v1762 = vpop.f32.mrf.mxu0
    %1763 = vdwg.mxu0
    %1764 = vmatprep.subr.bf16.mxu0 0
    %1765 = vmatpush1.bf16.xpose.msra.mxu0 0
    %1766 = vmatprep.subr.bf16.mxu0 0
    %1767 = vmatpush1.bf16.xpose.msra.mxu0 0
    %1768 = vmatprep.subr.bf16.mxu0 0
    %1769 = vmatpush1.bf16.xpose.msra.mxu0 0
    %1770 = vmatprep.subr.bf16.mxu0 0
    %1771 = vmatpush1.bf16.xpose.msra.mxu0 0
    %1772 = vmatprep.subr.bf16.mxu0 0
    %1773 = vmatpush1.bf16.xpose.msra.mxu0 0
    %1774 = vmatprep.subr.bf16.mxu0 0
    %1775 = vmatpush1.bf16.xpose.msra.mxu0 0
    %1776 = vmatprep.subr.bf16.mxu0 %v1315
    %1777 = vmatpush1.bf16.xpose.msra.mxu0 %v1314
    %1778 = vmatprep.subr.bf16.mxu0 %v1279
    %1779 = vmatpush1.bf16.xpose.msra.mxu0 %v1278
    %1780 = vmatprep.subr.bf16.mxu0 0
    %1781 = vmatpush2.bf16.xpose.msra.mxu0 0
    %1782 = vmatprep.subr.bf16.mxu0 0
    %1783 = vmatpush2.bf16.xpose.msra.mxu0 0
    %1784 = vmatprep.subr.bf16.mxu0 0
    %1785 = vmatpush2.bf16.xpose.msra.mxu0 0
    %1786 = vmatprep.subr.bf16.mxu0 0
    %1787 = vmatpush2.bf16.xpose.msra.mxu0 0
    %1788 = vmatprep.subr.bf16.mxu0 0
    %1789 = vmatpush2.bf16.xpose.msra.mxu0 0
    %1790 = vmatprep.subr.bf16.mxu0 0
    %1791 = vmatpush2.bf16.xpose.msra.mxu0 0
    %1792 = vmatprep.subr.bf16.mxu0 0
    %1793 = vmatpush2.bf16.xpose.msra.mxu0 0
    %1794 = vmatprep.subr.bf16.mxu0 0
    %1795 = vmatpush2.bf16.xpose.msra.mxu0 0
    %1796 = vmatprep.mubr.bf16.mxu0 %v955
    %1797 = vmatmul.mubr.bf16.gmra.mxu0 %v954
    %v1798 = vpop.f32.mrf.mxu0
    %v1799 = vadd.f32 %v1759, %v1798
    %v1800 = vpop.f32.mrf.mxu0
    %v1801 = vpop.f32.mrf.mxu0
    %v1802 = vpop.f32.mrf.mxu0
    %1803 = vdwg.mxu0
    %1804 = vmatprep.subr.bf16.mxu0 0
    %1805 = vmatpush1.bf16.xpose.msra.mxu0 0
    %1806 = vmatprep.subr.bf16.mxu0 0
    %1807 = vmatpush1.bf16.xpose.msra.mxu0 0
    %1808 = vmatprep.subr.bf16.mxu0 0
    %1809 = vmatpush1.bf16.xpose.msra.mxu0 0
    %1810 = vmatprep.subr.bf16.mxu0 0
    %1811 = vmatpush1.bf16.xpose.msra.mxu0 0
    %1812 = vmatprep.subr.bf16.mxu0 0
    %1813 = vmatpush1.bf16.xpose.msra.mxu0 0
    %1814 = vmatprep.subr.bf16.mxu0 0
    %1815 = vmatpush1.bf16.xpose.msra.mxu0 0
    %1816 = vmatprep.subr.bf16.mxu0 %v1317
    %1817 = vmatpush1.bf16.xpose.msra.mxu0 %v1316
    %1818 = vmatprep.subr.bf16.mxu0 %v1281
    %1819 = vmatpush1.bf16.xpose.msra.mxu0 %v1280
    %1820 = vmatprep.subr.bf16.mxu0 0
    %1821 = vmatpush2.bf16.xpose.msra.mxu0 0
    %1822 = vmatprep.subr.bf16.mxu0 0
    %1823 = vmatpush2.bf16.xpose.msra.mxu0 0
    %1824 = vmatprep.subr.bf16.mxu0 0
    %1825 = vmatpush2.bf16.xpose.msra.mxu0 0
    %1826 = vmatprep.subr.bf16.mxu0 0
    %1827 = vmatpush2.bf16.xpose.msra.mxu0 0
    %1828 = vmatprep.subr.bf16.mxu0 0
    %1829 = vmatpush2.bf16.xpose.msra.mxu0 0
    %1830 = vmatprep.subr.bf16.mxu0 0
    %1831 = vmatpush2.bf16.xpose.msra.mxu0 0
    %1832 = vmatprep.subr.bf16.mxu0 0
    %1833 = vmatpush2.bf16.xpose.msra.mxu0 0
    %1834 = vmatprep.subr.bf16.mxu0 0
    %1835 = vmatpush2.bf16.xpose.msra.mxu0 0
    %1836 = vmatprep.mubr.bf16.mxu0 %v957
    %1837 = vmatmul.mubr.bf16.gmra.mxu0 %v956
    %v1838 = vpop.f32.mrf.mxu0
    %v1839 = vadd.f32 %v1799, %v1838
    %v1840 = vpop.f32.mrf.mxu0
    %v1841 = vpop.f32.mrf.mxu0
    %v1842 = vpop.f32.mrf.mxu0
    %1843 = vdwg.mxu0
    %1844 = vmatprep.subr.bf16.mxu0 0
    %1845 = vmatpush1.bf16.xpose.msra.mxu0 0
    %1846 = vmatprep.subr.bf16.mxu0 0
    %1847 = vmatpush1.bf16.xpose.msra.mxu0 0
    %1848 = vmatprep.subr.bf16.mxu0 0
    %1849 = vmatpush1.bf16.xpose.msra.mxu0 0
    %1850 = vmatprep.subr.bf16.mxu0 0
    %1851 = vmatpush1.bf16.xpose.msra.mxu0 0
    %1852 = vmatprep.subr.bf16.mxu0 0
    %1853 = vmatpush1.bf16.xpose.msra.mxu0 0
    %1854 = vmatprep.subr.bf16.mxu0 0
    %1855 = vmatpush1.bf16.xpose.msra.mxu0 0
    %1856 = vmatprep.subr.bf16.mxu0 %v1319
    %1857 = vmatpush1.bf16.xpose.msra.mxu0 %v1318
    %1858 = vmatprep.subr.bf16.mxu0 %v1283
    %1859 = vmatpush1.bf16.xpose.msra.mxu0 %v1282
    %1860 = vmatprep.subr.bf16.mxu0 0
    %1861 = vmatpush2.bf16.xpose.msra.mxu0 0
    %1862 = vmatprep.subr.bf16.mxu0 0
    %1863 = vmatpush2.bf16.xpose.msra.mxu0 0
    %1864 = vmatprep.subr.bf16.mxu0 0
    %1865 = vmatpush2.bf16.xpose.msra.mxu0 0
    %1866 = vmatprep.subr.bf16.mxu0 0
    %1867 = vmatpush2.bf16.xpose.msra.mxu0 0
    %1868 = vmatprep.subr.bf16.mxu0 0
    %1869 = vmatpush2.bf16.xpose.msra.mxu0 0
    %1870 = vmatprep.subr.bf16.mxu0 0
    %1871 = vmatpush2.bf16.xpose.msra.mxu0 0
    %1872 = vmatprep.subr.bf16.mxu0 0
    %1873 = vmatpush2.bf16.xpose.msra.mxu0 0
    %1874 = vmatprep.subr.bf16.mxu0 0
    %1875 = vmatpush2.bf16.xpose.msra.mxu0 0
    %1876 = vmatprep.mubr.bf16.mxu0 %v959
    %1877 = vmatmul.mubr.bf16.gmra.mxu0 %v958
    %v1878 = vpop.f32.mrf.mxu0
    %v1879 = vadd.f32 %v1839, %v1878
    %v1880 = vpop.f32.mrf.mxu0
    %v1881 = vpop.f32.mrf.mxu0
    %v1882 = vpop.f32.mrf.mxu0
    %1883 = vdwg.mxu0
    %1884 = vmatprep.subr.bf16.mxu0 0
    %1885 = vmatpush1.bf16.xpose.msra.mxu0 0
    %1886 = vmatprep.subr.bf16.mxu0 0
    %1887 = vmatpush1.bf16.xpose.msra.mxu0 0
    %1888 = vmatprep.subr.bf16.mxu0 0
    %1889 = vmatpush1.bf16.xpose.msra.mxu0 0
    %1890 = vmatprep.subr.bf16.mxu0 0
    %1891 = vmatpush1.bf16.xpose.msra.mxu0 0
    %1892 = vmatprep.subr.bf16.mxu0 0
    %1893 = vmatpush1.bf16.xpose.msra.mxu0 0
    %1894 = vmatprep.subr.bf16.mxu0 0
    %1895 = vmatpush1.bf16.xpose.msra.mxu0 0
    %1896 = vmatprep.subr.bf16.mxu0 %v1321
    %1897 = vmatpush1.bf16.xpose.msra.mxu0 %v1320
    %1898 = vmatprep.subr.bf16.mxu0 %v1285
    %1899 = vmatpush1.bf16.xpose.msra.mxu0 %v1284
    %1900 = vmatprep.subr.bf16.mxu0 0
    %1901 = vmatpush2.bf16.xpose.msra.mxu0 0
    %1902 = vmatprep.subr.bf16.mxu0 0
    %1903 = vmatpush2.bf16.xpose.msra.mxu0 0
    %1904 = vmatprep.subr.bf16.mxu0 0
    %1905 = vmatpush2.bf16.xpose.msra.mxu0 0
    %1906 = vmatprep.subr.bf16.mxu0 0
    %1907 = vmatpush2.bf16.xpose.msra.mxu0 0
    %1908 = vmatprep.subr.bf16.mxu0 0
    %1909 = vmatpush2.bf16.xpose.msra.mxu0 0
    %1910 = vmatprep.subr.bf16.mxu0 0
    %1911 = vmatpush2.bf16.xpose.msra.mxu0 0
    %1912 = vmatprep.subr.bf16.mxu0 0
    %1913 = vmatpush2.bf16.xpose.msra.mxu0 0
    %1914 = vmatprep.subr.bf16.mxu0 0
    %1915 = vmatpush2.bf16.xpose.msra.mxu0 0
    %1916 = vmatprep.mubr.bf16.mxu0 %v961
    %1917 = vmatmul.mubr.bf16.gmra.mxu0 %v960
    %v1918 = vpop.f32.mrf.mxu0
    %v1919 = vadd.f32 %v1879, %v1918
    %v1920 = vpop.f32.mrf.mxu0
    %v1921 = vpop.f32.mrf.mxu0
    %v1922 = vpop.f32.mrf.mxu0
    %1923 = vdwg.mxu0
    %1924 = vmatprep.subr.bf16.mxu0 0
    %1925 = vmatpush1.bf16.xpose.msra.mxu0 0
    %1926 = vmatprep.subr.bf16.mxu0 0
    %1927 = vmatpush1.bf16.xpose.msra.mxu0 0
    %1928 = vmatprep.subr.bf16.mxu0 0
    %1929 = vmatpush1.bf16.xpose.msra.mxu0 0
    %1930 = vmatprep.subr.bf16.mxu0 0
    %1931 = vmatpush1.bf16.xpose.msra.mxu0 0
    %1932 = vmatprep.subr.bf16.mxu0 0
    %1933 = vmatpush1.bf16.xpose.msra.mxu0 0
    %1934 = vmatprep.subr.bf16.mxu0 0
    %1935 = vmatpush1.bf16.xpose.msra.mxu0 0
    %1936 = vmatprep.subr.bf16.mxu0 %v1323
    %1937 = vmatpush1.bf16.xpose.msra.mxu0 %v1322
    %1938 = vmatprep.subr.bf16.mxu0 %v1287
    %1939 = vmatpush1.bf16.xpose.msra.mxu0 %v1286
    %1940 = vmatprep.subr.bf16.mxu0 0
    %1941 = vmatpush2.bf16.xpose.msra.mxu0 0
    %1942 = vmatprep.subr.bf16.mxu0 0
    %1943 = vmatpush2.bf16.xpose.msra.mxu0 0
    %1944 = vmatprep.subr.bf16.mxu0 0
    %1945 = vmatpush2.bf16.xpose.msra.mxu0 0
    %1946 = vmatprep.subr.bf16.mxu0 0
    %1947 = vmatpush2.bf16.xpose.msra.mxu0 0
    %1948 = vmatprep.subr.bf16.mxu0 0
    %1949 = vmatpush2.bf16.xpose.msra.mxu0 0
    %1950 = vmatprep.subr.bf16.mxu0 0
    %1951 = vmatpush2.bf16.xpose.msra.mxu0 0
    %1952 = vmatprep.subr.bf16.mxu0 0
    %1953 = vmatpush2.bf16.xpose.msra.mxu0 0
    %1954 = vmatprep.subr.bf16.mxu0 0
    %1955 = vmatpush2.bf16.xpose.msra.mxu0 0
    %1956 = vmatprep.mubr.bf16.mxu0 %v963
    %1957 = vmatmul.mubr.bf16.gmra.mxu0 %v962
    %v1958 = vpop.f32.mrf.mxu0
    %v1959 = vadd.f32 %v1919, %v1958
    %v1960 = vpop.f32.mrf.mxu0
    %v1961 = vpop.f32.mrf.mxu0
    %v1962 = vpop.f32.mrf.mxu0
    %1963 = vdwg.mxu0
    %1964 = vmatprep.subr.bf16.mxu0 0
    %1965 = vmatpush1.bf16.xpose.msra.mxu0 0
    %1966 = vmatprep.subr.bf16.mxu0 0
    %1967 = vmatpush1.bf16.xpose.msra.mxu0 0
    %1968 = vmatprep.subr.bf16.mxu0 0
    %1969 = vmatpush1.bf16.xpose.msra.mxu0 0
    %1970 = vmatprep.subr.bf16.mxu0 0
    %1971 = vmatpush1.bf16.xpose.msra.mxu0 0
    %1972 = vmatprep.subr.bf16.mxu0 0
    %1973 = vmatpush1.bf16.xpose.msra.mxu0 0
    %1974 = vmatprep.subr.bf16.mxu0 0
    %1975 = vmatpush1.bf16.xpose.msra.mxu0 0
    %1976 = vmatprep.subr.bf16.mxu0 %v1325
    %1977 = vmatpush1.bf16.xpose.msra.mxu0 %v1324
    %1978 = vmatprep.subr.bf16.mxu0 %v1289
    %1979 = vmatpush1.bf16.xpose.msra.mxu0 %v1288
    %1980 = vmatprep.subr.bf16.mxu0 0
    %1981 = vmatpush2.bf16.xpose.msra.mxu0 0
    %1982 = vmatprep.subr.bf16.mxu0 0
    %1983 = vmatpush2.bf16.xpose.msra.mxu0 0
    %1984 = vmatprep.subr.bf16.mxu0 0
    %1985 = vmatpush2.bf16.xpose.msra.mxu0 0
    %1986 = vmatprep.subr.bf16.mxu0 0
    %1987 = vmatpush2.bf16.xpose.msra.mxu0 0
    %1988 = vmatprep.subr.bf16.mxu0 0
    %1989 = vmatpush2.bf16.xpose.msra.mxu0 0
    %1990 = vmatprep.subr.bf16.mxu0 0
    %1991 = vmatpush2.bf16.xpose.msra.mxu0 0
    %1992 = vmatprep.subr.bf16.mxu0 0
    %1993 = vmatpush2.bf16.xpose.msra.mxu0 0
    %1994 = vmatprep.subr.bf16.mxu0 0
    %1995 = vmatpush2.bf16.xpose.msra.mxu0 0
    %1996 = vmatprep.mubr.bf16.mxu0 %v965
    %1997 = vmatmul.mubr.bf16.gmra.mxu0 %v964
    %v1998 = vpop.f32.mrf.mxu0
    %v1999 = vadd.f32 %v1959, %v1998
    %v2000 = vpop.f32.mrf.mxu0
    %v2001 = vpop.f32.mrf.mxu0
    %v2002 = vpop.f32.mrf.mxu0
    %2003 = vdwg.mxu0
    %2004 = vmatprep.subr.bf16.mxu0 0
    %2005 = vmatpush1.bf16.xpose.msra.mxu0 0
    %2006 = vmatprep.subr.bf16.mxu0 0
    %2007 = vmatpush1.bf16.xpose.msra.mxu0 0
    %2008 = vmatprep.subr.bf16.mxu0 0
    %2009 = vmatpush1.bf16.xpose.msra.mxu0 0
    %2010 = vmatprep.subr.bf16.mxu0 0
    %2011 = vmatpush1.bf16.xpose.msra.mxu0 0
    %2012 = vmatprep.subr.bf16.mxu0 0
    %2013 = vmatpush1.bf16.xpose.msra.mxu0 0
    %2014 = vmatprep.subr.bf16.mxu0 0
    %2015 = vmatpush1.bf16.xpose.msra.mxu0 0
    %2016 = vmatprep.subr.bf16.mxu0 %v1327
    %2017 = vmatpush1.bf16.xpose.msra.mxu0 %v1326
    %2018 = vmatprep.subr.bf16.mxu0 %v1291
    %2019 = vmatpush1.bf16.xpose.msra.mxu0 %v1290
    %2020 = vmatprep.subr.bf16.mxu0 0
    %2021 = vmatpush2.bf16.xpose.msra.mxu0 0
    %2022 = vmatprep.subr.bf16.mxu0 0
    %2023 = vmatpush2.bf16.xpose.msra.mxu0 0
    %2024 = vmatprep.subr.bf16.mxu0 0
    %2025 = vmatpush2.bf16.xpose.msra.mxu0 0
    %2026 = vmatprep.subr.bf16.mxu0 0
    %2027 = vmatpush2.bf16.xpose.msra.mxu0 0
    %2028 = vmatprep.subr.bf16.mxu0 0
    %2029 = vmatpush2.bf16.xpose.msra.mxu0 0
    %2030 = vmatprep.subr.bf16.mxu0 0
    %2031 = vmatpush2.bf16.xpose.msra.mxu0 0
    %2032 = vmatprep.subr.bf16.mxu0 0
    %2033 = vmatpush2.bf16.xpose.msra.mxu0 0
    %2034 = vmatprep.subr.bf16.mxu0 0
    %2035 = vmatpush2.bf16.xpose.msra.mxu0 0
    %2036 = vmatprep.mubr.bf16.mxu0 %v967
    %2037 = vmatmul.mubr.bf16.gmra.mxu0 %v966
    %v2038 = vpop.f32.mrf.mxu0
    %v2039 = vadd.f32 %v1999, %v2038
    %v2040 = vpop.f32.mrf.mxu0
    %v2041 = vpop.f32.mrf.mxu0
    %v2042 = vpop.f32.mrf.mxu0
    %2043 = vdwg.mxu0
    %2044 = vmatprep.subr.bf16.mxu0 0
    %2045 = vmatpush1.bf16.xpose.msra.mxu0 0
    %2046 = vmatprep.subr.bf16.mxu0 0
    %2047 = vmatpush1.bf16.xpose.msra.mxu0 0
    %2048 = vmatprep.subr.bf16.mxu0 0
    %2049 = vmatpush1.bf16.xpose.msra.mxu0 0
    %2050 = vmatprep.subr.bf16.mxu0 0
    %2051 = vmatpush1.bf16.xpose.msra.mxu0 0
    %2052 = vmatprep.subr.bf16.mxu0 0
    %2053 = vmatpush1.bf16.xpose.msra.mxu0 0
    %2054 = vmatprep.subr.bf16.mxu0 0
    %2055 = vmatpush1.bf16.xpose.msra.mxu0 0
    %2056 = vmatprep.subr.bf16.mxu0 %v1329
    %2057 = vmatpush1.bf16.xpose.msra.mxu0 %v1328
    %2058 = vmatprep.subr.bf16.mxu0 %v1293
    %2059 = vmatpush1.bf16.xpose.msra.mxu0 %v1292
    %2060 = vmatprep.subr.bf16.mxu0 0
    %2061 = vmatpush2.bf16.xpose.msra.mxu0 0
    %2062 = vmatprep.subr.bf16.mxu0 0
    %2063 = vmatpush2.bf16.xpose.msra.mxu0 0
    %2064 = vmatprep.subr.bf16.mxu0 0
    %2065 = vmatpush2.bf16.xpose.msra.mxu0 0
    %2066 = vmatprep.subr.bf16.mxu0 0
    %2067 = vmatpush2.bf16.xpose.msra.mxu0 0
    %2068 = vmatprep.subr.bf16.mxu0 0
    %2069 = vmatpush2.bf16.xpose.msra.mxu0 0
    %2070 = vmatprep.subr.bf16.mxu0 0
    %2071 = vmatpush2.bf16.xpose.msra.mxu0 0
    %2072 = vmatprep.subr.bf16.mxu0 0
    %2073 = vmatpush2.bf16.xpose.msra.mxu0 0
    %2074 = vmatprep.subr.bf16.mxu0 0
    %2075 = vmatpush2.bf16.xpose.msra.mxu0 0
    %2076 = vmatprep.mubr.bf16.mxu0 %v969
    %2077 = vmatmul.mubr.bf16.gmra.mxu0 %v968
    %v2078 = vpop.f32.mrf.mxu0
    %v2079 = vadd.f32 %v2039, %v2078
    %v2080 = vpop.f32.mrf.mxu0
    %v2081 = vpop.f32.mrf.mxu0
    %v2082 = vpop.f32.mrf.mxu0
    %2083 = vdwg.mxu0
    %2084 = vmatprep.subr.bf16.mxu0 0
    %2085 = vmatpush1.bf16.xpose.msra.mxu0 0
    %2086 = vmatprep.subr.bf16.mxu0 0
    %2087 = vmatpush1.bf16.xpose.msra.mxu0 0
    %2088 = vmatprep.subr.bf16.mxu0 0
    %2089 = vmatpush1.bf16.xpose.msra.mxu0 0
    %2090 = vmatprep.subr.bf16.mxu0 0
    %2091 = vmatpush1.bf16.xpose.msra.mxu0 0
    %2092 = vmatprep.subr.bf16.mxu0 0
    %2093 = vmatpush1.bf16.xpose.msra.mxu0 0
    %2094 = vmatprep.subr.bf16.mxu0 0
    %2095 = vmatpush1.bf16.xpose.msra.mxu0 0
    %2096 = vmatprep.subr.bf16.mxu0 %v1331
    %2097 = vmatpush1.bf16.xpose.msra.mxu0 %v1330
    %2098 = vmatprep.subr.bf16.mxu0 %v1295
    %2099 = vmatpush1.bf16.xpose.msra.mxu0 %v1294
    %2100 = vmatprep.subr.bf16.mxu0 0
    %2101 = vmatpush2.bf16.xpose.msra.mxu0 0
    %2102 = vmatprep.subr.bf16.mxu0 0
    %2103 = vmatpush2.bf16.xpose.msra.mxu0 0
    %2104 = vmatprep.subr.bf16.mxu0 0
    %2105 = vmatpush2.bf16.xpose.msra.mxu0 0
    %2106 = vmatprep.subr.bf16.mxu0 0
    %2107 = vmatpush2.bf16.xpose.msra.mxu0 0
    %2108 = vmatprep.subr.bf16.mxu0 0
    %2109 = vmatpush2.bf16.xpose.msra.mxu0 0
    %2110 = vmatprep.subr.bf16.mxu0 0
    %2111 = vmatpush2.bf16.xpose.msra.mxu0 0
    %2112 = vmatprep.subr.bf16.mxu0 0
    %2113 = vmatpush2.bf16.xpose.msra.mxu0 0
    %2114 = vmatprep.subr.bf16.mxu0 0
    %2115 = vmatpush2.bf16.xpose.msra.mxu0 0
    %2116 = vmatprep.mubr.bf16.mxu0 %v971
    %2117 = vmatmul.mubr.bf16.gmra.mxu0 %v970
    %v2118 = vpop.f32.mrf.mxu0
    %v2119 = vadd.f32 %v2079, %v2118
    %v2120 = vpop.f32.mrf.mxu0
    %v2121 = vpop.f32.mrf.mxu0
    %v2122 = vpop.f32.mrf.mxu0
    %2123 = vdwg.mxu0
    %v2124 = vld [vmem:[#allocation11] sm:$0xff]
    %v2125 = vld [vmem:[#allocation11 + $0x8] sm:$0xff]
    %v2126 = vld [vmem:[#allocation11 + $0x10] sm:$0xff]
    %v2127 = vlaneseq
    %v2128 = vand.u32 %v2127, 127
    %2129 = vset.pattern.permute.xlu0 24
    %2130 = vperm.xlu0 %2129, %v127
    %v2131 = vpop.permute.xlu0 %2130
    %2132 = vset.pattern.permute.xlu0 24
    %2133 = vperm.xlu0 %2132, %v128
    %v2134 = vpop.permute.xlu0 %2133
    %2135 = vset.pattern.permute.xlu0 24
    %2136 = vperm.xlu0 %2135, %v129
    %v2137 = vpop.permute.xlu0 %2136
    %vm2138 = vcmp.eq.s32.totalorder %v2128, %v2131
    %vm2139 = vcmp.eq.s32.totalorder %v2128, %v2134
    %vm2140 = vcmp.eq.s32.totalorder %v2128, %v2137
    %v2141 = vsel %vm2138, 1.0, 0.0
    %v2142 = vsel %vm2139, 1.0, 0.0
    %v2143 = vsel %vm2140, 1.0, 0.0
    %vm2144 = vcmask 195584
    %v2146 = vsel %vm2144, %v2141, 0
    %v2149 = vsel %vm2144, %v2142, 0
    %v2152 = vsel %vm2144, %v2143, 0
    %2154 = vmatprep.subr.mxu0 0.0
    %2155 = vmatpush1.msra.mxu0 0.0
    %2156 = vmatprep.subr.mxu0 0.0
    %2157 = vmatpush1.msra.mxu0 0.0
    %2158 = vmatprep.subr.mxu0 0.0
    %2159 = vmatpush1.msra.mxu0 0.0
    %2160 = vmatprep.subr.mxu0 0.0
    %2161 = vmatpush1.msra.mxu0 0.0
    %2162 = vmatprep.subr.mxu0 0.0
    %2163 = vmatpush1.msra.mxu0 0.0
    %2164 = vmatprep.subr.mxu0 0.0
    %2165 = vmatpush1.msra.mxu0 0.0
    %2166 = vmatprep.subr.mxu0 0.0
    %2167 = vmatpush1.msra.mxu0 0.0
    %2168 = vmatprep.subr.mxu0 0.0
    %2169 = vmatpush1.msra.mxu0 0.0
    %2170 = vmatprep.subr.mxu0 0.0
    %2171 = vmatpush1.msra.mxu0 0.0
    %2172 = vmatprep.subr.mxu0 0.0
    %2173 = vmatpush1.msra.mxu0 0.0
    %2174 = vmatprep.subr.mxu0 0.0
    %2175 = vmatpush1.msra.mxu0 0.0
    %2176 = vmatprep.subr.mxu0 0.0
    %2177 = vmatpush1.msra.mxu0 0.0
    %2178 = vmatprep.subr.mxu0 0.0
    %2179 = vmatpush1.msra.mxu0 0.0
    %2180 = vmatprep.subr.mxu0 0.0
    %2181 = vmatpush1.msra.mxu0 %v2126
    %2182 = vmatprep.subr.mxu0 0.0
    %2183 = vmatpush1.msra.mxu0 %v2125
    %2184 = vmatprep.subr.mxu0 0.0
    %2185 = vmatpush1.msra.mxu0 %v2124
    %2186 = vmatprep.subr.mxu0 0.0
    %2187 = vmatpush2.msra.mxu0 0.0
    %2188 = vmatprep.subr.mxu0 0.0
    %2189 = vmatpush2.msra.mxu0 0.0
    %2190 = vmatprep.subr.mxu0 0.0
    %2191 = vmatpush2.msra.mxu0 0.0
    %2192 = vmatprep.subr.mxu0 0.0
    %2193 = vmatpush2.msra.mxu0 0.0
    %2194 = vmatprep.subr.mxu0 0.0
    %2195 = vmatpush2.msra.mxu0 0.0
    %2196 = vmatprep.subr.mxu0 0.0
    %2197 = vmatpush2.msra.mxu0 0.0
    %2198 = vmatprep.subr.mxu0 0.0
    %2199 = vmatpush2.msra.mxu0 0.0
    %2200 = vmatprep.subr.mxu0 0.0
    %2201 = vmatpush2.msra.mxu0 0.0
    %2202 = vmatprep.subr.mxu0 0.0
    %2203 = vmatpush2.msra.mxu0 0.0
    %2204 = vmatprep.subr.mxu0 0.0
    %2205 = vmatpush2.msra.mxu0 0.0
    %2206 = vmatprep.subr.mxu0 0.0
    %2207 = vmatpush2.msra.mxu0 0.0
    %2208 = vmatprep.subr.mxu0 0.0
    %2209 = vmatpush2.msra.mxu0 0.0
    %2210 = vmatprep.subr.mxu0 0.0
    %2211 = vmatpush2.msra.mxu0 0.0
    %2212 = vmatprep.subr.mxu0 0.0
    %2213 = vmatpush2.msra.mxu0 0.0
    %2214 = vmatprep.subr.mxu0 0.0
    %2215 = vmatpush2.msra.mxu0 0.0
    %2216 = vmatprep.subr.mxu0 0.0
    %2217 = vmatpush2.msra.mxu0 0.0
    %2218 = vmatprep.mubr.f32.mxu0 0.0
    %2219 = vmatmul.mubr.f32.gmra.mxu0 %v2146
    %v2220 = vpop.f32.mrf.mxu0
    %v2221 = vadd.f32 0.0, %v2220
    %v2222 = vpop.f32.mrf.mxu0
    %2223 = vmatprep.mubr.f32.mxu0 0.0
    %2224 = vmatmul.mubr.f32.gmra.mxu0 %v2149
    %v2225 = vpop.f32.mrf.mxu0
    %v2226 = vadd.f32 0.0, %v2225
    %v2227 = vpop.f32.mrf.mxu0
    %2228 = vmatprep.mubr.f32.mxu0 0.0
    %2229 = vmatmul.mubr.f32.gmra.mxu0 %v2152
    %v2230 = vpop.f32.mrf.mxu0
    %v2231 = vadd.f32 0.0, %v2230
    %v2232 = vpop.f32.mrf.mxu0
    %2233 = vdwg.mxu0
    %v2234 = vadd.f32 %v894, %v2221
    %v2235 = vadd.f32 %v897, %v2226
    %v2236 = vadd.f32 %v2119, %v2231
    %v2237 = vlaneseq
    %v2238 = vshrl.u32 %v2237, 7
    %v2239 = vadd.s32 %v2238, 8
    %v2240 = vadd.s32 %v2238, 16
    %v2241 = vlaneseq
    %v2242 = vshrl.u32 %v2241, 7
    %v2243 = vsub.s32 0, %v2242
    %v2244 = vrot.slane %v125, %v2243
    %vm2245 = vcmp.eq.s32.totalorder %v2238, %v2244
    %vm2246 = vcmp.eq.s32.totalorder %v2239, %v2244
    %vm2247 = vcmp.eq.s32.totalorder %v2240, %v2244
    %v2248 = vsel %vm2245, 1.0, 0.0
    %v2249 = vsel %vm2246, 1.0, 0.0
    %v2250 = vsel %vm2247, 1.0, 0.0
    %v2251 = vpack.c.bf16 %v2249, %v2248
    %v2252 = vpack.c.bf16 %v2250, %v2250
    %v2253 = vlaneseq
    %v2254 = vshrl.u32 %v2253, 7
    %v2255 = vsub.s32 0, %v2254
    %v2256 = vrot.slane %v126, %v2255
    %vm2257 = vcmp.eq.s32.totalorder %v2238, %v2256
    %vm2258 = vcmp.eq.s32.totalorder %v2239, %v2256
    %vm2259 = vcmp.eq.s32.totalorder %v2240, %v2256
    %v2260 = vsel %vm2257, 1.0, 0.0
    %v2261 = vsel %vm2258, 1.0, 0.0
    %v2262 = vsel %vm2259, 1.0, 0.0
    %v2263 = vpack.c.bf16 %v2261, %v2260
    %v2264 = vpack.c.bf16 %v2262, %v2262
    %v2266 = vsel %vm2144, %v2251, 0
    %v2269 = vsel %vm2144, %v2252, 0
    %v2272 = vsel %vm2144, %v2263, 0
    %v2275 = vsel %vm2144, %v2264, 0
    %2277 = vmatprep.subr.bf16.mxu0 0
    %2278 = vmatpush1.bf16.xpose.msra.mxu0 0
    %2279 = vmatprep.subr.bf16.mxu0 0
    %2280 = vmatpush1.bf16.xpose.msra.mxu0 0
    %2281 = vmatprep.subr.bf16.mxu0 0
    %2282 = vmatpush1.bf16.xpose.msra.mxu0 0
    %2283 = vmatprep.subr.bf16.mxu0 0
    %2284 = vmatpush1.bf16.xpose.msra.mxu0 0
    %2285 = vmatprep.subr.bf16.mxu0 0
    %2286 = vmatpush1.bf16.xpose.msra.mxu0 0
    %2287 = vmatprep.subr.bf16.mxu0 0
    %2288 = vmatpush1.bf16.xpose.msra.mxu0 0
    %2289 = vmatprep.subr.bf16.mxu0 0
    %2290 = vmatpush1.bf16.xpose.msra.mxu0 %v2275
    %2291 = vmatprep.subr.bf16.mxu0 0
    %2292 = vmatpush1.bf16.xpose.msra.mxu0 %v2272
    %2293 = vmatprep.subr.bf16.mxu0 0
    %2294 = vmatpush2.bf16.xpose.msra.mxu0 0
    %2295 = vmatprep.subr.bf16.mxu0 0
    %2296 = vmatpush2.bf16.xpose.msra.mxu0 0
    %2297 = vmatprep.subr.bf16.mxu0 0
    %2298 = vmatpush2.bf16.xpose.msra.mxu0 0
    %2299 = vmatprep.subr.bf16.mxu0 0
    %2300 = vmatpush2.bf16.xpose.msra.mxu0 0
    %2301 = vmatprep.subr.bf16.mxu0 0
    %2302 = vmatpush2.bf16.xpose.msra.mxu0 0
    %2303 = vmatprep.subr.bf16.mxu0 0
    %2304 = vmatpush2.bf16.xpose.msra.mxu0 0
    %2305 = vmatprep.subr.bf16.mxu0 0
    %2306 = vmatpush2.bf16.xpose.msra.mxu0 0
    %2307 = vmatprep.subr.bf16.mxu0 0
    %2308 = vmatpush2.bf16.xpose.msra.mxu0 0
    %2309 = vmatprep.mubr.bf16.mxu0 0
    %2310 = vmatmul.mubr.bf16.gmra.mxu0 %v2266
    %v2311 = vpop.f32.mrf.mxu0
    %v2312 = vadd.f32 0.0, %v2311
    %v2313 = vpop.f32.mrf.mxu0
    %v2314 = vpop.f32.mrf.mxu0
    %v2315 = vadd.f32 0.0, %v2314
    %v2316 = vpop.f32.mrf.mxu0
    %2317 = vmatprep.mubr.bf16.mxu0 0
    %2318 = vmatmul.mubr.bf16.gmra.mxu0 %v2269
    %v2319 = vpop.f32.mrf.mxu0
    %v2320 = vadd.f32 0.0, %v2319
    %v2321 = vpop.f32.mrf.mxu0
    %v2322 = vpop.f32.mrf.mxu0
    %v2323 = vpop.f32.mrf.mxu0
    %2324 = vdwg.mxu0
    %2325 = vmatprep.subr.bf16.mxu0 0
    %2326 = vmatpush1.bf16.xpose.msra.mxu0 0
    %2327 = vmatprep.subr.bf16.mxu0 0
    %2328 = vmatpush1.bf16.xpose.msra.mxu0 0
    %2329 = vmatprep.subr.bf16.mxu0 0
    %2330 = vmatpush1.bf16.xpose.msra.mxu0 0
    %2331 = vmatprep.subr.bf16.mxu0 0
    %2332 = vmatpush1.bf16.xpose.msra.mxu0 0
    %2333 = vmatprep.subr.bf16.mxu0 0
    %2334 = vmatpush1.bf16.xpose.msra.mxu0 0
    %2335 = vmatprep.subr.bf16.mxu0 0
    %2336 = vmatpush1.bf16.xpose.msra.mxu0 0
    %2337 = vmatprep.subr.bf16.mxu0 0
    %2338 = vmatpush1.bf16.xpose.msra.mxu0 %v2269
    %2339 = vmatprep.subr.bf16.mxu0 0
    %2340 = vmatpush1.bf16.xpose.msra.mxu0 %v2266
    %2341 = vmatprep.subr.bf16.mxu0 0
    %2342 = vmatpush2.bf16.xpose.msra.mxu0 0
    %2343 = vmatprep.subr.bf16.mxu0 0
    %2344 = vmatpush2.bf16.xpose.msra.mxu0 0
    %2345 = vmatprep.subr.bf16.mxu0 0
    %2346 = vmatpush2.bf16.xpose.msra.mxu0 0
    %2347 = vmatprep.subr.bf16.mxu0 0
    %2348 = vmatpush2.bf16.xpose.msra.mxu0 0
    %2349 = vmatprep.subr.bf16.mxu0 0
    %2350 = vmatpush2.bf16.xpose.msra.mxu0 0
    %2351 = vmatprep.subr.bf16.mxu0 0
    %2352 = vmatpush2.bf16.xpose.msra.mxu0 0
    %2353 = vmatprep.subr.bf16.mxu0 0
    %2354 = vmatpush2.bf16.xpose.msra.mxu0 0
    %2355 = vmatprep.subr.bf16.mxu0 0
    %2356 = vmatpush2.bf16.xpose.msra.mxu0 0
    %2357 = vmatprep.mubr.bf16.mxu0 0
    %2358 = vmatmul.mubr.bf16.gmra.mxu0 %v2272
    %v2359 = vpop.f32.mrf.mxu0
    %v2360 = vadd.f32 %v2312, %v2359
    %v2361 = vpop.f32.mrf.mxu0
    %v2362 = vpop.f32.mrf.mxu0
    %v2363 = vadd.f32 %v2315, %v2362
    %v2364 = vpop.f32.mrf.mxu0
    %2365 = vmatprep.mubr.bf16.mxu0 0
    %2366 = vmatmul.mubr.bf16.gmra.mxu0 %v2275
    %v2367 = vpop.f32.mrf.mxu0
    %v2368 = vadd.f32 %v2320, %v2367
    %v2369 = vpop.f32.mrf.mxu0
    %v2370 = vpop.f32.mrf.mxu0
    %v2371 = vpop.f32.mrf.mxu0
    %2372 = vdwg.mxu0
    %v2373 = vsel %vm2144, %v2360, 0.0
    %2374 = vadd.xlane.f32.xlu0 %v2373
    %v2375 = vpop.xlane.xlu0 %2374
    %v2376 = vsel %vm2144, %v2363, 0.0
    %2377 = vadd.xlane.f32.xlu0 %v2376
    %v2378 = vpop.xlane.xlu0 %2377
    %v2379 = vsel %vm2144, %v2368, 0.0
    %2380 = vadd.xlane.f32.xlu0 %v2379
    %v2381 = vpop.xlane.xlu0 %2380
    %v2382 = vmax.f32 %v2375, 1.0
    %v2383 = vmax.f32 %v2378, 1.0
    %v2384 = vmax.f32 %v2381, 1.0
    %v2385 = vrcp.pop %v2382
    %v2386 = vmul.f32 %v2360, %v2385
    %v2387 = vrcp.pop %v2383
    %v2388 = vmul.f32 %v2363, %v2387
    %v2389 = vrcp.pop %v2384
    %v2390 = vmul.f32 %v2368, %v2389
    %v2391 = vpack.c.bf16 %v2388, %v2386
    %v2392 = vpack.c.bf16 %v2390, %v2390
    %vm2393 = vcmp.lt.s32.totalorder %v2238, 16
    %vm2394 = vcmp.lt.s32.totalorder %v2239, 16
    %vm2395 = vcmp.lt.s32.totalorder %v2240, 16
    %v2396 = vld [vmem:[#allocation10] sm:$0xf]
    %v2397 = vld [vmem:[#allocation10 + $0xc] sm:$0xf]
    %v2398 = vld [vmem:[#allocation10 + $0x18] sm:$0xf]
    %v2399 = vld [vmem:[#allocation10 + $0x24] sm:$0xf]
    %v2400 = vpack.c.bf16 %v2235, %v2234
    %v2401 = vpack.c.bf16 %v2236, %v2236
    %v2403 = vsel %vm2144, %v2391, 0
    %v2406 = vsel %vm2144, %v2392, 0
    %vm2408 = vcmask 1043456
    %v2410 = vsel %vm2408, %v2401, 0
    %2412 = vmatprep.subr.bf16.mxu0 0
    %2413 = vmatpush1.bf16.msra.mxu0 0
    %2414 = vmatprep.subr.bf16.mxu0 0
    %2415 = vmatpush1.bf16.msra.mxu0 0
    %2416 = vmatprep.subr.bf16.mxu0 0
    %2417 = vmatpush1.bf16.msra.mxu0 0
    %2418 = vmatprep.subr.bf16.mxu0 0
    %2419 = vmatpush1.bf16.msra.mxu0 0
    %2420 = vmatprep.subr.bf16.mxu0 0
    %2421 = vmatpush1.bf16.msra.mxu0 0
    %2422 = vmatprep.subr.bf16.mxu0 0
    %2423 = vmatpush1.bf16.msra.mxu0 0
    %2424 = vmatprep.subr.bf16.mxu0 0
    %2425 = vmatpush1.bf16.msra.mxu0 %v2410
    %2426 = vmatprep.subr.bf16.mxu0 0
    %2427 = vmatpush1.bf16.msra.mxu0 %v2400
    %2428 = vmatprep.subr.bf16.mxu0 0
    %2429 = vmatpush2.bf16.msra.mxu0 0
    %2430 = vmatprep.subr.bf16.mxu0 0
    %2431 = vmatpush2.bf16.msra.mxu0 0
    %2432 = vmatprep.subr.bf16.mxu0 0
    %2433 = vmatpush2.bf16.msra.mxu0 0
    %2434 = vmatprep.subr.bf16.mxu0 0
    %2435 = vmatpush2.bf16.msra.mxu0 0
    %2436 = vmatprep.subr.bf16.mxu0 0
    %2437 = vmatpush2.bf16.msra.mxu0 0
    %2438 = vmatprep.subr.bf16.mxu0 0
    %2439 = vmatpush2.bf16.msra.mxu0 0
    %2440 = vmatprep.subr.bf16.mxu0 0
    %2441 = vmatpush2.bf16.msra.mxu0 0
    %2442 = vmatprep.subr.bf16.mxu0 0
    %2443 = vmatpush2.bf16.msra.mxu0 0
    %2444 = vmatprep.mubr.bf16.mxu0 0
    %2445 = vmatmul.mubr.bf16.gmra.mxu0 %v2403
    %v2446 = vpop.f32.mrf.mxu0
    %v2447 = vadd.f32 0.0, %v2446
    %v2448 = vpop.f32.mrf.mxu0
    %v2449 = vpop.f32.mrf.mxu0
    %v2450 = vadd.f32 0.0, %v2449
    %v2451 = vpop.f32.mrf.mxu0
    %2452 = vmatprep.mubr.bf16.mxu0 0
    %2453 = vmatmul.mubr.bf16.gmra.mxu0 %v2406
    %v2454 = vpop.f32.mrf.mxu0
    %v2455 = vadd.f32 0.0, %v2454
    %v2456 = vpop.f32.mrf.mxu0
    %v2457 = vpop.f32.mrf.mxu0
    %v2458 = vpop.f32.mrf.mxu0
    %2459 = vdwg.mxu0
    %v2460 = vpack.c.bf16 %v2450, %v2447
    %v2461 = vpack.c.bf16 %v2455, %v2455
    %v2466 = vunpack.c.l.b16 %v2396
    %v2467 = vunpack.c.l.b16 %v2397
    %v2468 = vunpack.c.l.b16 %v2398
    %v2469 = vunpack.c.l.b16 %v2399
    %v2470 = vpack.c.b16 %v2467, %v2466
    %v2471 = vpack.c.b16 %v2469, %v2468
    %2472 = vrot.lane.b32.xlu0 %v2470, 64
    %v2473 = vpop.permute.xlu0 %2472
    %2474 = vrot.lane.b32.xlu0 %v2471, 64
    %v2475 = vpop.permute.xlu0 %2474
    %vm2478 = vcmask 261120
    %v2480 = vsel %vm2478, %v2400, 0
    %v2482 = vsel %vm2478, %v2401, 0
    %2484 = vmatprep.subr.bf16.mxu0 0
    %2485 = vmatpush1.bf16.msra.mxu0 0
    %2486 = vmatprep.subr.bf16.mxu0 0
    %2487 = vmatpush1.bf16.msra.mxu0 0
    %2488 = vmatprep.subr.bf16.mxu0 0
    %2489 = vmatpush1.bf16.msra.mxu0 0
    %2490 = vmatprep.subr.bf16.mxu0 0
    %2491 = vmatpush1.bf16.msra.mxu0 0
    %2492 = vmatprep.subr.bf16.mxu0 0
    %2493 = vmatpush1.bf16.msra.mxu0 0
    %2494 = vmatprep.subr.bf16.mxu0 0
    %2495 = vmatpush1.bf16.msra.mxu0 0
    %2496 = vmatprep.subr.bf16.mxu0 0
    %2497 = vmatpush1.bf16.msra.mxu0 %v2475
    %2498 = vmatprep.subr.bf16.mxu0 0
    %2499 = vmatpush1.bf16.msra.mxu0 %v2473
    %2500 = vmatprep.subr.bf16.mxu0 0
    %2501 = vmatpush2.bf16.msra.mxu0 0
    %2502 = vmatprep.subr.bf16.mxu0 0
    %2503 = vmatpush2.bf16.msra.mxu0 0
    %2504 = vmatprep.subr.bf16.mxu0 0
    %2505 = vmatpush2.bf16.msra.mxu0 0
    %2506 = vmatprep.subr.bf16.mxu0 0
    %2507 = vmatpush2.bf16.msra.mxu0 0
    %2508 = vmatprep.subr.bf16.mxu0 0
    %2509 = vmatpush2.bf16.msra.mxu0 0
    %2510 = vmatprep.subr.bf16.mxu0 0
    %2511 = vmatpush2.bf16.msra.mxu0 0
    %2512 = vmatprep.subr.bf16.mxu0 0
    %2513 = vmatpush2.bf16.msra.mxu0 0
    %2514 = vmatprep.subr.bf16.mxu0 0
    %2515 = vmatpush2.bf16.msra.mxu0 0
    %2516 = vmatprep.mubr.bf16.mxu0 0
    %2517 = vmatmul.mubr.bf16.gmra.mxu0 %v2480
    %v2518 = vpop.f32.mrf.mxu0
    %v2519 = vadd.f32 0.0, %v2518
    %v2520 = vpop.f32.mrf.mxu0
    %v2521 = vpop.f32.mrf.mxu0
    %v2522 = vadd.f32 0.0, %v2521
    %v2523 = vpop.f32.mrf.mxu0
    %2524 = vmatprep.mubr.bf16.mxu0 0
    %2525 = vmatmul.mubr.bf16.gmra.mxu0 %v2482
    %v2526 = vpop.f32.mrf.mxu0
    %v2527 = vadd.f32 0.0, %v2526
    %v2528 = vpop.f32.mrf.mxu0
    %v2529 = vpop.f32.mrf.mxu0
    %v2530 = vpop.f32.mrf.mxu0
    %2531 = vdwg.mxu0
    %v2535 = vsel %vm2478, %v2460, 0
    %v2538 = vsel %vm2478, %v2461, 0
    %2540 = vmatprep.subr.bf16.mxu0 0
    %2541 = vmatpush1.bf16.msra.mxu0 0
    %2542 = vmatprep.subr.bf16.mxu0 0
    %2543 = vmatpush1.bf16.msra.mxu0 0
    %2544 = vmatprep.subr.bf16.mxu0 0
    %2545 = vmatpush1.bf16.msra.mxu0 0
    %2546 = vmatprep.subr.bf16.mxu0 0
    %2547 = vmatpush1.bf16.msra.mxu0 0
    %2548 = vmatprep.subr.bf16.mxu0 0
    %2549 = vmatpush1.bf16.msra.mxu0 0
    %2550 = vmatprep.subr.bf16.mxu0 0
    %2551 = vmatpush1.bf16.msra.mxu0 0
    %2552 = vmatprep.subr.bf16.mxu0 0
    %2553 = vmatpush1.bf16.msra.mxu0 %v2471
    %2554 = vmatprep.subr.bf16.mxu0 0
    %2555 = vmatpush1.bf16.msra.mxu0 %v2470
    %2556 = vmatprep.subr.bf16.mxu0 0
    %2557 = vmatpush2.bf16.msra.mxu0 0
    %2558 = vmatprep.subr.bf16.mxu0 0
    %2559 = vmatpush2.bf16.msra.mxu0 0
    %2560 = vmatprep.subr.bf16.mxu0 0
    %2561 = vmatpush2.bf16.msra.mxu0 0
    %2562 = vmatprep.subr.bf16.mxu0 0
    %2563 = vmatpush2.bf16.msra.mxu0 0
    %2564 = vmatprep.subr.bf16.mxu0 0
    %2565 = vmatpush2.bf16.msra.mxu0 0
    %2566 = vmatprep.subr.bf16.mxu0 0
    %2567 = vmatpush2.bf16.msra.mxu0 0
    %2568 = vmatprep.subr.bf16.mxu0 0
    %2569 = vmatpush2.bf16.msra.mxu0 0
    %2570 = vmatprep.subr.bf16.mxu0 0
    %2571 = vmatpush2.bf16.msra.mxu0 0
    %2572 = vmatprep.mubr.bf16.mxu0 0
    %2573 = vmatmul.mubr.bf16.gmra.mxu0 %v2535
    %v2574 = vpop.f32.mrf.mxu0
    %v2575 = vadd.f32 %v2519, %v2574
    %v2576 = vpop.f32.mrf.mxu0
    %v2577 = vpop.f32.mrf.mxu0
    %v2578 = vadd.f32 %v2522, %v2577
    %v2579 = vpop.f32.mrf.mxu0
    %2580 = vmatprep.mubr.bf16.mxu0 0
    %2581 = vmatmul.mubr.bf16.gmra.mxu0 %v2538
    %v2582 = vpop.f32.mrf.mxu0
    %v2583 = vadd.f32 %v2527, %v2582
    %v2584 = vpop.f32.mrf.mxu0
    %v2585 = vpop.f32.mrf.mxu0
    %v2586 = vpop.f32.mrf.mxu0
    %2587 = vdwg.mxu0
    %v2588 = vld [vmem:[#allocation11 + $0x18] sm:$0x1]
    %v2589 = vld [vmem:[#allocation11 + $0x1b] sm:$0x1]
    %v2590 = vlaneseq
    %v2591 = vshrl.u32 %v2590, 7
    %v2592 = vsub.s32 0, %v2591
    %v2593 = vrot.slane %v2588, %v2592
    %v2594 = vlaneseq
    %v2595 = vshrl.u32 %v2594, 7
    %v2596 = vsub.s32 0, %v2595
    %v2597 = vrot.slane %v2589, %v2596
    %v2598 = vsel %vm2393, %v2593, %v2597
    %v2599 = vsel %vm2394, %v2593, %v2597
    %v2600 = vsel %vm2395, %v2593, %v2597
    %2604 = vrot.lane.b32.xlu0 %v2575, 96
    %v2605 = vpop.permute.xlu0 %2604
    %2606 = vrot.lane.b32.xlu0 %v2578, 96
    %v2607 = vpop.permute.xlu0 %2606
    %2608 = vrot.lane.b32.xlu0 %v2583, 96
    %v2609 = vpop.permute.xlu0 %2608
    %v2613 = vsel %vm2393, %v2575, %v2605
    %v2614 = vsel %vm2394, %v2578, %v2607
    %v2615 = vsel %vm2395, %v2583, %v2609
    %v2616 = vadd.f32 %v2613, %v2598
    %v2617 = vadd.f32 %v2614, %v2599
    %v2618 = vadd.f32 %v2615, %v2600
    %v2619 = vmax.f32 %v2616, 0.0
    %v2620 = vmax.f32 %v2617, 0.0
    %v2621 = vmax.f32 %v2618, 0.0
    %v2622 = vld [vmem:[#allocation10 + $0x4] sm:$0xf]
    %v2623 = vld [vmem:[#allocation10 + $0x10] sm:$0xf]
    %v2624 = vld [vmem:[#allocation10 + $0x1c] sm:$0xf]
    %v2625 = vld [vmem:[#allocation10 + $0x28] sm:$0xf]
    %v2626 = vpack.c.bf16 %v2620, %v2619
    %v2627 = vpack.c.bf16 %v2621, %v2621
    %v2629 = vsel %vm2408, %v2627, 0
    %2631 = vmatprep.subr.bf16.mxu0 0
    %2632 = vmatpush1.bf16.msra.mxu0 0
    %2633 = vmatprep.subr.bf16.mxu0 0
    %2634 = vmatpush1.bf16.msra.mxu0 0
    %2635 = vmatprep.subr.bf16.mxu0 0
    %2636 = vmatpush1.bf16.msra.mxu0 0
    %2637 = vmatprep.subr.bf16.mxu0 0
    %2638 = vmatpush1.bf16.msra.mxu0 0
    %2639 = vmatprep.subr.bf16.mxu0 0
    %2640 = vmatpush1.bf16.msra.mxu0 0
    %2641 = vmatprep.subr.bf16.mxu0 0
    %2642 = vmatpush1.bf16.msra.mxu0 0
    %2643 = vmatprep.subr.bf16.mxu0 0
    %2644 = vmatpush1.bf16.msra.mxu0 %v2629
    %2645 = vmatprep.subr.bf16.mxu0 0
    %2646 = vmatpush1.bf16.msra.mxu0 %v2626
    %2647 = vmatprep.subr.bf16.mxu0 0
    %2648 = vmatpush2.bf16.msra.mxu0 0
    %2649 = vmatprep.subr.bf16.mxu0 0
    %2650 = vmatpush2.bf16.msra.mxu0 0
    %2651 = vmatprep.subr.bf16.mxu0 0
    %2652 = vmatpush2.bf16.msra.mxu0 0
    %2653 = vmatprep.subr.bf16.mxu0 0
    %2654 = vmatpush2.bf16.msra.mxu0 0
    %2655 = vmatprep.subr.bf16.mxu0 0
    %2656 = vmatpush2.bf16.msra.mxu0 0
    %2657 = vmatprep.subr.bf16.mxu0 0
    %2658 = vmatpush2.bf16.msra.mxu0 0
    %2659 = vmatprep.subr.bf16.mxu0 0
    %2660 = vmatpush2.bf16.msra.mxu0 0
    %2661 = vmatprep.subr.bf16.mxu0 0
    %2662 = vmatpush2.bf16.msra.mxu0 0
    %2663 = vmatprep.mubr.bf16.mxu0 0
    %2664 = vmatmul.mubr.bf16.gmra.mxu0 %v2403
    %v2665 = vpop.f32.mrf.mxu0
    %v2666 = vadd.f32 0.0, %v2665
    %v2667 = vpop.f32.mrf.mxu0
    %v2668 = vpop.f32.mrf.mxu0
    %v2669 = vadd.f32 0.0, %v2668
    %v2670 = vpop.f32.mrf.mxu0
    %2671 = vmatprep.mubr.bf16.mxu0 0
    %2672 = vmatmul.mubr.bf16.gmra.mxu0 %v2406
    %v2673 = vpop.f32.mrf.mxu0
    %v2674 = vadd.f32 0.0, %v2673
    %v2675 = vpop.f32.mrf.mxu0
    %v2676 = vpop.f32.mrf.mxu0
    %v2677 = vpop.f32.mrf.mxu0
    %2678 = vdwg.mxu0
    %v2679 = vpack.c.bf16 %v2669, %v2666
    %v2680 = vpack.c.bf16 %v2674, %v2674
    %v2685 = vunpack.c.l.b16 %v2622
    %v2686 = vunpack.c.l.b16 %v2623
    %v2687 = vunpack.c.l.b16 %v2624
    %v2688 = vunpack.c.l.b16 %v2625
    %v2689 = vpack.c.b16 %v2686, %v2685
    %v2690 = vpack.c.b16 %v2688, %v2687
    %2691 = vrot.lane.b32.xlu0 %v2689, 64
    %v2692 = vpop.permute.xlu0 %2691
    %2693 = vrot.lane.b32.xlu0 %v2690, 64
    %v2694 = vpop.permute.xlu0 %2693
    %v2698 = vsel %vm2478, %v2626, 0
    %v2700 = vsel %vm2478, %v2627, 0
    %2702 = vmatprep.subr.bf16.mxu0 0
    %2703 = vmatpush1.bf16.msra.mxu0 0
    %2704 = vmatprep.subr.bf16.mxu0 0
    %2705 = vmatpush1.bf16.msra.mxu0 0
    %2706 = vmatprep.subr.bf16.mxu0 0
    %2707 = vmatpush1.bf16.msra.mxu0 0
    %2708 = vmatprep.subr.bf16.mxu0 0
    %2709 = vmatpush1.bf16.msra.mxu0 0
    %2710 = vmatprep.subr.bf16.mxu0 0
    %2711 = vmatpush1.bf16.msra.mxu0 0
    %2712 = vmatprep.subr.bf16.mxu0 0
    %2713 = vmatpush1.bf16.msra.mxu0 0
    %2714 = vmatprep.subr.bf16.mxu0 0
    %2715 = vmatpush1.bf16.msra.mxu0 %v2694
    %2716 = vmatprep.subr.bf16.mxu0 0
    %2717 = vmatpush1.bf16.msra.mxu0 %v2692
    %2718 = vmatprep.subr.bf16.mxu0 0
    %2719 = vmatpush2.bf16.msra.mxu0 0
    %2720 = vmatprep.subr.bf16.mxu0 0
    %2721 = vmatpush2.bf16.msra.mxu0 0
    %2722 = vmatprep.subr.bf16.mxu0 0
    %2723 = vmatpush2.bf16.msra.mxu0 0
    %2724 = vmatprep.subr.bf16.mxu0 0
    %2725 = vmatpush2.bf16.msra.mxu0 0
    %2726 = vmatprep.subr.bf16.mxu0 0
    %2727 = vmatpush2.bf16.msra.mxu0 0
    %2728 = vmatprep.subr.bf16.mxu0 0
    %2729 = vmatpush2.bf16.msra.mxu0 0
    %2730 = vmatprep.subr.bf16.mxu0 0
    %2731 = vmatpush2.bf16.msra.mxu0 0
    %2732 = vmatprep.subr.bf16.mxu0 0
    %2733 = vmatpush2.bf16.msra.mxu0 0
    %2734 = vmatprep.mubr.bf16.mxu0 0
    %2735 = vmatmul.mubr.bf16.gmra.mxu0 %v2698
    %v2736 = vpop.f32.mrf.mxu0
    %v2737 = vadd.f32 0.0, %v2736
    %v2738 = vpop.f32.mrf.mxu0
    %v2739 = vpop.f32.mrf.mxu0
    %v2740 = vadd.f32 0.0, %v2739
    %v2741 = vpop.f32.mrf.mxu0
    %2742 = vmatprep.mubr.bf16.mxu0 0
    %2743 = vmatmul.mubr.bf16.gmra.mxu0 %v2700
    %v2744 = vpop.f32.mrf.mxu0
    %v2745 = vadd.f32 0.0, %v2744
    %v2746 = vpop.f32.mrf.mxu0
    %v2747 = vpop.f32.mrf.mxu0
    %v2748 = vpop.f32.mrf.mxu0
    %2749 = vdwg.mxu0
    %v2753 = vsel %vm2478, %v2679, 0
    %v2756 = vsel %vm2478, %v2680, 0
    %2758 = vmatprep.subr.bf16.mxu0 0
    %2759 = vmatpush1.bf16.msra.mxu0 0
    %2760 = vmatprep.subr.bf16.mxu0 0
    %2761 = vmatpush1.bf16.msra.mxu0 0
    %2762 = vmatprep.subr.bf16.mxu0 0
    %2763 = vmatpush1.bf16.msra.mxu0 0
    %2764 = vmatprep.subr.bf16.mxu0 0
    %2765 = vmatpush1.bf16.msra.mxu0 0
    %2766 = vmatprep.subr.bf16.mxu0 0
    %2767 = vmatpush1.bf16.msra.mxu0 0
    %2768 = vmatprep.subr.bf16.mxu0 0
    %2769 = vmatpush1.bf16.msra.mxu0 0
    %2770 = vmatprep.subr.bf16.mxu0 0
    %2771 = vmatpush1.bf16.msra.mxu0 %v2690
    %2772 = vmatprep.subr.bf16.mxu0 0
    %2773 = vmatpush1.bf16.msra.mxu0 %v2689
    %2774 = vmatprep.subr.bf16.mxu0 0
    %2775 = vmatpush2.bf16.msra.mxu0 0
    %2776 = vmatprep.subr.bf16.mxu0 0
    %2777 = vmatpush2.bf16.msra.mxu0 0
    %2778 = vmatprep.subr.bf16.mxu0 0
    %2779 = vmatpush2.bf16.msra.mxu0 0
    %2780 = vmatprep.subr.bf16.mxu0 0
    %2781 = vmatpush2.bf16.msra.mxu0 0
    %2782 = vmatprep.subr.bf16.mxu0 0
    %2783 = vmatpush2.bf16.msra.mxu0 0
    %2784 = vmatprep.subr.bf16.mxu0 0
    %2785 = vmatpush2.bf16.msra.mxu0 0
    %2786 = vmatprep.subr.bf16.mxu0 0
    %2787 = vmatpush2.bf16.msra.mxu0 0
    %2788 = vmatprep.subr.bf16.mxu0 0
    %2789 = vmatpush2.bf16.msra.mxu0 0
    %2790 = vmatprep.mubr.bf16.mxu0 0
    %2791 = vmatmul.mubr.bf16.gmra.mxu0 %v2753
    %v2792 = vpop.f32.mrf.mxu0
    %v2793 = vadd.f32 %v2737, %v2792
    %v2794 = vpop.f32.mrf.mxu0
    %v2795 = vpop.f32.mrf.mxu0
    %v2796 = vadd.f32 %v2740, %v2795
    %v2797 = vpop.f32.mrf.mxu0
    %2798 = vmatprep.mubr.bf16.mxu0 0
    %2799 = vmatmul.mubr.bf16.gmra.mxu0 %v2756
    %v2800 = vpop.f32.mrf.mxu0
    %v2801 = vadd.f32 %v2745, %v2800
    %v2802 = vpop.f32.mrf.mxu0
    %v2803 = vpop.f32.mrf.mxu0
    %v2804 = vpop.f32.mrf.mxu0
    %2805 = vdwg.mxu0
    %v2806 = vld [vmem:[#allocation11 + $0x19] sm:$0x1]
    %v2807 = vld [vmem:[#allocation11 + $0x1c] sm:$0x1]
    %v2808 = vlaneseq
    %v2809 = vshrl.u32 %v2808, 7
    %v2810 = vsub.s32 0, %v2809
    %v2811 = vrot.slane %v2806, %v2810
    %v2812 = vlaneseq
    %v2813 = vshrl.u32 %v2812, 7
    %v2814 = vsub.s32 0, %v2813
    %v2815 = vrot.slane %v2807, %v2814
    %v2816 = vsel %vm2393, %v2811, %v2815
    %v2817 = vsel %vm2394, %v2811, %v2815
    %v2818 = vsel %vm2395, %v2811, %v2815
    %2822 = vrot.lane.b32.xlu0 %v2793, 96
    %v2823 = vpop.permute.xlu0 %2822
    %2824 = vrot.lane.b32.xlu0 %v2796, 96
    %v2825 = vpop.permute.xlu0 %2824
    %2826 = vrot.lane.b32.xlu0 %v2801, 96
    %v2827 = vpop.permute.xlu0 %2826
    %v2831 = vsel %vm2393, %v2793, %v2823
    %v2832 = vsel %vm2394, %v2796, %v2825
    %v2833 = vsel %vm2395, %v2801, %v2827
    %v2834 = vadd.f32 %v2831, %v2816
    %v2835 = vadd.f32 %v2832, %v2817
    %v2836 = vadd.f32 %v2833, %v2818
    %v2837 = vmax.f32 %v2834, 0.0
    %v2838 = vmax.f32 %v2835, 0.0
    %v2839 = vmax.f32 %v2836, 0.0
    %v2840 = vld [vmem:[#allocation10 + $0x8] sm:$0xf]
    %v2841 = vld [vmem:[#allocation10 + $0x14] sm:$0xf]
    %v2842 = vld [vmem:[#allocation10 + $0x20] sm:$0xf]
    %v2843 = vld [vmem:[#allocation10 + $0x2c] sm:$0xf]
    %v2844 = vpack.c.bf16 %v2838, %v2837
    %v2845 = vpack.c.bf16 %v2839, %v2839
    %v2847 = vsel %vm2408, %v2845, 0
    %2849 = vmatprep.subr.bf16.mxu0 0
    %2850 = vmatpush1.bf16.msra.mxu0 0
    %2851 = vmatprep.subr.bf16.mxu0 0
    %2852 = vmatpush1.bf16.msra.mxu0 0
    %2853 = vmatprep.subr.bf16.mxu0 0
    %2854 = vmatpush1.bf16.msra.mxu0 0
    %2855 = vmatprep.subr.bf16.mxu0 0
    %2856 = vmatpush1.bf16.msra.mxu0 0
    %2857 = vmatprep.subr.bf16.mxu0 0
    %2858 = vmatpush1.bf16.msra.mxu0 0
    %2859 = vmatprep.subr.bf16.mxu0 0
    %2860 = vmatpush1.bf16.msra.mxu0 0
    %2861 = vmatprep.subr.bf16.mxu0 0
    %2862 = vmatpush1.bf16.msra.mxu0 %v2847
    %2863 = vmatprep.subr.bf16.mxu0 0
    %2864 = vmatpush1.bf16.msra.mxu0 %v2844
    %2865 = vmatprep.subr.bf16.mxu0 0
    %2866 = vmatpush2.bf16.msra.mxu0 0
    %2867 = vmatprep.subr.bf16.mxu0 0
    %2868 = vmatpush2.bf16.msra.mxu0 0
    %2869 = vmatprep.subr.bf16.mxu0 0
    %2870 = vmatpush2.bf16.msra.mxu0 0
    %2871 = vmatprep.subr.bf16.mxu0 0
    %2872 = vmatpush2.bf16.msra.mxu0 0
    %2873 = vmatprep.subr.bf16.mxu0 0
    %2874 = vmatpush2.bf16.msra.mxu0 0
    %2875 = vmatprep.subr.bf16.mxu0 0
    %2876 = vmatpush2.bf16.msra.mxu0 0
    %2877 = vmatprep.subr.bf16.mxu0 0
    %2878 = vmatpush2.bf16.msra.mxu0 0
    %2879 = vmatprep.subr.bf16.mxu0 0
    %2880 = vmatpush2.bf16.msra.mxu0 0
    %2881 = vmatprep.mubr.bf16.mxu0 0
    %2882 = vmatmul.mubr.bf16.gmra.mxu0 %v2403
    %v2883 = vpop.f32.mrf.mxu0
    %v2884 = vadd.f32 0.0, %v2883
    %v2885 = vpop.f32.mrf.mxu0
    %v2886 = vpop.f32.mrf.mxu0
    %v2887 = vadd.f32 0.0, %v2886
    %v2888 = vpop.f32.mrf.mxu0
    %2889 = vmatprep.mubr.bf16.mxu0 0
    %2890 = vmatmul.mubr.bf16.gmra.mxu0 %v2406
    %v2891 = vpop.f32.mrf.mxu0
    %v2892 = vadd.f32 0.0, %v2891
    %v2893 = vpop.f32.mrf.mxu0
    %v2894 = vpop.f32.mrf.mxu0
    %v2895 = vpop.f32.mrf.mxu0
    %2896 = vdwg.mxu0
    %v2897 = vpack.c.bf16 %v2887, %v2884
    %v2898 = vpack.c.bf16 %v2892, %v2892
    %v2903 = vunpack.c.l.b16 %v2840
    %v2904 = vunpack.c.l.b16 %v2841
    %v2905 = vunpack.c.l.b16 %v2842
    %v2906 = vunpack.c.l.b16 %v2843
    %v2907 = vpack.c.b16 %v2904, %v2903
    %v2908 = vpack.c.b16 %v2906, %v2905
    %2909 = vrot.lane.b32.xlu0 %v2907, 64
    %v2910 = vpop.permute.xlu0 %2909
    %2911 = vrot.lane.b32.xlu0 %v2908, 64
    %v2912 = vpop.permute.xlu0 %2911
    %v2916 = vsel %vm2478, %v2844, 0
    %v2918 = vsel %vm2478, %v2845, 0
    %2920 = vmatprep.subr.bf16.mxu0 0
    %2921 = vmatpush1.bf16.msra.mxu0 0
    %2922 = vmatprep.subr.bf16.mxu0 0
    %2923 = vmatpush1.bf16.msra.mxu0 0
    %2924 = vmatprep.subr.bf16.mxu0 0
    %2925 = vmatpush1.bf16.msra.mxu0 0
    %2926 = vmatprep.subr.bf16.mxu0 0
    %2927 = vmatpush1.bf16.msra.mxu0 0
    %2928 = vmatprep.subr.bf16.mxu0 0
    %2929 = vmatpush1.bf16.msra.mxu0 0
    %2930 = vmatprep.subr.bf16.mxu0 0
    %2931 = vmatpush1.bf16.msra.mxu0 0
    %2932 = vmatprep.subr.bf16.mxu0 0
    %2933 = vmatpush1.bf16.msra.mxu0 %v2912
    %2934 = vmatprep.subr.bf16.mxu0 0
    %2935 = vmatpush1.bf16.msra.mxu0 %v2910
    %2936 = vmatprep.subr.bf16.mxu0 0
    %2937 = vmatpush2.bf16.msra.mxu0 0
    %2938 = vmatprep.subr.bf16.mxu0 0
    %2939 = vmatpush2.bf16.msra.mxu0 0
    %2940 = vmatprep.subr.bf16.mxu0 0
    %2941 = vmatpush2.bf16.msra.mxu0 0
    %2942 = vmatprep.subr.bf16.mxu0 0
    %2943 = vmatpush2.bf16.msra.mxu0 0
    %2944 = vmatprep.subr.bf16.mxu0 0
    %2945 = vmatpush2.bf16.msra.mxu0 0
    %2946 = vmatprep.subr.bf16.mxu0 0
    %2947 = vmatpush2.bf16.msra.mxu0 0
    %2948 = vmatprep.subr.bf16.mxu0 0
    %2949 = vmatpush2.bf16.msra.mxu0 0
    %2950 = vmatprep.subr.bf16.mxu0 0
    %2951 = vmatpush2.bf16.msra.mxu0 0
    %2952 = vmatprep.mubr.bf16.mxu0 0
    %2953 = vmatmul.mubr.bf16.gmra.mxu0 %v2916
    %v2954 = vpop.f32.mrf.mxu0
    %v2955 = vadd.f32 0.0, %v2954
    %v2956 = vpop.f32.mrf.mxu0
    %v2957 = vpop.f32.mrf.mxu0
    %v2958 = vadd.f32 0.0, %v2957
    %v2959 = vpop.f32.mrf.mxu0
    %2960 = vmatprep.mubr.bf16.mxu0 0
    %2961 = vmatmul.mubr.bf16.gmra.mxu0 %v2918
    %v2962 = vpop.f32.mrf.mxu0
    %v2963 = vadd.f32 0.0, %v2962
    %v2964 = vpop.f32.mrf.mxu0
    %v2965 = vpop.f32.mrf.mxu0
    %v2966 = vpop.f32.mrf.mxu0
    %2967 = vdwg.mxu0
    %v2971 = vsel %vm2478, %v2897, 0
    %v2974 = vsel %vm2478, %v2898, 0
    %2976 = vmatprep.subr.bf16.mxu0 0
    %2977 = vmatpush1.bf16.msra.mxu0 0
    %2978 = vmatprep.subr.bf16.mxu0 0
    %2979 = vmatpush1.bf16.msra.mxu0 0
    %2980 = vmatprep.subr.bf16.mxu0 0
    %2981 = vmatpush1.bf16.msra.mxu0 0
    %2982 = vmatprep.subr.bf16.mxu0 0
    %2983 = vmatpush1.bf16.msra.mxu0 0
    %2984 = vmatprep.subr.bf16.mxu0 0
    %2985 = vmatpush1.bf16.msra.mxu0 0
    %2986 = vmatprep.subr.bf16.mxu0 0
    %2987 = vmatpush1.bf16.msra.mxu0 0
    %2988 = vmatprep.subr.bf16.mxu0 0
    %2989 = vmatpush1.bf16.msra.mxu0 %v2908
    %2990 = vmatprep.subr.bf16.mxu0 0
    %2991 = vmatpush1.bf16.msra.mxu0 %v2907
    %2992 = vmatprep.subr.bf16.mxu0 0
    %2993 = vmatpush2.bf16.msra.mxu0 0
    %2994 = vmatprep.subr.bf16.mxu0 0
    %2995 = vmatpush2.bf16.msra.mxu0 0
    %2996 = vmatprep.subr.bf16.mxu0 0
    %2997 = vmatpush2.bf16.msra.mxu0 0
    %2998 = vmatprep.subr.bf16.mxu0 0
    %2999 = vmatpush2.bf16.msra.mxu0 0
    %3000 = vmatprep.subr.bf16.mxu0 0
    %3001 = vmatpush2.bf16.msra.mxu0 0
    %3002 = vmatprep.subr.bf16.mxu0 0
    %3003 = vmatpush2.bf16.msra.mxu0 0
    %3004 = vmatprep.subr.bf16.mxu0 0
    %3005 = vmatpush2.bf16.msra.mxu0 0
    %3006 = vmatprep.subr.bf16.mxu0 0
    %3007 = vmatpush2.bf16.msra.mxu0 0
    %3008 = vmatprep.mubr.bf16.mxu0 0
    %3009 = vmatmul.mubr.bf16.gmra.mxu0 %v2971
    %v3010 = vpop.f32.mrf.mxu0
    %v3011 = vadd.f32 %v2955, %v3010
    %v3012 = vpop.f32.mrf.mxu0
    %v3013 = vpop.f32.mrf.mxu0
    %v3014 = vadd.f32 %v2958, %v3013
    %v3015 = vpop.f32.mrf.mxu0
    %3016 = vmatprep.mubr.bf16.mxu0 0
    %3017 = vmatmul.mubr.bf16.gmra.mxu0 %v2974
    %v3018 = vpop.f32.mrf.mxu0
    %v3019 = vadd.f32 %v2963, %v3018
    %v3020 = vpop.f32.mrf.mxu0
    %v3021 = vpop.f32.mrf.mxu0
    %v3022 = vpop.f32.mrf.mxu0
    %3023 = vdwg.mxu0
    %v3024 = vld [vmem:[#allocation11 + $0x1a] sm:$0x1]
    %v3025 = vld [vmem:[#allocation11 + $0x1d] sm:$0x1]
    %v3026 = vlaneseq
    %v3027 = vshrl.u32 %v3026, 7
    %v3028 = vsub.s32 0, %v3027
    %v3029 = vrot.slane %v3024, %v3028
    %v3030 = vlaneseq
    %v3031 = vshrl.u32 %v3030, 7
    %v3032 = vsub.s32 0, %v3031
    %v3033 = vrot.slane %v3025, %v3032
    %v3034 = vsel %vm2393, %v3029, %v3033
    %v3035 = vsel %vm2394, %v3029, %v3033
    %v3036 = vsel %vm2395, %v3029, %v3033
    %3040 = vrot.lane.b32.xlu0 %v3011, 96
    %v3041 = vpop.permute.xlu0 %3040
    %3042 = vrot.lane.b32.xlu0 %v3014, 96
    %v3043 = vpop.permute.xlu0 %3042
    %3044 = vrot.lane.b32.xlu0 %v3019, 96
    %v3045 = vpop.permute.xlu0 %3044
    %v3049 = vsel %vm2393, %v3011, %v3041
    %v3050 = vsel %vm2394, %v3014, %v3043
    %v3051 = vsel %vm2395, %v3019, %v3045
    %v3052 = vadd.f32 %v3049, %v3034
    %v3053 = vadd.f32 %v3050, %v3035
    %v3054 = vadd.f32 %v3051, %v3036
    %3055 = vset.pattern.permute.xlu0 25
    %3056 = vperm.xlu0 %3055, %v127
    %v3057 = vpop.permute.xlu0 %3056
    %vm3058 = vcmp.eq.s32.totalorder %v2128, %v3057
    %v3059 = vsel %vm3058, 1.0, 0.0
    %v3061 = vsel %vm2144, %v3059, 0
    %3063 = vmatprep.subr.mxu0 0.0
    %3064 = vmatpush1.msra.mxu0 0.0
    %3065 = vmatprep.subr.mxu0 0.0
    %3066 = vmatpush1.msra.mxu0 0.0
    %3067 = vmatprep.subr.mxu0 0.0
    %3068 = vmatpush1.msra.mxu0 0.0
    %3069 = vmatprep.subr.mxu0 0.0
    %3070 = vmatpush1.msra.mxu0 0.0
    %3071 = vmatprep.subr.mxu0 0.0
    %3072 = vmatpush1.msra.mxu0 0.0
    %3073 = vmatprep.subr.mxu0 0.0
    %3074 = vmatpush1.msra.mxu0 0.0
    %3075 = vmatprep.subr.mxu0 0.0
    %3076 = vmatpush1.msra.mxu0 0.0
    %3077 = vmatprep.subr.mxu0 0.0
    %3078 = vmatpush1.msra.mxu0 0.0
    %3079 = vmatprep.subr.mxu0 0.0
    %3080 = vmatpush1.msra.mxu0 0.0
    %3081 = vmatprep.subr.mxu0 0.0
    %3082 = vmatpush1.msra.mxu0 0.0
    %3083 = vmatprep.subr.mxu0 0.0
    %3084 = vmatpush1.msra.mxu0 0.0
    %3085 = vmatprep.subr.mxu0 0.0
    %3086 = vmatpush1.msra.mxu0 0.0
    %3087 = vmatprep.subr.mxu0 0.0
    %3088 = vmatpush1.msra.mxu0 0.0
    %3089 = vmatprep.subr.mxu0 0.0
    %3090 = vmatpush1.msra.mxu0 %v3054
    %3091 = vmatprep.subr.mxu0 0.0
    %3092 = vmatpush1.msra.mxu0 %v3053
    %3093 = vmatprep.subr.mxu0 0.0
    %3094 = vmatpush1.msra.mxu0 %v3052
    %3095 = vmatprep.subr.mxu0 0.0
    %3096 = vmatpush2.msra.mxu0 0.0
    %3097 = vmatprep.subr.mxu0 0.0
    %3098 = vmatpush2.msra.mxu0 0.0
    %3099 = vmatprep.subr.mxu0 0.0
    %3100 = vmatpush2.msra.mxu0 0.0
    %3101 = vmatprep.subr.mxu0 0.0
    %3102 = vmatpush2.msra.mxu0 0.0
    %3103 = vmatprep.subr.mxu0 0.0
    %3104 = vmatpush2.msra.mxu0 0.0
    %3105 = vmatprep.subr.mxu0 0.0
    %3106 = vmatpush2.msra.mxu0 0.0
    %3107 = vmatprep.subr.mxu0 0.0
    %3108 = vmatpush2.msra.mxu0 0.0
    %3109 = vmatprep.subr.mxu0 0.0
    %3110 = vmatpush2.msra.mxu0 0.0
    %3111 = vmatprep.subr.mxu0 0.0
    %3112 = vmatpush2.msra.mxu0 0.0
    %3113 = vmatprep.subr.mxu0 0.0
    %3114 = vmatpush2.msra.mxu0 0.0
    %3115 = vmatprep.subr.mxu0 0.0
    %3116 = vmatpush2.msra.mxu0 0.0
    %3117 = vmatprep.subr.mxu0 0.0
    %3118 = vmatpush2.msra.mxu0 0.0
    %3119 = vmatprep.subr.mxu0 0.0
    %3120 = vmatpush2.msra.mxu0 0.0
    %3121 = vmatprep.subr.mxu0 0.0
    %3122 = vmatpush2.msra.mxu0 0.0
    %3123 = vmatprep.subr.mxu0 0.0
    %3124 = vmatpush2.msra.mxu0 0.0
    %3125 = vmatprep.subr.mxu0 0.0
    %3126 = vmatpush2.msra.mxu0 0.0
    %3127 = vmatprep.mubr.f32.mxu0 0.0
    %3128 = vmatmul.mubr.f32.gmra.mxu0 %v3061
    %v3129 = vpop.f32.mrf.mxu0
    %v3130 = vadd.f32 0.0, %v3129
    %v3131 = vpop.f32.mrf.mxu0
    %3132 = vdwg.mxu0
    %3133 = vset.pattern.permute.xlu0 26
    %3134 = vperm.xlu0 %3133, %v127
    %v3135 = vpop.permute.xlu0 %3134
    %vm3136 = vcmp.eq.s32.totalorder %v2128, %v3135
    %v3137 = vsel %vm3136, 1.0, 0.0
    %v3139 = vsel %vm2144, %v3137, 0
    %3141 = vmatprep.subr.mxu0 0.0
    %3142 = vmatpush1.msra.mxu0 0.0
    %3143 = vmatprep.subr.mxu0 0.0
    %3144 = vmatpush1.msra.mxu0 0.0
    %3145 = vmatprep.subr.mxu0 0.0
    %3146 = vmatpush1.msra.mxu0 0.0
    %3147 = vmatprep.subr.mxu0 0.0
    %3148 = vmatpush1.msra.mxu0 0.0
    %3149 = vmatprep.subr.mxu0 0.0
    %3150 = vmatpush1.msra.mxu0 0.0
    %3151 = vmatprep.subr.mxu0 0.0
    %3152 = vmatpush1.msra.mxu0 0.0
    %3153 = vmatprep.subr.mxu0 0.0
    %3154 = vmatpush1.msra.mxu0 0.0
    %3155 = vmatprep.subr.mxu0 0.0
    %3156 = vmatpush1.msra.mxu0 0.0
    %3157 = vmatprep.subr.mxu0 0.0
    %3158 = vmatpush1.msra.mxu0 0.0
    %3159 = vmatprep.subr.mxu0 0.0
    %3160 = vmatpush1.msra.mxu0 0.0
    %3161 = vmatprep.subr.mxu0 0.0
    %3162 = vmatpush1.msra.mxu0 0.0
    %3163 = vmatprep.subr.mxu0 0.0
    %3164 = vmatpush1.msra.mxu0 0.0
    %3165 = vmatprep.subr.mxu0 0.0
    %3166 = vmatpush1.msra.mxu0 0.0
    %3167 = vmatprep.subr.mxu0 0.0
    %3168 = vmatpush1.msra.mxu0 %v3054
    %3169 = vmatprep.subr.mxu0 0.0
    %3170 = vmatpush1.msra.mxu0 %v3053
    %3171 = vmatprep.subr.mxu0 0.0
    %3172 = vmatpush1.msra.mxu0 %v3052
    %3173 = vmatprep.subr.mxu0 0.0
    %3174 = vmatpush2.msra.mxu0 0.0
    %3175 = vmatprep.subr.mxu0 0.0
    %3176 = vmatpush2.msra.mxu0 0.0
    %3177 = vmatprep.subr.mxu0 0.0
    %3178 = vmatpush2.msra.mxu0 0.0
    %3179 = vmatprep.subr.mxu0 0.0
    %3180 = vmatpush2.msra.mxu0 0.0
    %3181 = vmatprep.subr.mxu0 0.0
    %3182 = vmatpush2.msra.mxu0 0.0
    %3183 = vmatprep.subr.mxu0 0.0
    %3184 = vmatpush2.msra.mxu0 0.0
    %3185 = vmatprep.subr.mxu0 0.0
    %3186 = vmatpush2.msra.mxu0 0.0
    %3187 = vmatprep.subr.mxu0 0.0
    %3188 = vmatpush2.msra.mxu0 0.0
    %3189 = vmatprep.subr.mxu0 0.0
    %3190 = vmatpush2.msra.mxu0 0.0
    %3191 = vmatprep.subr.mxu0 0.0
    %3192 = vmatpush2.msra.mxu0 0.0
    %3193 = vmatprep.subr.mxu0 0.0
    %3194 = vmatpush2.msra.mxu0 0.0
    %3195 = vmatprep.subr.mxu0 0.0
    %3196 = vmatpush2.msra.mxu0 0.0
    %3197 = vmatprep.subr.mxu0 0.0
    %3198 = vmatpush2.msra.mxu0 0.0
    %3199 = vmatprep.subr.mxu0 0.0
    %3200 = vmatpush2.msra.mxu0 0.0
    %3201 = vmatprep.subr.mxu0 0.0
    %3202 = vmatpush2.msra.mxu0 0.0
    %3203 = vmatprep.subr.mxu0 0.0
    %3204 = vmatpush2.msra.mxu0 0.0
    %3205 = vmatprep.mubr.f32.mxu0 0.0
    %3206 = vmatmul.mubr.f32.gmra.mxu0 %v3139
    %v3207 = vpop.f32.mrf.mxu0
    %v3208 = vadd.f32 0.0, %v3207
    %v3209 = vpop.f32.mrf.mxu0
    %3210 = vdwg.mxu0
    %v3211 = vmul.f32 %v3130, %v3208
    %v3212 = vsel %vm2478, %v3211, 0.0
    %3213 = vadd.xlane.f32.xlu0 %v3212
    %v3214 = vpop.xlane.xlu0 %3213
    %vm3215 = vcmask 7168
    %3216 = vst.msk [vmem:[%s9] sm:$0xff] %vm3215, %v3214
    %3217 = vst.msk [vmem:[#allocation14] sm:$0xff] %vm2478, %v3052
    %3218 = vst.msk [vmem:[#allocation14 + $0x8] sm:$0xff] %vm2478, %v3053
    %3219 = vst.msk [vmem:[#allocation15] sm:$0xff] %vm2478, %v3054
    // Predicated region
    $region58: #{model_forward.1} parent=1 // pred_check
      _
    $region59: #{model_forward.1} parent=1 // pred_check_branch
      %3221 = sbr.rel (0) target = $region61
    $region60: #{model_forward.1} parent=1 // pred_region
      %s3223 = ssub.s32 256, 256
      %3224 = vsyncadd [#allocation4], %s3223
      %s3225 = sshll.u32 [#allocation14], 4
      %s3226 = int_to_ptr.vmem [resolvable:$true] %s3225
      %3231 = dma.vmem_to_hbm [thread:$0]  %s3226, 256, %s7, [#allocation4], 128, 128, 8
    $region61: #{model_forward.1} parent=1 // pred_fallthru
      _
    // Predicated region
    $region62: #{model_forward.1} parent=1 // pred_check
      _
    $region63: #{model_forward.1} parent=1 // pred_check_branch
      %3233 = sbr.rel (0) target = $region65
    $region64: #{model_forward.1} parent=1 // pred_region
      %s3235 = ssub.s32 128, 128
      %3236 = vsyncadd [#allocation16], %s3235
      %s3238 = sshll.u32 [#allocation15], 4
      %s3239 = int_to_ptr.vmem [resolvable:$true] %s3238
      %3241 = dma.vmem_to_hbm [thread:$0]  %s3239, 128, %s8, [#allocation16]
    $region65: #{model_forward.1} parent=1 // pred_fallthru
      _
    // Predicated region
    $region66: #{model_forward.1} parent=1 // pred_check
      _
    $region67: #{model_forward.1} parent=1 // pred_check_branch
      %3243 = sbr.rel (0) target = $region69
    $region68: #{model_forward.1} parent=1 // pred_region
      _
    $region69: #{model_forward.1} parent=1 // pred_fallthru
      _
    // Predicated region
    $region70: #{model_forward.1} parent=1 // pred_check
      _
    $region71: #{model_forward.1} parent=1 // pred_check_branch
      %3245 = sbr.rel (0) target = $region73
    $region72: #{model_forward.1} parent=1 // pred_region
      %3246 = dma.done [#allocation4], 256
    $region73: #{model_forward.1} parent=1 // pred_fallthru
      _
    // Predicated region
    $region74: #{model_forward.1} parent=1 // pred_check
      _
    $region75: #{model_forward.1} parent=1 // pred_check_branch
      %3248 = sbr.rel (0) target = $region77
    $region76: #{model_forward.1} parent=1 // pred_region
      %3249 = dma.done [#allocation16], 128
    $region77: #{model_forward.1} parent=1 // pred_fallthru
      _
    // Predicated region
    $region78: #{model_forward.1} parent=1 // pred_check
      _
    $region79: #{model_forward.1} parent=1 // pred_check_branch
      %3251 = sbr.rel (0) target = $region81
    $region80: #{model_forward.1} parent=1 // pred_region
      _
    $region81: #{model_forward.1} parent=1 // pred_fallthru
      _
    %3252 = vsyncpa [#allocation3], 1
    %3253 = vsyncpa [#allocation6], 1
    %3254 = vsyncpa [#allocation9], 1
    %3255 = vsyncpa [#allocation12], 1
    %3256 = vsyncpa [#allocation4], 1
    %3257 = vsyncpa [#allocation16], 1

</llo_original>
